<compile_context>
chip_gen: v6e
topology: v6e:2x2x1
jax: 0.10.0
libtpu: 0.0.40
codegen_flags: <defaults>
</compile_context>

<pallas_src>
import math
from functools import partial

import jax
import jax.numpy as jnp
from jax import lax
from jax.experimental import pallas as pl
from jax.experimental.pallas import tpu as pltpu


# ----------------------------------------------------------------------------
# Tiling helper
# ----------------------------------------------------------------------------
def _choose_tile(dim, target, aligns=(256, 128)):
    """Largest tile <= target that divides dim, preferring given alignments.
    Returns the full dim (untiled) if it already fits or nothing divides."""
    if dim <= target:
        return dim
    for align in aligns:
        t = (target // align) * align
        while t >= align:
            if dim % t == 0:
                return t
            t -= align
    return dim


# ----------------------------------------------------------------------------
# Kernel: LayerNorm (prologue) + LoRA linear        y = LN(x) @ W + (LN(x)@A)@B
# ----------------------------------------------------------------------------
def _ln_lora_linear_kernel(x_ref, g_ref, b_ref, w_ref, a_ref, bl_ref, o_ref,
                           xn_ref, xa_ref, *, eps):
    @pl.when(pl.program_id(1) == 0)
    def _():
        x = x_ref[...].astype(jnp.float32)
        mu = jnp.mean(x, axis=-1, keepdims=True)
        var = jnp.mean(x * x, axis=-1, keepdims=True) - mu * mu   # one-pass var
        xn = (x - mu) * lax.rsqrt(var + eps) * g_ref[...] + b_ref[...]
        xn_ref[...] = xn.astype(xn_ref.dtype)
        xa_ref[...] = jnp.dot(xn_ref[...], a_ref[...],
                              preferred_element_type=jnp.float32
                              ).astype(xa_ref.dtype)

    acc = jnp.dot(xn_ref[...], w_ref[...], preferred_element_type=jnp.float32)
    acc += jnp.dot(xa_ref[...], bl_ref[...], preferred_element_type=jnp.float32)
    o_ref[...] = acc.astype(o_ref.dtype)


def ln_lora_linear(x, g, b, w, a, bl, eps=1e-5):
    M, K = x.shape
    N = w.shape[1]
    r = a.shape[1]
    tm = _choose_tile(M, 256, aligns=(8,))
    tn = _choose_tile(N, 512, aligns=(256, 128))
    cost = pl.CostEstimate(
        flops=int(2 * M * K * N + 2 * M * K * r + 2 * M * r * N),
        transcendentals=int(M),
        bytes_accessed=int(2 * (M * K + K * N + K * r + r * N + M * N)))
    return pl.pallas_call(
        partial(_ln_lora_linear_kernel, eps=eps),
        out_shape=jax.ShapeDtypeStruct((M, N), x.dtype),
        grid_spec=pltpu.PrefetchScalarGridSpec(
            num_scalar_prefetch=0,
            grid=(M // tm, N // tn),
            in_specs=[
                pl.BlockSpec((tm, K), lambda mi, ni: (mi, 0)),
                pl.BlockSpec((1, K), lambda mi, ni: (0, 0)),
                pl.BlockSpec((1, K), lambda mi, ni: (0, 0)),
                pl.BlockSpec((K, tn), lambda mi, ni: (0, ni)),
                pl.BlockSpec((K, r), lambda mi, ni: (0, 0)),
                pl.BlockSpec((r, tn), lambda mi, ni: (0, ni)),
            ],
            out_specs=pl.BlockSpec((tm, tn), lambda mi, ni: (mi, ni)),
            scratch_shapes=[pltpu.VMEM((tm, K), jnp.bfloat16),
                            pltpu.VMEM((tm, r), jnp.bfloat16)],
        ),
        compiler_params=pltpu.CompilerParams(
            dimension_semantics=("parallel", "arbitrary")),
        cost_estimate=cost,
    )(x, g, b, w, a, bl)


# ----------------------------------------------------------------------------
# Kernel: LayerNorm + LoRA fc1 + SwiGLU epilogue
# ----------------------------------------------------------------------------
def _ln_lora_swiglu_kernel(x_ref, g_ref, b_ref, wg_ref, wu_ref, a_ref,
                           bg_ref, bu_ref, o_ref, xn_ref, xa_ref, *, eps):
    @pl.when(pl.program_id(1) == 0)
    def _():
        x = x_ref[...].astype(jnp.float32)
        mu = jnp.mean(x, axis=-1, keepdims=True)
        var = jnp.mean(x * x, axis=-1, keepdims=True) - mu * mu
        xn = (x - mu) * lax.rsqrt(var + eps) * g_ref[...] + b_ref[...]
        xn_ref[...] = xn.astype(xn_ref.dtype)
        xa_ref[...] = jnp.dot(xn_ref[...], a_ref[...],
                              preferred_element_type=jnp.float32
                              ).astype(xa_ref.dtype)

    xn = xn_ref[...]
    xa = xa_ref[...]
    gate = jnp.dot(xn, wg_ref[...], preferred_element_type=jnp.float32)
    gate += jnp.dot(xa, bg_ref[...], preferred_element_type=jnp.float32)
    up = jnp.dot(xn, wu_ref[...], preferred_element_type=jnp.float32)
    up += jnp.dot(xa, bu_ref[...], preferred_element_type=jnp.float32)
    o_ref[...] = (jax.nn.silu(gate) * up).astype(o_ref.dtype)   # f32 elementwise


def ln_lora_swiglu(x, g, b, wg, wu, a, bg, bu, eps=1e-5):
    M, K = x.shape
    N = wg.shape[1]
    r = a.shape[1]
    tm = _choose_tile(M, 256, aligns=(8,))
    tn = _choose_tile(N, 512, aligns=(256, 128))
    cost = pl.CostEstimate(
        flops=int(4 * M * K * N + 2 * M * K * r + 4 * M * r * N + 3 * M * N),
        transcendentals=int(M * N + M),
        bytes_accessed=int(2 * (M * K + 2 * K * N + K * r + 2 * r * N + M * N)))
    return pl.pallas_call(
        partial(_ln_lora_swiglu_kernel, eps=eps),
        out_shape=jax.ShapeDtypeStruct((M, N), x.dtype),
        grid_spec=pltpu.PrefetchScalarGridSpec(
            num_scalar_prefetch=0,
            grid=(M // tm, N // tn),
            in_specs=[
                pl.BlockSpec((tm, K), lambda mi, ni: (mi, 0)),
                pl.BlockSpec((1, K), lambda mi, ni: (0, 0)),
                pl.BlockSpec((1, K), lambda mi, ni: (0, 0)),
                pl.BlockSpec((K, tn), lambda mi, ni: (0, ni)),
                pl.BlockSpec((K, tn), lambda mi, ni: (0, ni)),
                pl.BlockSpec((K, r), lambda mi, ni: (0, 0)),
                pl.BlockSpec((r, tn), lambda mi, ni: (0, ni)),
                pl.BlockSpec((r, tn), lambda mi, ni: (0, ni)),
            ],
            out_specs=pl.BlockSpec((tm, tn), lambda mi, ni: (mi, ni)),
            scratch_shapes=[pltpu.VMEM((tm, K), jnp.bfloat16),
                            pltpu.VMEM((tm, r), jnp.bfloat16)],
        ),
        compiler_params=pltpu.CompilerParams(
            dimension_semantics=("parallel", "arbitrary")),
        cost_estimate=cost,
    )(x, g, b, wg, wu, a, bg, bu)


# ----------------------------------------------------------------------------
# Kernel: LoRA linear + layer-scale residual epilogue
#         y = residual + ls * (h @ W + (h@A) @ B)
# ----------------------------------------------------------------------------
def _lora_residual_kernel(h_ref, res_ref, ls_ref, w_ref, a_ref, bl_ref, o_ref,
                          ha_ref):
    @pl.when(pl.program_id(1) == 0)
    def _():
        ha_ref[...] = jnp.dot(h_ref[...], a_ref[...],
                              preferred_element_type=jnp.float32
                              ).astype(ha_ref.dtype)

    proj = jnp.dot(h_ref[...], w_ref[...], preferred_element_type=jnp.float32)
    proj += jnp.dot(ha_ref[...], bl_ref[...], preferred_element_type=jnp.float32)
    out = res_ref[...].astype(jnp.float32) + ls_ref[...] * proj
    o_ref[...] = out.astype(o_ref.dtype)


def lora_linear_residual(h, residual, ls, w, a, bl):
    M, K = h.shape
    N = w.shape[1]
    r = a.shape[1]
    tm = _choose_tile(M, 256, aligns=(8,))
    tn = _choose_tile(N, 512, aligns=(256, 128))
    cost = pl.CostEstimate(
        flops=int(2 * M * K * N + 2 * M * K * r + 2 * M * r * N + 2 * M * N),
        transcendentals=0,
        bytes_accessed=int(2 * (M * K + K * N + K * r + r * N + 2 * M * N)))
    return pl.pallas_call(
        _lora_residual_kernel,
        out_shape=jax.ShapeDtypeStruct((M, N), h.dtype),
        grid_spec=pltpu.PrefetchScalarGridSpec(
            num_scalar_prefetch=0,
            grid=(M // tm, N // tn),
            in_specs=[
                pl.BlockSpec((tm, K), lambda mi, ni: (mi, 0)),
                pl.BlockSpec((tm, tn), lambda mi, ni: (mi, ni)),
                pl.BlockSpec((1, tn), lambda mi, ni: (0, ni)),
                pl.BlockSpec((K, tn), lambda mi, ni: (0, ni)),
                pl.BlockSpec((K, r), lambda mi, ni: (0, 0)),
                pl.BlockSpec((r, tn), lambda mi, ni: (0, ni)),
            ],
            out_specs=pl.BlockSpec((tm, tn), lambda mi, ni: (mi, ni)),
            scratch_shapes=[pltpu.VMEM((tm, r), jnp.bfloat16)],
        ),
        compiler_params=pltpu.CompilerParams(
            dimension_semantics=("parallel", "arbitrary")),
        cost_estimate=cost,
    )(h, residual, ls, w, a, bl)


# ----------------------------------------------------------------------------
# Kernel: flash-style causal attention reading q/k/v from the (B*S, 3D) slab
# ----------------------------------------------------------------------------
def _flash_attn_kernel(qkvq_ref, qkvkv_ref, o_ref, m_ref, l_ref, acc_ref,
                       *, H, hd, D, tq, tkv, scale):
    qi = pl.program_id(1)
    ki = pl.program_id(2)
    n_kv = pl.num_programs(2)

    @pl.when(ki == 0)
    def _():
        m_ref[...] = jnp.full_like(m_ref, -1e30)
        l_ref[...] = jnp.zeros_like(l_ref)
        acc_ref[...] = jnp.zeros_like(acc_ref)

    q_start = qi * tq
    k_start = ki * tkv

    # Skip kv tiles that are entirely in the (masked) future.
    @pl.when(k_start <= q_start + tq - 1)
    def _():
        row = q_start + lax.broadcasted_iota(jnp.int32, (tq, tkv), 0)
        col = k_start + lax.broadcasted_iota(jnp.int32, (tq, tkv), 1)
        mask = col <= row
        for h in range(H):                       # static unroll over heads
            qh = qkvq_ref[:, h * hd:(h + 1) * hd]                 # bf16 (tq, hd)
            kh = qkvkv_ref[:, D + h * hd:D + (h + 1) * hd]        # bf16 (tkv, hd)
            vh = qkvkv_ref[:, 2 * D + h * hd:2 * D + (h + 1) * hd]
            s = lax.dot_general(qh, kh, (((1,), (1,)), ((), ())),
                                preferred_element_type=jnp.float32) * scale
            s = jnp.where(mask, s, -1e30)
            m_prev = m_ref[:, h:h + 1]
            m_new = jnp.maximum(m_prev, jnp.max(s, axis=-1, keepdims=True))
            p = jnp.exp(s - m_new)
            corr = jnp.exp(m_prev - m_new)
            l_ref[:, h:h + 1] = corr * l_ref[:, h:h + 1] + \
                jnp.sum(p, axis=-1, keepdims=True)
            pv = jnp.dot(p.astype(jnp.bfloat16), vh,
                         preferred_element_type=jnp.float32)
            acc_ref[:, h * hd:(h + 1) * hd] = \
                corr * acc_ref[:, h * hd:(h + 1) * hd] + pv
            m_ref[:, h:h + 1] = m_new

    @pl.when(ki == n_kv - 1)
    def _():
        for h in range(H):
            inv_l = pl.reciprocal(l_ref[:, h:h + 1], approx=True)
            o_ref[:, h * hd:(h + 1) * hd] = \
                (acc_ref[:, h * hd:(h + 1) * hd] * inv_l).astype(o_ref.dtype)


def flash_causal_attention(qkv, B, S, D, H, scale):
    hd = D // H
    M = B * S
    C = qkv.shape[1]                       # 3*D
    tq = _choose_tile(S, 256, aligns=(8,))
    tkv = _choose_tile(S, 512, aligns=(128, 8))
    nq = S // tq
    nkv = S // tkv
    cost = pl.CostEstimate(
        flops=int(4 * B * H * S * S * hd),
        transcendentals=int(B * H * S * S),
        bytes_accessed=int(2 * (2 * M * C + M * D)))
    return pl.pallas_call(
        partial(_flash_attn_kernel, H=H, hd=hd, D=D, tq=tq, tkv=tkv,
                scale=scale),
        out_shape=jax.ShapeDtypeStruct((M, D), qkv.dtype),
        grid_spec=pltpu.PrefetchScalarGridSpec(
            num_scalar_prefetch=0,
            grid=(B, nq, nkv),
            in_specs=[
                pl.BlockSpec((tq, C), lambda b, qi, ki: (b * nq + qi, 0)),
                pl.BlockSpec((tkv, C), lambda b, qi, ki: (b * nkv + ki, 0)),
            ],
            out_specs=pl.BlockSpec((tq, D), lambda b, qi, ki: (b * nq + qi, 0)),
            scratch_shapes=[pltpu.VMEM((tq, H), jnp.float32),
                            pltpu.VMEM((tq, H), jnp.float32),
                            pltpu.VMEM((tq, D), jnp.float32)],
        ),
        compiler_params=pltpu.CompilerParams(
            dimension_semantics=("parallel", "parallel", "arbitrary")),
        cost_estimate=cost,
    )(qkv, qkv)


# ----------------------------------------------------------------------------
# Kernel: final LayerNorm (prologue) + tied lm_head (contract over D, no emb.T)
# ----------------------------------------------------------------------------
def _ln_head_kernel(x_ref, g_ref, b_ref, e_ref, o_ref, xn_ref, *, eps):
    @pl.when(pl.program_id(1) == 0)
    def _():
        x = x_ref[...].astype(jnp.float32)
        mu = jnp.mean(x, axis=-1, keepdims=True)
        var = jnp.mean(x * x, axis=-1, keepdims=True) - mu * mu
        xn = (x - mu) * lax.rsqrt(var + eps) * g_ref[...] + b_ref[...]
        xn_ref[...] = xn.astype(xn_ref.dtype)

    logits = lax.dot_general(xn_ref[...], e_ref[...],
                             (((1,), (1,)), ((), ())),
                             preferred_element_type=jnp.float32)
    o_ref[...] = logits.astype(o_ref.dtype)


def final_ln_lm_head(x, g, b, emb, eps=1e-5):
    M, D = x.shape
    V = emb.shape[0]
    tm = _choose_tile(M, 256, aligns=(8,))
    tv = _choose_tile(V, 512, aligns=(256, 128))
    cost = pl.CostEstimate(
        flops=int(2 * M * D * V),
        transcendentals=int(M),
        bytes_accessed=int(2 * (M * D + V * D) + 4 * M * V))
    return pl.pallas_call(
        partial(_ln_head_kernel, eps=eps),
        out_shape=jax.ShapeDtypeStruct((M, V), jnp.float32),
        grid_spec=pltpu.PrefetchScalarGridSpec(
            num_scalar_prefetch=0,
            grid=(M // tm, V // tv),
            in_specs=[
                pl.BlockSpec((tm, D), lambda mi, vi: (mi, 0)),
                pl.BlockSpec((1, D), lambda mi, vi: (0, 0)),
                pl.BlockSpec((1, D), lambda mi, vi: (0, 0)),
                pl.BlockSpec((tv, D), lambda mi, vi: (vi, 0)),
            ],
            out_specs=pl.BlockSpec((tm, tv), lambda mi, vi: (mi, vi)),
            scratch_shapes=[pltpu.VMEM((tm, D), jnp.bfloat16)],
        ),
        compiler_params=pltpu.CompilerParams(
            dimension_semantics=("parallel", "arbitrary")),
        cost_estimate=cost,
    )(x, g, b, emb)


# ----------------------------------------------------------------------------
# Parameters (deterministic; mirrors _init_weights_properly / module __init__)
# ----------------------------------------------------------------------------
def init_params(key, cfg):
    D, V, r, L = cfg.d_model, cfg.vocab_size, cfg.lora_rank, cfg.n_layers
    I = 3 * D                    # swiglu intermediate (ff_mult=3)
    alpha = 1.0                  # LoRA alpha, folded into the B factor
    wdt = jnp.bfloat16
    ks = jax.random.split(key, 1 + L)
    params = {
        "token_embedding": (0.02 * jax.random.normal(ks[0], (V, D))).astype(wdt),
        "final_ln_g": jnp.ones((1, D), jnp.float32),
        "final_ln_b": jnp.zeros((1, D), jnp.float32),
        "layers": [],
    }
    out_scale = 1.0 / math.sqrt(2.0 * L)
    for l in range(L):
        lk = jax.random.split(ks[1 + l], 9)
        params["layers"].append({
            "ln1_g": jnp.ones((1, D), jnp.float32),
            "ln1_b": jnp.zeros((1, D), jnp.float32),
            "ln2_g": jnp.ones((1, D), jnp.float32),
            "ln2_b": jnp.zeros((1, D), jnp.float32),
            # Weights stored pre-transposed (in, out), bf16.  fc1 is stored as
            # split gate/up halves (same math as chunk(2, -1) on the output).
            "qkv_w": (0.02 * jax.random.normal(lk[0], (D, 3 * D))).astype(wdt),
            "qkv_a": jax.random.normal(lk[1], (D, r)).astype(wdt),
            "qkv_b": (alpha * jnp.zeros((r, 3 * D))).astype(wdt),
            "out_w": (0.02 * out_scale *
                      jax.random.normal(lk[2], (D, D))).astype(wdt),
            "out_a": jax.random.normal(lk[3], (D, r)).astype(wdt),
            "out_b": (alpha * jnp.zeros((r, D))).astype(wdt),
            "fc1_wg": (0.02 * jax.random.normal(lk[4], (D, I))).astype(wdt),
            "fc1_wu": (0.02 * jax.random.normal(lk[5], (D, I))).astype(wdt),
            "fc1_a": jax.random.normal(lk[6], (D, r)).astype(wdt),
            "fc1_bg": (alpha * jnp.zeros((r, I))).astype(wdt),
            "fc1_bu": (alpha * jnp.zeros((r, I))).astype(wdt),
            "fc2_w": (0.02 * out_scale *
                      jax.random.normal(lk[7], (I, D))).astype(wdt),
            "fc2_a": jax.random.normal(lk[8], (I, r)).astype(wdt),
            "fc2_b": (alpha * jnp.zeros((r, D))).astype(wdt),
            "ls1": 0.1 * jnp.ones((1, D), jnp.float32),
            "ls2": 0.1 * jnp.ones((1, D), jnp.float32),
        })
    return params


# ----------------------------------------------------------------------------
# Forward pass
# ----------------------------------------------------------------------------
def lunaris_forward(params, input_ids, cfg):
    B, S = input_ids.shape
    D, H = cfg.d_model, cfg.n_heads
    hd = D // H
    scale = 1.0 / math.sqrt(hd)

    emb = params["token_embedding"]                # (V, D) bf16
    x = emb[input_ids].reshape(B * S, D)           # token-embedding gather (glue)

    # TODO(synk): dropout layers are identity (eval mode); the ALiBi bias is
    # built by the reference but never consumed by flash_attn_func, so omitted.
    for lp in params["layers"]:
        # --- attention sub-block: LN fused into qkv proj, layer-scale
        #     residual fused into the output projection ---
        qkv = ln_lora_linear(x, lp["ln1_g"], lp["ln1_b"],
                             lp["qkv_w"], lp["qkv_a"], lp["qkv_b"])   # (BS, 3D)
        attn = flash_causal_attention(qkv, B, S, D, H, scale)          # (BS, D)
        x = lora_linear_residual(attn, x, lp["ls1"],
                                 lp["out_w"], lp["out_a"], lp["out_b"])

        # --- feed-forward sub-block: LN + fc1 + SwiGLU fused, fc2 + residual
        #     fused ---
        h = ln_lora_swiglu(x, lp["ln2_g"], lp["ln2_b"],
                           lp["fc1_wg"], lp["fc1_wu"], lp["fc1_a"],
                           lp["fc1_bg"], lp["fc1_bu"])                 # (BS, 3D)
        x = lora_linear_residual(h, x, lp["ls2"],
                                 lp["fc2_w"], lp["fc2_a"], lp["fc2_b"])

    logits = final_ln_lm_head(x, params["final_ln_g"], params["final_ln_b"],
                              emb)                                     # (BS, V)
    return logits.reshape(B, S, -1)


# ----------------------------------------------------------------------------
# Driver
# ----------------------------------------------------------------------------
class Config:
    vocab_size = 64
    d_model = 32
    n_layers = 2
    n_heads = 4
    max_seq_len = 16
    dropout = 0.1
    activation = "swiglu"
    lora_rank = 8


if __name__ == "__main__":
    cfg = Config()
    key = jax.random.PRNGKey(0)
    params = init_params(key, cfg)

    ids_key = jax.random.fold_in(key, 999)
    input_ids = jax.random.randint(ids_key, (2, 8), 0, cfg.vocab_size,
                                   dtype=jnp.int32)

    fwd = jax.jit(lambda p, ids: lunaris_forward(p, ids, cfg))
    logits = jax.block_until_ready(fwd(params, input_ids))

    assert logits.shape == (2, 8, cfg.vocab_size), logits.shape
    assert bool(jnp.all(jnp.isfinite(logits)))
    print("KERNEL_OK")
</pallas_src>

<mosaic_0001>
module attributes {stable_mosaic.version = 11 : i64} {
  func.func @_lora_residual_kernel(%arg0: i32, %arg1: i32, %arg2: memref<16x32xbf16, #tpu.memory_space<vmem>>, %arg3: memref<16x32xbf16, #tpu.memory_space<vmem>>, %arg4: memref<1x32xf32, #tpu.memory_space<vmem>>, %arg5: memref<32x32xbf16, #tpu.memory_space<vmem>>, %arg6: memref<32x8xbf16, #tpu.memory_space<vmem>>, %arg7: memref<8x32xbf16, #tpu.memory_space<vmem>>, %arg8: memref<16x32xbf16, #tpu.memory_space<vmem>>, %arg9: memref<16x8xbf16, #tpu.memory_space<vmem>>) attributes {dimension_semantics = [#tpu.dimension_semantics<parallel>, #tpu.dimension_semantics<arbitrary>], iteration_bounds = array<i64: 1, 1>, scalar_prefetch = 0 : i64, scratch_operands = 1 : i64, tpu.core_type = #tpu.core_type<tc>, window_params = [{transform_indices = @transform_0, window_bounds = array<i64: 16, 32>}, {transform_indices = @transform_1, window_bounds = array<i64: 16, 32>}, {transform_indices = @transform_2, window_bounds = array<i64: 1, 32>}, {transform_indices = @transform_3, window_bounds = array<i64: 32, 32>}, {pipeline_mode = #tpu.pipeline_mode<synchronous>, transform_indices = @transform_4, window_bounds = array<i64: 32, 8>}, {transform_indices = @transform_5, window_bounds = array<i64: 8, 32>}, {transform_indices = @transform_6, window_bounds = array<i64: 16, 32>}]} {
    %c0_i32 = arith.constant 0 : i32
    %0 = arith.cmpi eq, %arg1, %c0_i32 : i32
    %1 = arith.extui %0 : i1 to i32
    %c0_i32_0 = arith.constant 0 : i32
    %2 = arith.cmpi ne, %1, %c0_i32_0 : i32
    scf.if %2 {
      %c0_15 = arith.constant 0 : index
      %c0_16 = arith.constant 0 : index
      %18 = vector.load %arg2[%c0_15, %c0_16] : memref<16x32xbf16, #tpu.memory_space<vmem>>, vector<16x32xbf16>
      %c0_17 = arith.constant 0 : index
      %c0_18 = arith.constant 0 : index
      %19 = vector.load %arg6[%c0_17, %c0_18] : memref<32x8xbf16, #tpu.memory_space<vmem>>, vector<32x8xbf16>
      %cst_19 = arith.constant dense<0.000000e+00> : vector<16x8xf32>
      %20 = tpu.matmul %18, %19, %cst_19 {dimension_numbers = #tpu.dot_dimension_numbers<[1], [0], [0], [1], [0, 0, 1, 1], [], []>} : vector<16x32xbf16>, vector<32x8xbf16>, vector<16x8xf32> -> vector<16x8xf32>
      %21 = arith.truncf %20 : vector<16x8xf32> to vector<16x8xbf16>
      %c0_20 = arith.constant 0 : index
      %c0_21 = arith.constant 0 : index
      %22 = vector.load %arg9[%c0_20, %c0_21] : memref<16x8xbf16, #tpu.memory_space<vmem>>, vector<16x8xbf16>
      tpu.vector_store %arg9[%c0_20, %c0_21], %21 {strides = array<i32>} : memref<16x8xbf16, #tpu.memory_space<vmem>>, vector<16x8xbf16>,
    } else {
    }
    %c0 = arith.constant 0 : index
    %c0_1 = arith.constant 0 : index
    %3 = vector.load %arg2[%c0, %c0_1] : memref<16x32xbf16, #tpu.memory_space<vmem>>, vector<16x32xbf16>
    %c0_2 = arith.constant 0 : index
    %c0_3 = arith.constant 0 : index
    %4 = vector.load %arg5[%c0_2, %c0_3] : memref<32x32xbf16, #tpu.memory_space<vmem>>, vector<32x32xbf16>
    %cst = arith.constant dense<0.000000e+00> : vector<16x32xf32>
    %5 = tpu.matmul %3, %4, %cst {dimension_numbers = #tpu.dot_dimension_numbers<[1], [0], [0], [1], [0, 0, 1, 1], [], []>} : vector<16x32xbf16>, vector<32x32xbf16>, vector<16x32xf32> -> vector<16x32xf32>
    %c0_4 = arith.constant 0 : index
    %c0_5 = arith.constant 0 : index
    %6 = vector.load %arg9[%c0_4, %c0_5] : memref<16x8xbf16, #tpu.memory_space<vmem>>, vector<16x8xbf16>
    %c0_6 = arith.constant 0 : index
    %c0_7 = arith.constant 0 : index
    %7 = vector.load %arg7[%c0_6, %c0_7] : memref<8x32xbf16, #tpu.memory_space<vmem>>, vector<8x32xbf16>
    %cst_8 = arith.constant dense<0.000000e+00> : vector<16x32xf32>
    %8 = tpu.matmul %6, %7, %cst_8 {dimension_numbers = #tpu.dot_dimension_numbers<[1], [0], [0], [1], [0, 0, 1, 1], [], []>} : vector<16x8xbf16>, vector<8x32xbf16>, vector<16x32xf32> -> vector<16x32xf32>
    %9 = arith.addf %5, %8 : vector<16x32xf32>
    %c0_9 = arith.constant 0 : index
    %c0_10 = arith.constant 0 : index
    %10 = vector.load %arg3[%c0_9, %c0_10] : memref<16x32xbf16, #tpu.memory_space<vmem>>, vector<16x32xbf16>
    %11 = arith.extf %10 : vector<16x32xbf16> to vector<16x32xf32>
    %c0_11 = arith.constant 0 : index
    %c0_12 = arith.constant 0 : index
    %12 = vector.load %arg4[%c0_11, %c0_12] : memref<1x32xf32, #tpu.memory_space<vmem>>, vector<1x32xf32>
    %13 = vector.broadcast %12 : vector<1x32xf32> to vector<16x32xf32>
    %14 = arith.mulf %13, %9 : vector<16x32xf32>
    %15 = arith.addf %11, %14 : vector<16x32xf32>
    %16 = arith.truncf %15 : vector<16x32xf32> to vector<16x32xbf16>
    %c0_13 = arith.constant 0 : index
    %c0_14 = arith.constant 0 : index
    %17 = vector.load %arg8[%c0_13, %c0_14] : memref<16x32xbf16, #tpu.memory_space<vmem>>, vector<16x32xbf16>
    tpu.vector_store %arg8[%c0_13, %c0_14], %16 {strides = array<i32>} : memref<16x32xbf16, #tpu.memory_space<vmem>>, vector<16x32xbf16>,
    return
  }
  func.func @transform_0(%arg0: i32, %arg1: i32) -> (i32, i32) {
    %c0_i32 = arith.constant 0 : i32
    %c0_i32_0 = arith.constant 0 : i32
    return %arg0, %c0_i32 : i32, i32
  }
  func.func @transform_1(%arg0: i32, %arg1: i32) -> (i32, i32) {
    %c0_i32 = arith.constant 0 : i32
    return %arg0, %arg1 : i32, i32
  }
  func.func @transform_2(%arg0: i32, %arg1: i32) -> (i32, i32) {
    %c0_i32 = arith.constant 0 : i32
    %c0_i32_0 = arith.constant 0 : i32
    return %c0_i32, %arg1 : i32, i32
  }
  func.func @transform_3(%arg0: i32, %arg1: i32) -> (i32, i32) {
    %c0_i32 = arith.constant 0 : i32
    %c0_i32_0 = arith.constant 0 : i32
    return %c0_i32, %arg1 : i32, i32
  }
  func.func @transform_4(%arg0: i32, %arg1: i32) -> (i32, i32) {
    %c0_i32 = arith.constant 0 : i32
    %c0_i32_0 = arith.constant 0 : i32
    %c0_i32_1 = arith.constant 0 : i32
    return %c0_i32, %c0_i32_0 : i32, i32
  }
  func.func @transform_5(%arg0: i32, %arg1: i32) -> (i32, i32) {
    %c0_i32 = arith.constant 0 : i32
    %c0_i32_0 = arith.constant 0 : i32
    return %c0_i32, %arg1 : i32, i32
  }
  func.func @transform_6(%arg0: i32, %arg1: i32) -> (i32, i32) {
    %c0_i32 = arith.constant 0 : i32
    return %arg0, %arg1 : i32, i32
  }
}

module attributes {stable_mosaic.version = 11 : i64} {
  func.func @_ln_lora_linear_kernel(%arg0: i32, %arg1: i32, %arg2: memref<16x32xbf16, #tpu.memory_space<vmem>>, %arg3: memref<1x32xf32, #tpu.memory_space<vmem>>, %arg4: memref<1x32xf32, #tpu.memory_space<vmem>>, %arg5: memref<32x96xbf16, #tpu.memory_space<vmem>>, %arg6: memref<32x8xbf16, #tpu.memory_space<vmem>>, %arg7: memref<8x96xbf16, #tpu.memory_space<vmem>>, %arg8: memref<16x96xbf16, #tpu.memory_space<vmem>>, %arg9: memref<16x32xbf16, #tpu.memory_space<vmem>>, %arg10: memref<16x8xbf16, #tpu.memory_space<vmem>>) attributes {dimension_semantics = [#tpu.dimension_semantics<parallel>, #tpu.dimension_semantics<arbitrary>], iteration_bounds = array<i64: 1, 1>, scalar_prefetch = 0 : i64, scratch_operands = 2 : i64, tpu.core_type = #tpu.core_type<tc>, window_params = [{transform_indices = @transform_0, window_bounds = array<i64: 16, 32>}, {pipeline_mode = #tpu.pipeline_mode<synchronous>, transform_indices = @transform_1, window_bounds = array<i64: 1, 32>}, {pipeline_mode = #tpu.pipeline_mode<synchronous>, transform_indices = @transform_2, window_bounds = array<i64: 1, 32>}, {transform_indices = @transform_3, window_bounds = array<i64: 32, 96>}, {pipeline_mode = #tpu.pipeline_mode<synchronous>, transform_indices = @transform_4, window_bounds = array<i64: 32, 8>}, {transform_indices = @transform_5, window_bounds = array<i64: 8, 96>}, {transform_indices = @transform_6, window_bounds = array<i64: 16, 96>}]} {
    %c0_i32 = arith.constant 0 : i32
    %0 = arith.cmpi eq, %arg1, %c0_i32 : i32
    %1 = arith.extui %0 : i1 to i32
    %c0_i32_0 = arith.constant 0 : i32
    %2 = arith.cmpi ne, %1, %c0_i32_0 : i32
    scf.if %2 {
      %c0_11 = arith.constant 0 : index
      %c0_12 = arith.constant 0 : index
      %12 = vector.load %arg2[%c0_11, %c0_12] : memref<16x32xbf16, #tpu.memory_space<vmem>>, vector<16x32xbf16>
      %13 = arith.extf %12 : vector<16x32xbf16> to vector<16x32xf32>
      %cst_13 = arith.constant dense<0.000000e+00> : vector<16xf32>
      %14 = vector.multi_reduction <add>, %13, %cst_13 [1] : vector<16x32xf32> to vector<16xf32>
      %15 = vector.shape_cast %14 : vector<16xf32> to vector<16x1xf32>
      %cst_14 = arith.constant 3.200000e+01 : f32
      %16 = vector.broadcast %cst_14 : f32 to vector<16x1xf32>
      %17 = arith.divf %15, %16 : vector<16x1xf32>
      %18 = arith.mulf %13, %13 : vector<16x32xf32>
      %cst_15 = arith.constant dense<0.000000e+00> : vector<16xf32>
      %19 = vector.multi_reduction <add>, %18, %cst_15 [1] : vector<16x32xf32> to vector<16xf32>
      %20 = vector.shape_cast %19 : vector<16xf32> to vector<16x1xf32>
      %cst_16 = arith.constant 3.200000e+01 : f32
      %21 = vector.broadcast %cst_16 : f32 to vector<16x1xf32>
      %22 = arith.divf %20, %21 : vector<16x1xf32>
      %23 = arith.mulf %17, %17 : vector<16x1xf32>
      %24 = arith.subf %22, %23 : vector<16x1xf32>
      %25 = vector.broadcast %17 : vector<16x1xf32> to vector<16x32xf32>
      %26 = arith.subf %13, %25 : vector<16x32xf32>
      %cst_17 = arith.constant 9.99999974E-6 : f32
      %27 = vector.broadcast %cst_17 : f32 to vector<16x1xf32>
      %28 = arith.addf %24, %27 : vector<16x1xf32>
      %29 = math.rsqrt %28 : vector<16x1xf32>
      %30 = vector.broadcast %29 : vector<16x1xf32> to vector<16x32xf32>
      %31 = arith.mulf %26, %30 : vector<16x32xf32>
      %c0_18 = arith.constant 0 : index
      %c0_19 = arith.constant 0 : index
      %32 = vector.load %arg3[%c0_18, %c0_19] : memref<1x32xf32, #tpu.memory_space<vmem>>, vector<1x32xf32>
      %33 = vector.broadcast %32 : vector<1x32xf32> to vector<16x32xf32>
      %34 = arith.mulf %31, %33 : vector<16x32xf32>
      %c0_20 = arith.constant 0 : index
      %c0_21 = arith.constant 0 : index
      %35 = vector.load %arg4[%c0_20, %c0_21] : memref<1x32xf32, #tpu.memory_space<vmem>>, vector<1x32xf32>
      %36 = vector.broadcast %35 : vector<1x32xf32> to vector<16x32xf32>
      %37 = arith.addf %34, %36 : vector<16x32xf32>
      %38 = arith.truncf %37 : vector<16x32xf32> to vector<16x32xbf16>
      %c0_22 = arith.constant 0 : index
      %c0_23 = arith.constant 0 : index
      %39 = vector.load %arg9[%c0_22, %c0_23] : memref<16x32xbf16, #tpu.memory_space<vmem>>, vector<16x32xbf16>
      tpu.vector_store %arg9[%c0_22, %c0_23], %38 {strides = array<i32>} : memref<16x32xbf16, #tpu.memory_space<vmem>>, vector<16x32xbf16>,
      %c0_24 = arith.constant 0 : index
      %c0_25 = arith.constant 0 : index
      %40 = vector.load %arg9[%c0_24, %c0_25] : memref<16x32xbf16, #tpu.memory_space<vmem>>, vector<16x32xbf16>
      %c0_26 = arith.constant 0 : index
      %c0_27 = arith.constant 0 : index
      %41 = vector.load %arg6[%c0_26, %c0_27] : memref<32x8xbf16, #tpu.memory_space<vmem>>, vector<32x8xbf16>
      %cst_28 = arith.constant dense<0.000000e+00> : vector<16x8xf32>
      %42 = tpu.matmul %40, %41, %cst_28 {dimension_numbers = #tpu.dot_dimension_numbers<[1], [0], [0], [1], [0, 0, 1, 1], [], []>} : vector<16x32xbf16>, vector<32x8xbf16>, vector<16x8xf32> -> vector<16x8xf32>
      %43 = arith.truncf %42 : vector<16x8xf32> to vector<16x8xbf16>
      %c0_29 = arith.constant 0 : index
      %c0_30 = arith.constant 0 : index
      %44 = vector.load %arg10[%c0_29, %c0_30] : memref<16x8xbf16, #tpu.memory_space<vmem>>, vector<16x8xbf16>
      tpu.vector_store %arg10[%c0_29, %c0_30], %43 {strides = array<i32>} : memref<16x8xbf16, #tpu.memory_space<vmem>>, vector<16x8xbf16>,
    } else {
    }
    %c0 = arith.constant 0 : index
    %c0_1 = arith.constant 0 : index
    %3 = vector.load %arg9[%c0, %c0_1] : memref<16x32xbf16, #tpu.memory_space<vmem>>, vector<16x32xbf16>
    %c0_2 = arith.constant 0 : index
    %c0_3 = arith.constant 0 : index
    %4 = vector.load %arg5[%c0_2, %c0_3] : memref<32x96xbf16, #tpu.memory_space<vmem>>, vector<32x96xbf16>
    %cst = arith.constant dense<0.000000e+00> : vector<16x96xf32>
    %5 = tpu.matmul %3, %4, %cst {dimension_numbers = #tpu.dot_dimension_numbers<[1], [0], [0], [1], [0, 0, 1, 1], [], []>} : vector<16x32xbf16>, vector<32x96xbf16>, vector<16x96xf32> -> vector<16x96xf32>
    %c0_4 = arith.constant 0 : index
    %c0_5 = arith.constant 0 : index
    %6 = vector.load %arg10[%c0_4, %c0_5] : memref<16x8xbf16, #tpu.memory_space<vmem>>, vector<16x8xbf16>
    %c0_6 = arith.constant 0 : index
    %c0_7 = arith.constant 0 : index
    %7 = vector.load %arg7[%c0_6, %c0_7] : memref<8x96xbf16, #tpu.memory_space<vmem>>, vector<8x96xbf16>
    %cst_8 = arith.constant dense<0.000000e+00> : vector<16x96xf32>
    %8 = tpu.matmul %6, %7, %cst_8 {dimension_numbers = #tpu.dot_dimension_numbers<[1], [0], [0], [1], [0, 0, 1, 1], [], []>} : vector<16x8xbf16>, vector<8x96xbf16>, vector<16x96xf32> -> vector<16x96xf32>
    %9 = arith.addf %5, %8 : vector<16x96xf32>
    %10 = arith.truncf %9 : vector<16x96xf32> to vector<16x96xbf16>
    %c0_9 = arith.constant 0 : index
    %c0_10 = arith.constant 0 : index
    %11 = vector.load %arg8[%c0_9, %c0_10] : memref<16x96xbf16, #tpu.memory_space<vmem>>, vector<16x96xbf16>
    tpu.vector_store %arg8[%c0_9, %c0_10], %10 {strides = array<i32>} : memref<16x96xbf16, #tpu.memory_space<vmem>>, vector<16x96xbf16>,
    return
  }
  func.func @transform_0(%arg0: i32, %arg1: i32) -> (i32, i32) {
    %c0_i32 = arith.constant 0 : i32
    %c0_i32_0 = arith.constant 0 : i32
    return %arg0, %c0_i32 : i32, i32
  }
  func.func @transform_1(%arg0: i32, %arg1: i32) -> (i32, i32) {
    %c0_i32 = arith.constant 0 : i32
    %c0_i32_0 = arith.constant 0 : i32
    %c0_i32_1 = arith.constant 0 : i32
    return %c0_i32, %c0_i32_0 : i32, i32
  }
  func.func @transform_2(%arg0: i32, %arg1: i32) -> (i32, i32) {
    %c0_i32 = arith.constant 0 : i32
    %c0_i32_0 = arith.constant 0 : i32
    %c0_i32_1 = arith.constant 0 : i32
    return %c0_i32, %c0_i32_0 : i32, i32
  }
  func.func @transform_3(%arg0: i32, %arg1: i32) -> (i32, i32) {
    %c0_i32 = arith.constant 0 : i32
    %c0_i32_0 = arith.constant 0 : i32
    return %c0_i32, %arg1 : i32, i32
  }
  func.func @transform_4(%arg0: i32, %arg1: i32) -> (i32, i32) {
    %c0_i32 = arith.constant 0 : i32
    %c0_i32_0 = arith.constant 0 : i32
    %c0_i32_1 = arith.constant 0 : i32
    return %c0_i32, %c0_i32_0 : i32, i32
  }
  func.func @transform_5(%arg0: i32, %arg1: i32) -> (i32, i32) {
    %c0_i32 = arith.constant 0 : i32
    %c0_i32_0 = arith.constant 0 : i32
    return %c0_i32, %arg1 : i32, i32
  }
  func.func @transform_6(%arg0: i32, %arg1: i32) -> (i32, i32) {
    %c0_i32 = arith.constant 0 : i32
    return %arg0, %arg1 : i32, i32
  }
}

module attributes {stable_mosaic.version = 11 : i64} {
  func.func @_flash_attn_kernel(%arg0: i32, %arg1: i32, %arg2: i32, %arg3: memref<8x96xbf16, #tpu.memory_space<vmem>>, %arg4: memref<8x96xbf16, #tpu.memory_space<vmem>>, %arg5: memref<8x32xbf16, #tpu.memory_space<vmem>>, %arg6: memref<8x4xf32, #tpu.memory_space<vmem>>, %arg7: memref<8x4xf32, #tpu.memory_space<vmem>>, %arg8: memref<8x32xf32, #tpu.memory_space<vmem>>) attributes {dimension_semantics = [#tpu.dimension_semantics<parallel>, #tpu.dimension_semantics<parallel>, #tpu.dimension_semantics<arbitrary>], iteration_bounds = array<i64: 2, 1, 1>, scalar_prefetch = 0 : i64, scratch_operands = 3 : i64, tpu.core_type = #tpu.core_type<tc>, window_params = [{transform_indices = @transform_0, window_bounds = array<i64: 8, 96>}, {transform_indices = @transform_1, window_bounds = array<i64: 8, 96>}, {transform_indices = @transform_2, window_bounds = array<i64: 8, 32>}]} {
    %c0_i32 = arith.constant 0 : i32
    %0 = arith.cmpi eq, %arg2, %c0_i32 : i32
    %1 = arith.extui %0 : i1 to i32
    %c0_i32_0 = arith.constant 0 : i32
    %2 = arith.cmpi ne, %1, %c0_i32_0 : i32
    scf.if %2 {
      %cst = arith.constant -1.000000e+30 : f32
      %13 = vector.broadcast %cst : f32 to vector<8x4xf32>
      %c0 = arith.constant 0 : index
      %c0_6 = arith.constant 0 : index
      %14 = vector.load %arg6[%c0, %c0_6] : memref<8x4xf32, #tpu.memory_space<vmem>>, vector<8x4xf32>
      tpu.vector_store %arg6[%c0, %c0_6], %13 {strides = array<i32>} : memref<8x4xf32, #tpu.memory_space<vmem>>, vector<8x4xf32>,
      %cst_7 = arith.constant 0.000000e+00 : f32
      %15 = vector.broadcast %cst_7 : f32 to vector<8x4xf32>
      %c0_8 = arith.constant 0 : index
      %c0_9 = arith.constant 0 : index
      %16 = vector.load %arg7[%c0_8, %c0_9] : memref<8x4xf32, #tpu.memory_space<vmem>>, vector<8x4xf32>
      tpu.vector_store %arg7[%c0_8, %c0_9], %15 {strides = array<i32>} : memref<8x4xf32, #tpu.memory_space<vmem>>, vector<8x4xf32>,
      %cst_10 = arith.constant 0.000000e+00 : f32
      %17 = vector.broadcast %cst_10 : f32 to vector<8x32xf32>
      %c0_11 = arith.constant 0 : index
      %c0_12 = arith.constant 0 : index
      %18 = vector.load %arg8[%c0_11, %c0_12] : memref<8x32xf32, #tpu.memory_space<vmem>>, vector<8x32xf32>
      tpu.vector_store %arg8[%c0_11, %c0_12], %17 {strides = array<i32>} : memref<8x32xf32, #tpu.memory_space<vmem>>, vector<8x32xf32>,
    } else {
    }
    %c8_i32 = arith.constant 8 : i32
    %3 = arith.muli %arg1, %c8_i32 : i32
    %c8_i32_1 = arith.constant 8 : i32
    %4 = arith.muli %arg2, %c8_i32_1 : i32
    %c8_i32_2 = arith.constant 8 : i32
    %5 = arith.addi %3, %c8_i32_2 : i32
    %c1_i32 = arith.constant 1 : i32
    %6 = arith.subi %5, %c1_i32 : i32
    %7 = arith.cmpi sle, %4, %6 : i32
    %8 = arith.extui %7 : i1 to i32
    %c0_i32_3 = arith.constant 0 : i32
    %9 = arith.cmpi ne, %8, %c0_i32_3 : i32
    scf.if %9 {
      %13 = tpu.iota {dimensions = array<i32: 0>} : vector<8x8xi32>
      %14 = vector.broadcast %3 : i32 to vector<8x8xi32>
      %15 = arith.addi %14, %13 : vector<8x8xi32>
      %16 = tpu.iota {dimensions = array<i32: 1>} : vector<8x8xi32>
      %17 = vector.broadcast %4 : i32 to vector<8x8xi32>
      %18 = arith.addi %17, %16 : vector<8x8xi32>
      %19 = arith.cmpi sle, %18, %15 : vector<8x8xi32>
      %c0 = arith.constant 0 : index
      %c0_6 = arith.constant 0 : index
      %20 = vector.load %arg3[%c0, %c0_6] : memref<8x96xbf16, #tpu.memory_space<vmem>>, vector<8x8xbf16>
      %c0_7 = arith.constant 0 : index
      %c32 = arith.constant 32 : index
      %21 = vector.load %arg4[%c0_7, %c32] : memref<8x96xbf16, #tpu.memory_space<vmem>>, vector<8x8xbf16>
      %c0_8 = arith.constant 0 : index
      %c64 = arith.constant 64 : index
      %22 = vector.load %arg4[%c0_8, %c64] : memref<8x96xbf16, #tpu.memory_space<vmem>>, vector<8x8xbf16>
      %cst = arith.constant dense<0.000000e+00> : vector<8x8xf32>
      %23 = tpu.matmul %20, %21, %cst {dimension_numbers = #tpu.dot_dimension_numbers<[1], [1], [0], [0], [0, 0, 1, 0], [], []>} : vector<8x8xbf16>, vector<8x8xbf16>, vector<8x8xf32> -> vector<8x8xf32>
      %cst_9 = arith.constant 0.353553385 : f32
      %24 = vector.broadcast %cst_9 : f32 to vector<8x8xf32>
      %25 = arith.mulf %23, %24 : vector<8x8xf32>
      %cst_10 = arith.constant -1.000000e+30 : f32
      %26 = vector.broadcast %cst_10 : f32 to vector<8x8xf32>
      %27 = arith.select %19, %25, %26 : vector<8x8xi1>, vector<8x8xf32>
      %c0_11 = arith.constant 0 : index
      %c0_12 = arith.constant 0 : index
      %28 = vector.load %arg6[%c0_11, %c0_12] : memref<8x4xf32, #tpu.memory_space<vmem>>, vector<8x1xf32>
      %cst_13 = arith.constant dense<0xFF800000> : vector<8xf32>
      %29 = vector.multi_reduction <maximumf>, %27, %cst_13 [1] : vector<8x8xf32> to vector<8xf32>
      %30 = vector.shape_cast %29 : vector<8xf32> to vector<8x1xf32>
      %31 = arith.maximumf %28, %30 : vector<8x1xf32>
      %32 = vector.broadcast %31 : vector<8x1xf32> to vector<8x8xf32>
      %33 = arith.subf %27, %32 : vector<8x8xf32>
      %34 = math.exp %33 : vector<8x8xf32>
      %35 = arith.subf %28, %31 : vector<8x1xf32>
      %36 = math.exp %35 : vector<8x1xf32>
      %c0_14 = arith.constant 0 : index
      %c0_15 = arith.constant 0 : index
      %37 = vector.load %arg7[%c0_14, %c0_15] : memref<8x4xf32, #tpu.memory_space<vmem>>, vector<8x1xf32>
      %38 = arith.mulf %36, %37 : vector<8x1xf32>
      %cst_16 = arith.constant dense<0.000000e+00> : vector<8xf32>
      %39 = vector.multi_reduction <add>, %34, %cst_16 [1] : vector<8x8xf32> to vector<8xf32>
      %40 = vector.shape_cast %39 : vector<8xf32> to vector<8x1xf32>
      %41 = arith.addf %38, %40 : vector<8x1xf32>
      %c0_17 = arith.constant 0 : index
      %c0_18 = arith.constant 0 : index
      %42 = vector.load %arg7[%c0_17, %c0_18] : memref<8x4xf32, #tpu.memory_space<vmem>>, vector<8x1xf32>
      tpu.vector_store %arg7[%c0_17, %c0_18], %41 {strides = array<i32>} : memref<8x4xf32, #tpu.memory_space<vmem>>, vector<8x1xf32>,
      %43 = arith.truncf %34 : vector<8x8xf32> to vector<8x8xbf16>
      %cst_19 = arith.constant dense<0.000000e+00> : vector<8x8xf32>
      %44 = tpu.matmul %43, %22, %cst_19 {dimension_numbers = #tpu.dot_dimension_numbers<[1], [0], [0], [1], [0, 0, 1, 1], [], []>} : vector<8x8xbf16>, vector<8x8xbf16>, vector<8x8xf32> -> vector<8x8xf32>
      %c0_20 = arith.constant 0 : index
      %c0_21 = arith.constant 0 : index
      %45 = vector.load %arg8[%c0_20, %c0_21] : memref<8x32xf32, #tpu.memory_space<vmem>>, vector<8x8xf32>
      %46 = vector.broadcast %36 : vector<8x1xf32> to vector<8x8xf32>
      %47 = arith.mulf %46, %45 : vector<8x8xf32>
      %48 = arith.addf %47, %44 : vector<8x8xf32>
      %c0_22 = arith.constant 0 : index
      %c0_23 = arith.constant 0 : index
      %49 = vector.load %arg8[%c0_22, %c0_23] : memref<8x32xf32, #tpu.memory_space<vmem>>, vector<8x8xf32>
      tpu.vector_store %arg8[%c0_22, %c0_23], %48 {strides = array<i32>} : memref<8x32xf32, #tpu.memory_space<vmem>>, vector<8x8xf32>,
      %c0_24 = arith.constant 0 : index
      %c0_25 = arith.constant 0 : index
      %50 = vector.load %arg6[%c0_24, %c0_25] : memref<8x4xf32, #tpu.memory_space<vmem>>, vector<8x1xf32>
      tpu.vector_store %arg6[%c0_24, %c0_25], %31 {strides = array<i32>} : memref<8x4xf32, #tpu.memory_space<vmem>>, vector<8x1xf32>,
      %c0_26 = arith.constant 0 : index
      %c8 = arith.constant 8 : index
      %51 = vector.load %arg3[%c0_26, %c8] : memref<8x96xbf16, #tpu.memory_space<vmem>>, vector<8x8xbf16>
      %c0_27 = arith.constant 0 : index
      %c40 = arith.constant 40 : index
      %52 = vector.load %arg4[%c0_27, %c40] : memref<8x96xbf16, #tpu.memory_space<vmem>>, vector<8x8xbf16>
      %c0_28 = arith.constant 0 : index
      %c72 = arith.constant 72 : index
      %53 = vector.load %arg4[%c0_28, %c72] : memref<8x96xbf16, #tpu.memory_space<vmem>>, vector<8x8xbf16>
      %cst_29 = arith.constant dense<0.000000e+00> : vector<8x8xf32>
      %54 = tpu.matmul %51, %52, %cst_29 {dimension_numbers = #tpu.dot_dimension_numbers<[1], [1], [0], [0], [0, 0, 1, 0], [], []>} : vector<8x8xbf16>, vector<8x8xbf16>, vector<8x8xf32> -> vector<8x8xf32>
      %cst_30 = arith.constant 0.353553385 : f32
      %55 = vector.broadcast %cst_30 : f32 to vector<8x8xf32>
      %56 = arith.mulf %54, %55 : vector<8x8xf32>
      %cst_31 = arith.constant -1.000000e+30 : f32
      %57 = vector.broadcast %cst_31 : f32 to vector<8x8xf32>
      %58 = arith.select %19, %56, %57 : vector<8x8xi1>, vector<8x8xf32>
      %c0_32 = arith.constant 0 : index
      %c1 = arith.constant 1 : index
      %59 = vector.load %arg6[%c0_32, %c1] : memref<8x4xf32, #tpu.memory_space<vmem>>, vector<8x1xf32>
      %cst_33 = arith.constant dense<0xFF800000> : vector<8xf32>
      %60 = vector.multi_reduction <maximumf>, %58, %cst_33 [1] : vector<8x8xf32> to vector<8xf32>
      %61 = vector.shape_cast %60 : vector<8xf32> to vector<8x1xf32>
      %62 = arith.maximumf %59, %61 : vector<8x1xf32>
      %63 = vector.broadcast %62 : vector<8x1xf32> to vector<8x8xf32>
      %64 = arith.subf %58, %63 : vector<8x8xf32>
      %65 = math.exp %64 : vector<8x8xf32>
      %66 = arith.subf %59, %62 : vector<8x1xf32>
      %67 = math.exp %66 : vector<8x1xf32>
      %c0_34 = arith.constant 0 : index
      %c1_35 = arith.constant 1 : index
      %68 = vector.load %arg7[%c0_34, %c1_35] : memref<8x4xf32, #tpu.memory_space<vmem>>, vector<8x1xf32>
      %69 = arith.mulf %67, %68 : vector<8x1xf32>
      %cst_36 = arith.constant dense<0.000000e+00> : vector<8xf32>
      %70 = vector.multi_reduction <add>, %65, %cst_36 [1] : vector<8x8xf32> to vector<8xf32>
      %71 = vector.shape_cast %70 : vector<8xf32> to vector<8x1xf32>
      %72 = arith.addf %69, %71 : vector<8x1xf32>
      %c0_37 = arith.constant 0 : index
      %c1_38 = arith.constant 1 : index
      %73 = vector.load %arg7[%c0_37, %c1_38] : memref<8x4xf32, #tpu.memory_space<vmem>>, vector<8x1xf32>
      tpu.vector_store %arg7[%c0_37, %c1_38], %72 {strides = array<i32>} : memref<8x4xf32, #tpu.memory_space<vmem>>, vector<8x1xf32>,
      %74 = arith.truncf %65 : vector<8x8xf32> to vector<8x8xbf16>
      %cst_39 = arith.constant dense<0.000000e+00> : vector<8x8xf32>
      %75 = tpu.matmul %74, %53, %cst_39 {dimension_numbers = #tpu.dot_dimension_numbers<[1], [0], [0], [1], [0, 0, 1, 1], [], []>} : vector<8x8xbf16>, vector<8x8xbf16>, vector<8x8xf32> -> vector<8x8xf32>
      %c0_40 = arith.constant 0 : index
      %c8_41 = arith.constant 8 : index
      %76 = vector.load %arg8[%c0_40, %c8_41] : memref<8x32xf32, #tpu.memory_space<vmem>>, vector<8x8xf32>
      %77 = vector.broadcast %67 : vector<8x1xf32> to vector<8x8xf32>
      %78 = arith.mulf %77, %76 : vector<8x8xf32>
      %79 = arith.addf %78, %75 : vector<8x8xf32>
      %c0_42 = arith.constant 0 : index
      %c8_43 = arith.constant 8 : index
      %80 = vector.load %arg8[%c0_42, %c8_43] : memref<8x32xf32, #tpu.memory_space<vmem>>, vector<8x8xf32>
      tpu.vector_store %arg8[%c0_42, %c8_43], %79 {strides = array<i32>} : memref<8x32xf32, #tpu.memory_space<vmem>>, vector<8x8xf32>,
      %c0_44 = arith.constant 0 : index
      %c1_45 = arith.constant 1 : index
      %81 = vector.load %arg6[%c0_44, %c1_45] : memref<8x4xf32, #tpu.memory_space<vmem>>, vector<8x1xf32>
      tpu.vector_store %arg6[%c0_44, %c1_45], %62 {strides = array<i32>} : memref<8x4xf32, #tpu.memory_space<vmem>>, vector<8x1xf32>,
      %c0_46 = arith.constant 0 : index
      %c16 = arith.constant 16 : index
      %82 = vector.load %arg3[%c0_46, %c16] : memref<8x96xbf16, #tpu.memory_space<vmem>>, vector<8x8xbf16>
      %c0_47 = arith.constant 0 : index
      %c48 = arith.constant 48 : index
      %83 = vector.load %arg4[%c0_47, %c48] : memref<8x96xbf16, #tpu.memory_space<vmem>>, vector<8x8xbf16>
      %c0_48 = arith.constant 0 : index
      %c80 = arith.constant 80 : index
      %84 = vector.load %arg4[%c0_48, %c80] : memref<8x96xbf16, #tpu.memory_space<vmem>>, vector<8x8xbf16>
      %cst_49 = arith.constant dense<0.000000e+00> : vector<8x8xf32>
      %85 = tpu.matmul %82, %83, %cst_49 {dimension_numbers = #tpu.dot_dimension_numbers<[1], [1], [0], [0], [0, 0, 1, 0], [], []>} : vector<8x8xbf16>, vector<8x8xbf16>, vector<8x8xf32> -> vector<8x8xf32>
      %cst_50 = arith.constant 0.353553385 : f32
      %86 = vector.broadcast %cst_50 : f32 to vector<8x8xf32>
      %87 = arith.mulf %85, %86 : vector<8x8xf32>
      %cst_51 = arith.constant -1.000000e+30 : f32
      %88 = vector.broadcast %cst_51 : f32 to vector<8x8xf32>
      %89 = arith.select %19, %87, %88 : vector<8x8xi1>, vector<8x8xf32>
      %c0_52 = arith.constant 0 : index
      %c2 = arith.constant 2 : index
      %90 = vector.load %arg6[%c0_52, %c2] : memref<8x4xf32, #tpu.memory_space<vmem>>, vector<8x1xf32>
      %cst_53 = arith.constant dense<0xFF800000> : vector<8xf32>
      %91 = vector.multi_reduction <maximumf>, %89, %cst_53 [1] : vector<8x8xf32> to vector<8xf32>
      %92 = vector.shape_cast %91 : vector<8xf32> to vector<8x1xf32>
      %93 = arith.maximumf %90, %92 : vector<8x1xf32>
      %94 = vector.broadcast %93 : vector<8x1xf32> to vector<8x8xf32>
      %95 = arith.subf %89, %94 : vector<8x8xf32>
      %96 = math.exp %95 : vector<8x8xf32>
      %97 = arith.subf %90, %93 : vector<8x1xf32>
      %98 = math.exp %97 : vector<8x1xf32>
      %c0_54 = arith.constant 0 : index
      %c2_55 = arith.constant 2 : index
      %99 = vector.load %arg7[%c0_54, %c2_55] : memref<8x4xf32, #tpu.memory_space<vmem>>, vector<8x1xf32>
      %100 = arith.mulf %98, %99 : vector<8x1xf32>
      %cst_56 = arith.constant dense<0.000000e+00> : vector<8xf32>
      %101 = vector.multi_reduction <add>, %96, %cst_56 [1] : vector<8x8xf32> to vector<8xf32>
      %102 = vector.shape_cast %101 : vector<8xf32> to vector<8x1xf32>
      %103 = arith.addf %100, %102 : vector<8x1xf32>
      %c0_57 = arith.constant 0 : index
      %c2_58 = arith.constant 2 : index
      %104 = vector.load %arg7[%c0_57, %c2_58] : memref<8x4xf32, #tpu.memory_space<vmem>>, vector<8x1xf32>
      tpu.vector_store %arg7[%c0_57, %c2_58], %103 {strides = array<i32>} : memref<8x4xf32, #tpu.memory_space<vmem>>, vector<8x1xf32>,
      %105 = arith.truncf %96 : vector<8x8xf32> to vector<8x8xbf16>
      %cst_59 = arith.constant dense<0.000000e+00> : vector<8x8xf32>
      %106 = tpu.matmul %105, %84, %cst_59 {dimension_numbers = #tpu.dot_dimension_numbers<[1], [0], [0], [1], [0, 0, 1, 1], [], []>} : vector<8x8xbf16>, vector<8x8xbf16>, vector<8x8xf32> -> vector<8x8xf32>
      %c0_60 = arith.constant 0 : index
      %c16_61 = arith.constant 16 : index
      %107 = vector.load %arg8[%c0_60, %c16_61] : memref<8x32xf32, #tpu.memory_space<vmem>>, vector<8x8xf32>
      %108 = vector.broadcast %98 : vector<8x1xf32> to vector<8x8xf32>
      %109 = arith.mulf %108, %107 : vector<8x8xf32>
      %110 = arith.addf %109, %106 : vector<8x8xf32>
      %c0_62 = arith.constant 0 : index
      %c16_63 = arith.constant 16 : index
      %111 = vector.load %arg8[%c0_62, %c16_63] : memref<8x32xf32, #tpu.memory_space<vmem>>, vector<8x8xf32>
      tpu.vector_store %arg8[%c0_62, %c16_63], %110 {strides = array<i32>} : memref<8x32xf32, #tpu.memory_space<vmem>>, vector<8x8xf32>,
      %c0_64 = arith.constant 0 : index
      %c2_65 = arith.constant 2 : index
      %112 = vector.load %arg6[%c0_64, %c2_65] : memref<8x4xf32, #tpu.memory_space<vmem>>, vector<8x1xf32>
      tpu.vector_store %arg6[%c0_64, %c2_65], %93 {strides = array<i32>} : memref<8x4xf32, #tpu.memory_space<vmem>>, vector<8x1xf32>,
      %c0_66 = arith.constant 0 : index
      %c24 = arith.constant 24 : index
      %113 = vector.load %arg3[%c0_66, %c24] : memref<8x96xbf16, #tpu.memory_space<vmem>>, vector<8x8xbf16>
      %c0_67 = arith.constant 0 : index
      %c56 = arith.constant 56 : index
      %114 = vector.load %arg4[%c0_67, %c56] : memref<8x96xbf16, #tpu.memory_space<vmem>>, vector<8x8xbf16>
      %c0_68 = arith.constant 0 : index
      %c88 = arith.constant 88 : index
      %115 = vector.load %arg4[%c0_68, %c88] : memref<8x96xbf16, #tpu.memory_space<vmem>>, vector<8x8xbf16>
      %cst_69 = arith.constant dense<0.000000e+00> : vector<8x8xf32>
      %116 = tpu.matmul %113, %114, %cst_69 {dimension_numbers = #tpu.dot_dimension_numbers<[1], [1], [0], [0], [0, 0, 1, 0], [], []>} : vector<8x8xbf16>, vector<8x8xbf16>, vector<8x8xf32> -> vector<8x8xf32>
      %cst_70 = arith.constant 0.353553385 : f32
      %117 = vector.broadcast %cst_70 : f32 to vector<8x8xf32>
      %118 = arith.mulf %116, %117 : vector<8x8xf32>
      %cst_71 = arith.constant -1.000000e+30 : f32
      %119 = vector.broadcast %cst_71 : f32 to vector<8x8xf32>
      %120 = arith.select %19, %118, %119 : vector<8x8xi1>, vector<8x8xf32>
      %c0_72 = arith.constant 0 : index
      %c3 = arith.constant 3 : index
      %121 = vector.load %arg6[%c0_72, %c3] : memref<8x4xf32, #tpu.memory_space<vmem>>, vector<8x1xf32>
      %cst_73 = arith.constant dense<0xFF800000> : vector<8xf32>
      %122 = vector.multi_reduction <maximumf>, %120, %cst_73 [1] : vector<8x8xf32> to vector<8xf32>
      %123 = vector.shape_cast %122 : vector<8xf32> to vector<8x1xf32>
      %124 = arith.maximumf %121, %123 : vector<8x1xf32>
      %125 = vector.broadcast %124 : vector<8x1xf32> to vector<8x8xf32>
      %126 = arith.subf %120, %125 : vector<8x8xf32>
      %127 = math.exp %126 : vector<8x8xf32>
      %128 = arith.subf %121, %124 : vector<8x1xf32>
      %129 = math.exp %128 : vector<8x1xf32>
      %c0_74 = arith.constant 0 : index
      %c3_75 = arith.constant 3 : index
      %130 = vector.load %arg7[%c0_74, %c3_75] : memref<8x4xf32, #tpu.memory_space<vmem>>, vector<8x1xf32>
      %131 = arith.mulf %129, %130 : vector<8x1xf32>
      %cst_76 = arith.constant dense<0.000000e+00> : vector<8xf32>
      %132 = vector.multi_reduction <add>, %127, %cst_76 [1] : vector<8x8xf32> to vector<8xf32>
      %133 = vector.shape_cast %132 : vector<8xf32> to vector<8x1xf32>
      %134 = arith.addf %131, %133 : vector<8x1xf32>
      %c0_77 = arith.constant 0 : index
      %c3_78 = arith.constant 3 : index
      %135 = vector.load %arg7[%c0_77, %c3_78] : memref<8x4xf32, #tpu.memory_space<vmem>>, vector<8x1xf32>
      tpu.vector_store %arg7[%c0_77, %c3_78], %134 {strides = array<i32>} : memref<8x4xf32, #tpu.memory_space<vmem>>, vector<8x1xf32>,
      %136 = arith.truncf %127 : vector<8x8xf32> to vector<8x8xbf16>
      %cst_79 = arith.constant dense<0.000000e+00> : vector<8x8xf32>
      %137 = tpu.matmul %136, %115, %cst_79 {dimension_numbers = #tpu.dot_dimension_numbers<[1], [0], [0], [1], [0, 0, 1, 1], [], []>} : vector<8x8xbf16>, vector<8x8xbf16>, vector<8x8xf32> -> vector<8x8xf32>
      %c0_80 = arith.constant 0 : index
      %c24_81 = arith.constant 24 : index
      %138 = vector.load %arg8[%c0_80, %c24_81] : memref<8x32xf32, #tpu.memory_space<vmem>>, vector<8x8xf32>
      %139 = vector.broadcast %129 : vector<8x1xf32> to vector<8x8xf32>
      %140 = arith.mulf %139, %138 : vector<8x8xf32>
      %141 = arith.addf %140, %137 : vector<8x8xf32>
      %c0_82 = arith.constant 0 : index
      %c24_83 = arith.constant 24 : index
      %142 = vector.load %arg8[%c0_82, %c24_83] : memref<8x32xf32, #tpu.memory_space<vmem>>, vector<8x8xf32>
      tpu.vector_store %arg8[%c0_82, %c24_83], %141 {strides = array<i32>} : memref<8x32xf32, #tpu.memory_space<vmem>>, vector<8x8xf32>,
      %c0_84 = arith.constant 0 : index
      %c3_85 = arith.constant 3 : index
      %143 = vector.load %arg6[%c0_84, %c3_85] : memref<8x4xf32, #tpu.memory_space<vmem>>, vector<8x1xf32>
      tpu.vector_store %arg6[%c0_84, %c3_85], %124 {strides = array<i32>} : memref<8x4xf32, #tpu.memory_space<vmem>>, vector<8x1xf32>,
    } else {
    }
    %c0_i32_4 = arith.constant 0 : i32
    %10 = arith.cmpi eq, %arg2, %c0_i32_4 : i32
    %11 = arith.extui %10 : i1 to i32
    %c0_i32_5 = arith.constant 0 : i32
    %12 = arith.cmpi ne, %11, %c0_i32_5 : i32
    scf.if %12 {
      %c0 = arith.constant 0 : index
      %c0_6 = arith.constant 0 : index
      %13 = vector.load %arg7[%c0, %c0_6] : memref<8x4xf32, #tpu.memory_space<vmem>>, vector<8x1xf32>
      %14 = tpu.reciprocal %13 {approx = true} : vector<8x1xf32> -> vector<8x1xf32>
      %c0_7 = arith.constant 0 : index
      %c0_8 = arith.constant 0 : index
      %15 = vector.load %arg8[%c0_7, %c0_8] : memref<8x32xf32, #tpu.memory_space<vmem>>, vector<8x8xf32>
      %16 = vector.broadcast %14 : vector<8x1xf32> to vector<8x8xf32>
      %17 = arith.mulf %15, %16 : vector<8x8xf32>
      %18 = arith.truncf %17 : vector<8x8xf32> to vector<8x8xbf16>
      %c0_9 = arith.constant 0 : index
      %c0_10 = arith.constant 0 : index
      %19 = vector.load %arg5[%c0_9, %c0_10] : memref<8x32xbf16, #tpu.memory_space<vmem>>, vector<8x8xbf16>
      tpu.vector_store %arg5[%c0_9, %c0_10], %18 {strides = array<i32>} : memref<8x32xbf16, #tpu.memory_space<vmem>>, vector<8x8xbf16>,
      %c0_11 = arith.constant 0 : index
      %c1 = arith.constant 1 : index
      %20 = vector.load %arg7[%c0_11, %c1] : memref<8x4xf32, #tpu.memory_space<vmem>>, vector<8x1xf32>
      %21 = tpu.reciprocal %20 {approx = true} : vector<8x1xf32> -> vector<8x1xf32>
      %c0_12 = arith.constant 0 : index
      %c8 = arith.constant 8 : index
      %22 = vector.load %arg8[%c0_12, %c8] : memref<8x32xf32, #tpu.memory_space<vmem>>, vector<8x8xf32>
      %23 = vector.broadcast %21 : vector<8x1xf32> to vector<8x8xf32>
      %24 = arith.mulf %22, %23 : vector<8x8xf32>
      %25 = arith.truncf %24 : vector<8x8xf32> to vector<8x8xbf16>
      %c0_13 = arith.constant 0 : index
      %c8_14 = arith.constant 8 : index
      %26 = vector.load %arg5[%c0_13, %c8_14] : memref<8x32xbf16, #tpu.memory_space<vmem>>, vector<8x8xbf16>
      tpu.vector_store %arg5[%c0_13, %c8_14], %25 {strides = array<i32>} : memref<8x32xbf16, #tpu.memory_space<vmem>>, vector<8x8xbf16>,
      %c0_15 = arith.constant 0 : index
      %c2 = arith.constant 2 : index
      %27 = vector.load %arg7[%c0_15, %c2] : memref<8x4xf32, #tpu.memory_space<vmem>>, vector<8x1xf32>
      %28 = tpu.reciprocal %27 {approx = true} : vector<8x1xf32> -> vector<8x1xf32>
      %c0_16 = arith.constant 0 : index
      %c16 = arith.constant 16 : index
      %29 = vector.load %arg8[%c0_16, %c16] : memref<8x32xf32, #tpu.memory_space<vmem>>, vector<8x8xf32>
      %30 = vector.broadcast %28 : vector<8x1xf32> to vector<8x8xf32>
      %31 = arith.mulf %29, %30 : vector<8x8xf32>
      %32 = arith.truncf %31 : vector<8x8xf32> to vector<8x8xbf16>
      %c0_17 = arith.constant 0 : index
      %c16_18 = arith.constant 16 : index
      %33 = vector.load %arg5[%c0_17, %c16_18] : memref<8x32xbf16, #tpu.memory_space<vmem>>, vector<8x8xbf16>
      tpu.vector_store %arg5[%c0_17, %c16_18], %32 {strides = array<i32>} : memref<8x32xbf16, #tpu.memory_space<vmem>>, vector<8x8xbf16>,
      %c0_19 = arith.constant 0 : index
      %c3 = arith.constant 3 : index
      %34 = vector.load %arg7[%c0_19, %c3] : memref<8x4xf32, #tpu.memory_space<vmem>>, vector<8x1xf32>
      %35 = tpu.reciprocal %34 {approx = true} : vector<8x1xf32> -> vector<8x1xf32>
      %c0_20 = arith.constant 0 : index
      %c24 = arith.constant 24 : index
      %36 = vector.load %arg8[%c0_20, %c24] : memref<8x32xf32, #tpu.memory_space<vmem>>, vector<8x8xf32>
      %37 = vector.broadcast %35 : vector<8x1xf32> to vector<8x8xf32>
      %38 = arith.mulf %36, %37 : vector<8x8xf32>
      %39 = arith.truncf %38 : vector<8x8xf32> to vector<8x8xbf16>
      %c0_21 = arith.constant 0 : index
      %c24_22 = arith.constant 24 : index
      %40 = vector.load %arg5[%c0_21, %c24_22] : memref<8x32xbf16, #tpu.memory_space<vmem>>, vector<8x8xbf16>
      tpu.vector_store %arg5[%c0_21, %c24_22], %39 {strides = array<i32>} : memref<8x32xbf16, #tpu.memory_space<vmem>>, vector<8x8xbf16>,
    } else {
    }
    return
  }
  func.func @transform_0(%arg0: i32, %arg1: i32, %arg2: i32) -> (i32, i32) {
    %c1_i32 = arith.constant 1 : i32
    %0 = arith.muli %arg0, %c1_i32 : i32
    %1 = arith.addi %0, %arg1 : i32
    %c0_i32 = arith.constant 0 : i32
    %c0_i32_0 = arith.constant 0 : i32
    return %1, %c0_i32 : i32, i32
  }
  func.func @transform_1(%arg0: i32, %arg1: i32, %arg2: i32) -> (i32, i32) {
    %c1_i32 = arith.constant 1 : i32
    %0 = arith.muli %arg0, %c1_i32 : i32
    %1 = arith.addi %0, %arg2 : i32
    %c0_i32 = arith.constant 0 : i32
    %c0_i32_0 = arith.constant 0 : i32
    return %1, %c0_i32 : i32, i32
  }
  func.func @transform_2(%arg0: i32, %arg1: i32, %arg2: i32) -> (i32, i32) {
    %c1_i32 = arith.constant 1 : i32
    %0 = arith.muli %arg0, %c1_i32 : i32
    %1 = arith.addi %0, %arg1 : i32
    %c0_i32 = arith.constant 0 : i32
    %c0_i32_0 = arith.constant 0 : i32
    return %1, %c0_i32 : i32, i32
  }
}

module attributes {stable_mosaic.version = 11 : i64} {
  func.func @_ln_lora_swiglu_kernel(%arg0: i32, %arg1: i32, %arg2: memref<16x32xbf16, #tpu.memory_space<vmem>>, %arg3: memref<1x32xf32, #tpu.memory_space<vmem>>, %arg4: memref<1x32xf32, #tpu.memory_space<vmem>>, %arg5: memref<32x96xbf16, #tpu.memory_space<vmem>>, %arg6: memref<32x96xbf16, #tpu.memory_space<vmem>>, %arg7: memref<32x8xbf16, #tpu.memory_space<vmem>>, %arg8: memref<8x96xbf16, #tpu.memory_space<vmem>>, %arg9: memref<8x96xbf16, #tpu.memory_space<vmem>>, %arg10: memref<16x96xbf16, #tpu.memory_space<vmem>>, %arg11: memref<16x32xbf16, #tpu.memory_space<vmem>>, %arg12: memref<16x8xbf16, #tpu.memory_space<vmem>>) attributes {dimension_semantics = [#tpu.dimension_semantics<parallel>, #tpu.dimension_semantics<arbitrary>], iteration_bounds = array<i64: 1, 1>, scalar_prefetch = 0 : i64, scratch_operands = 2 : i64, tpu.core_type = #tpu.core_type<tc>, window_params = [{transform_indices = @transform_0, window_bounds = array<i64: 16, 32>}, {pipeline_mode = #tpu.pipeline_mode<synchronous>, transform_indices = @transform_1, window_bounds = array<i64: 1, 32>}, {pipeline_mode = #tpu.pipeline_mode<synchronous>, transform_indices = @transform_2, window_bounds = array<i64: 1, 32>}, {transform_indices = @transform_3, window_bounds = array<i64: 32, 96>}, {transform_indices = @transform_4, window_bounds = array<i64: 32, 96>}, {pipeline_mode = #tpu.pipeline_mode<synchronous>, transform_indices = @transform_5, window_bounds = array<i64: 32, 8>}, {transform_indices = @transform_6, window_bounds = array<i64: 8, 96>}, {transform_indices = @transform_7, window_bounds = array<i64: 8, 96>}, {transform_indices = @transform_8, window_bounds = array<i64: 16, 96>}]} {
    %c0_i32 = arith.constant 0 : i32
    %0 = arith.cmpi eq, %arg1, %c0_i32 : i32
    %1 = arith.extui %0 : i1 to i32
    %c0_i32_0 = arith.constant 0 : i32
    %2 = arith.cmpi ne, %1, %c0_i32_0 : i32
    scf.if %2 {
      %c0_18 = arith.constant 0 : index
      %c0_19 = arith.constant 0 : index
      %24 = vector.load %arg2[%c0_18, %c0_19] : memref<16x32xbf16, #tpu.memory_space<vmem>>, vector<16x32xbf16>
      %25 = arith.extf %24 : vector<16x32xbf16> to vector<16x32xf32>
      %cst_20 = arith.constant dense<0.000000e+00> : vector<16xf32>
      %26 = vector.multi_reduction <add>, %25, %cst_20 [1] : vector<16x32xf32> to vector<16xf32>
      %27 = vector.shape_cast %26 : vector<16xf32> to vector<16x1xf32>
      %cst_21 = arith.constant 3.200000e+01 : f32
      %28 = vector.broadcast %cst_21 : f32 to vector<16x1xf32>
      %29 = arith.divf %27, %28 : vector<16x1xf32>
      %30 = arith.mulf %25, %25 : vector<16x32xf32>
      %cst_22 = arith.constant dense<0.000000e+00> : vector<16xf32>
      %31 = vector.multi_reduction <add>, %30, %cst_22 [1] : vector<16x32xf32> to vector<16xf32>
      %32 = vector.shape_cast %31 : vector<16xf32> to vector<16x1xf32>
      %cst_23 = arith.constant 3.200000e+01 : f32
      %33 = vector.broadcast %cst_23 : f32 to vector<16x1xf32>
      %34 = arith.divf %32, %33 : vector<16x1xf32>
      %35 = arith.mulf %29, %29 : vector<16x1xf32>
      %36 = arith.subf %34, %35 : vector<16x1xf32>
      %37 = vector.broadcast %29 : vector<16x1xf32> to vector<16x32xf32>
      %38 = arith.subf %25, %37 : vector<16x32xf32>
      %cst_24 = arith.constant 9.99999974E-6 : f32
      %39 = vector.broadcast %cst_24 : f32 to vector<16x1xf32>
      %40 = arith.addf %36, %39 : vector<16x1xf32>
      %41 = math.rsqrt %40 : vector<16x1xf32>
      %42 = vector.broadcast %41 : vector<16x1xf32> to vector<16x32xf32>
      %43 = arith.mulf %38, %42 : vector<16x32xf32>
      %c0_25 = arith.constant 0 : index
      %c0_26 = arith.constant 0 : index
      %44 = vector.load %arg3[%c0_25, %c0_26] : memref<1x32xf32, #tpu.memory_space<vmem>>, vector<1x32xf32>
      %45 = vector.broadcast %44 : vector<1x32xf32> to vector<16x32xf32>
      %46 = arith.mulf %43, %45 : vector<16x32xf32>
      %c0_27 = arith.constant 0 : index
      %c0_28 = arith.constant 0 : index
      %47 = vector.load %arg4[%c0_27, %c0_28] : memref<1x32xf32, #tpu.memory_space<vmem>>, vector<1x32xf32>
      %48 = vector.broadcast %47 : vector<1x32xf32> to vector<16x32xf32>
      %49 = arith.addf %46, %48 : vector<16x32xf32>
      %50 = arith.truncf %49 : vector<16x32xf32> to vector<16x32xbf16>
      %c0_29 = arith.constant 0 : index
      %c0_30 = arith.constant 0 : index
      %51 = vector.load %arg11[%c0_29, %c0_30] : memref<16x32xbf16, #tpu.memory_space<vmem>>, vector<16x32xbf16>
      tpu.vector_store %arg11[%c0_29, %c0_30], %50 {strides = array<i32>} : memref<16x32xbf16, #tpu.memory_space<vmem>>, vector<16x32xbf16>,
      %c0_31 = arith.constant 0 : index
      %c0_32 = arith.constant 0 : index
      %52 = vector.load %arg11[%c0_31, %c0_32] : memref<16x32xbf16, #tpu.memory_space<vmem>>, vector<16x32xbf16>
      %c0_33 = arith.constant 0 : index
      %c0_34 = arith.constant 0 : index
      %53 = vector.load %arg7[%c0_33, %c0_34] : memref<32x8xbf16, #tpu.memory_space<vmem>>, vector<32x8xbf16>
      %cst_35 = arith.constant dense<0.000000e+00> : vector<16x8xf32>
      %54 = tpu.matmul %52, %53, %cst_35 {dimension_numbers = #tpu.dot_dimension_numbers<[1], [0], [0], [1], [0, 0, 1, 1], [], []>} : vector<16x32xbf16>, vector<32x8xbf16>, vector<16x8xf32> -> vector<16x8xf32>
      %55 = arith.truncf %54 : vector<16x8xf32> to vector<16x8xbf16>
      %c0_36 = arith.constant 0 : index
      %c0_37 = arith.constant 0 : index
      %56 = vector.load %arg12[%c0_36, %c0_37] : memref<16x8xbf16, #tpu.memory_space<vmem>>, vector<16x8xbf16>
      tpu.vector_store %arg12[%c0_36, %c0_37], %55 {strides = array<i32>} : memref<16x8xbf16, #tpu.memory_space<vmem>>, vector<16x8xbf16>,
    } else {
    }
    %c0 = arith.constant 0 : index
    %c0_1 = arith.constant 0 : index
    %3 = vector.load %arg11[%c0, %c0_1] : memref<16x32xbf16, #tpu.memory_space<vmem>>, vector<16x32xbf16>
    %c0_2 = arith.constant 0 : index
    %c0_3 = arith.constant 0 : index
    %4 = vector.load %arg12[%c0_2, %c0_3] : memref<16x8xbf16, #tpu.memory_space<vmem>>, vector<16x8xbf16>
    %c0_4 = arith.constant 0 : index
    %c0_5 = arith.constant 0 : index
    %5 = vector.load %arg5[%c0_4, %c0_5] : memref<32x96xbf16, #tpu.memory_space<vmem>>, vector<32x96xbf16>
    %cst = arith.constant dense<0.000000e+00> : vector<16x96xf32>
    %6 = tpu.matmul %3, %5, %cst {dimension_numbers = #tpu.dot_dimension_numbers<[1], [0], [0], [1], [0, 0, 1, 1], [], []>} : vector<16x32xbf16>, vector<32x96xbf16>, vector<16x96xf32> -> vector<16x96xf32>
    %c0_6 = arith.constant 0 : index
    %c0_7 = arith.constant 0 : index
    %7 = vector.load %arg8[%c0_6, %c0_7] : memref<8x96xbf16, #tpu.memory_space<vmem>>, vector<8x96xbf16>
    %cst_8 = arith.constant dense<0.000000e+00> : vector<16x96xf32>
    %8 = tpu.matmul %4, %7, %cst_8 {dimension_numbers = #tpu.dot_dimension_numbers<[1], [0], [0], [1], [0, 0, 1, 1], [], []>} : vector<16x8xbf16>, vector<8x96xbf16>, vector<16x96xf32> -> vector<16x96xf32>
    %9 = arith.addf %6, %8 : vector<16x96xf32>
    %c0_9 = arith.constant 0 : index
    %c0_10 = arith.constant 0 : index
    %10 = vector.load %arg6[%c0_9, %c0_10] : memref<32x96xbf16, #tpu.memory_space<vmem>>, vector<32x96xbf16>
    %cst_11 = arith.constant dense<0.000000e+00> : vector<16x96xf32>
    %11 = tpu.matmul %3, %10, %cst_11 {dimension_numbers = #tpu.dot_dimension_numbers<[1], [0], [0], [1], [0, 0, 1, 1], [], []>} : vector<16x32xbf16>, vector<32x96xbf16>, vector<16x96xf32> -> vector<16x96xf32>
    %c0_12 = arith.constant 0 : index
    %c0_13 = arith.constant 0 : index
    %12 = vector.load %arg9[%c0_12, %c0_13] : memref<8x96xbf16, #tpu.memory_space<vmem>>, vector<8x96xbf16>
    %cst_14 = arith.constant dense<0.000000e+00> : vector<16x96xf32>
    %13 = tpu.matmul %4, %12, %cst_14 {dimension_numbers = #tpu.dot_dimension_numbers<[1], [0], [0], [1], [0, 0, 1, 1], [], []>} : vector<16x8xbf16>, vector<8x96xbf16>, vector<16x96xf32> -> vector<16x96xf32>
    %14 = arith.addf %11, %13 : vector<16x96xf32>
    %15 = arith.negf %9 : vector<16x96xf32>
    %16 = math.exp %15 : vector<16x96xf32>
    %cst_15 = arith.constant 1.000000e+00 : f32
    %17 = vector.broadcast %cst_15 : f32 to vector<16x96xf32>
    %18 = arith.addf %17, %16 : vector<16x96xf32>
    %19 = arith.divf %17, %18 : vector<16x96xf32>
    %20 = arith.mulf %9, %19 : vector<16x96xf32>
    %21 = arith.mulf %20, %14 : vector<16x96xf32>
    %22 = arith.truncf %21 : vector<16x96xf32> to vector<16x96xbf16>
    %c0_16 = arith.constant 0 : index
    %c0_17 = arith.constant 0 : index
    %23 = vector.load %arg10[%c0_16, %c0_17] : memref<16x96xbf16, #tpu.memory_space<vmem>>, vector<16x96xbf16>
    tpu.vector_store %arg10[%c0_16, %c0_17], %22 {strides = array<i32>} : memref<16x96xbf16, #tpu.memory_space<vmem>>, vector<16x96xbf16>,
    return
  }
  func.func @transform_0(%arg0: i32, %arg1: i32) -> (i32, i32) {
    %c0_i32 = arith.constant 0 : i32
    %c0_i32_0 = arith.constant 0 : i32
    return %arg0, %c0_i32 : i32, i32
  }
  func.func @transform_1(%arg0: i32, %arg1: i32) -> (i32, i32) {
    %c0_i32 = arith.constant 0 : i32
    %c0_i32_0 = arith.constant 0 : i32
    %c0_i32_1 = arith.constant 0 : i32
    return %c0_i32, %c0_i32_0 : i32, i32
  }
  func.func @transform_2(%arg0: i32, %arg1: i32) -> (i32, i32) {
    %c0_i32 = arith.constant 0 : i32
    %c0_i32_0 = arith.constant 0 : i32
    %c0_i32_1 = arith.constant 0 : i32
    return %c0_i32, %c0_i32_0 : i32, i32
  }
  func.func @transform_3(%arg0: i32, %arg1: i32) -> (i32, i32) {
    %c0_i32 = arith.constant 0 : i32
    %c0_i32_0 = arith.constant 0 : i32
    return %c0_i32, %arg1 : i32, i32
  }
  func.func @transform_4(%arg0: i32, %arg1: i32) -> (i32, i32) {
    %c0_i32 = arith.constant 0 : i32
    %c0_i32_0 = arith.constant 0 : i32
    return %c0_i32, %arg1 : i32, i32
  }
  func.func @transform_5(%arg0: i32, %arg1: i32) -> (i32, i32) {
    %c0_i32 = arith.constant 0 : i32
    %c0_i32_0 = arith.constant 0 : i32
    %c0_i32_1 = arith.constant 0 : i32
    return %c0_i32, %c0_i32_0 : i32, i32
  }
  func.func @transform_6(%arg0: i32, %arg1: i32) -> (i32, i32) {
    %c0_i32 = arith.constant 0 : i32
    %c0_i32_0 = arith.constant 0 : i32
    return %c0_i32, %arg1 : i32, i32
  }
  func.func @transform_7(%arg0: i32, %arg1: i32) -> (i32, i32) {
    %c0_i32 = arith.constant 0 : i32
    %c0_i32_0 = arith.constant 0 : i32
    return %c0_i32, %arg1 : i32, i32
  }
  func.func @transform_8(%arg0: i32, %arg1: i32) -> (i32, i32) {
    %c0_i32 = arith.constant 0 : i32
    return %arg0, %arg1 : i32, i32
  }
}

module attributes {stable_mosaic.version = 11 : i64} {
  func.func @_lora_residual_kernel(%arg0: i32, %arg1: i32, %arg2: memref<16x96xbf16, #tpu.memory_space<vmem>>, %arg3: memref<16x32xbf16, #tpu.memory_space<vmem>>, %arg4: memref<1x32xf32, #tpu.memory_space<vmem>>, %arg5: memref<96x32xbf16, #tpu.memory_space<vmem>>, %arg6: memref<96x8xbf16, #tpu.memory_space<vmem>>, %arg7: memref<8x32xbf16, #tpu.memory_space<vmem>>, %arg8: memref<16x32xbf16, #tpu.memory_space<vmem>>, %arg9: memref<16x8xbf16, #tpu.memory_space<vmem>>) attributes {dimension_semantics = [#tpu.dimension_semantics<parallel>, #tpu.dimension_semantics<arbitrary>], iteration_bounds = array<i64: 1, 1>, scalar_prefetch = 0 : i64, scratch_operands = 1 : i64, tpu.core_type = #tpu.core_type<tc>, window_params = [{transform_indices = @transform_0, window_bounds = array<i64: 16, 96>}, {transform_indices = @transform_1, window_bounds = array<i64: 16, 32>}, {transform_indices = @transform_2, window_bounds = array<i64: 1, 32>}, {transform_indices = @transform_3, window_bounds = array<i64: 96, 32>}, {pipeline_mode = #tpu.pipeline_mode<synchronous>, transform_indices = @transform_4, window_bounds = array<i64: 96, 8>}, {transform_indices = @transform_5, window_bounds = array<i64: 8, 32>}, {transform_indices = @transform_6, window_bounds = array<i64: 16, 32>}]} {
    %c0_i32 = arith.constant 0 : i32
    %0 = arith.cmpi eq, %arg1, %c0_i32 : i32
    %1 = arith.extui %0 : i1 to i32
    %c0_i32_0 = arith.constant 0 : i32
    %2 = arith.cmpi ne, %1, %c0_i32_0 : i32
    scf.if %2 {
      %c0_15 = arith.constant 0 : index
      %c0_16 = arith.constant 0 : index
      %18 = vector.load %arg2[%c0_15, %c0_16] : memref<16x96xbf16, #tpu.memory_space<vmem>>, vector<16x96xbf16>
      %c0_17 = arith.constant 0 : index
      %c0_18 = arith.constant 0 : index
      %19 = vector.load %arg6[%c0_17, %c0_18] : memref<96x8xbf16, #tpu.memory_space<vmem>>, vector<96x8xbf16>
      %cst_19 = arith.constant dense<0.000000e+00> : vector<16x8xf32>
      %20 = tpu.matmul %18, %19, %cst_19 {dimension_numbers = #tpu.dot_dimension_numbers<[1], [0], [0], [1], [0, 0, 1, 1], [], []>} : vector<16x96xbf16>, vector<96x8xbf16>, vector<16x8xf32> -> vector<16x8xf32>
      %21 = arith.truncf %20 : vector<16x8xf32> to vector<16x8xbf16>
      %c0_20 = arith.constant 0 : index
      %c0_21 = arith.constant 0 : index
      %22 = vector.load %arg9[%c0_20, %c0_21] : memref<16x8xbf16, #tpu.memory_space<vmem>>, vector<16x8xbf16>
      tpu.vector_store %arg9[%c0_20, %c0_21], %21 {strides = array<i32>} : memref<16x8xbf16, #tpu.memory_space<vmem>>, vector<16x8xbf16>,
    } else {
    }
    %c0 = arith.constant 0 : index
    %c0_1 = arith.constant 0 : index
    %3 = vector.load %arg2[%c0, %c0_1] : memref<16x96xbf16, #tpu.memory_space<vmem>>, vector<16x96xbf16>
    %c0_2 = arith.constant 0 : index
    %c0_3 = arith.constant 0 : index
    %4 = vector.load %arg5[%c0_2, %c0_3] : memref<96x32xbf16, #tpu.memory_space<vmem>>, vector<96x32xbf16>
    %cst = arith.constant dense<0.000000e+00> : vector<16x32xf32>
    %5 = tpu.matmul %3, %4, %cst {dimension_numbers = #tpu.dot_dimension_numbers<[1], [0], [0], [1], [0, 0, 1, 1], [], []>} : vector<16x96xbf16>, vector<96x32xbf16>, vector<16x32xf32> -> vector<16x32xf32>
    %c0_4 = arith.constant 0 : index
    %c0_5 = arith.constant 0 : index
    %6 = vector.load %arg9[%c0_4, %c0_5] : memref<16x8xbf16, #tpu.memory_space<vmem>>, vector<16x8xbf16>
    %c0_6 = arith.constant 0 : index
    %c0_7 = arith.constant 0 : index
    %7 = vector.load %arg7[%c0_6, %c0_7] : memref<8x32xbf16, #tpu.memory_space<vmem>>, vector<8x32xbf16>
    %cst_8 = arith.constant dense<0.000000e+00> : vector<16x32xf32>
    %8 = tpu.matmul %6, %7, %cst_8 {dimension_numbers = #tpu.dot_dimension_numbers<[1], [0], [0], [1], [0, 0, 1, 1], [], []>} : vector<16x8xbf16>, vector<8x32xbf16>, vector<16x32xf32> -> vector<16x32xf32>
    %9 = arith.addf %5, %8 : vector<16x32xf32>
    %c0_9 = arith.constant 0 : index
    %c0_10 = arith.constant 0 : index
    %10 = vector.load %arg3[%c0_9, %c0_10] : memref<16x32xbf16, #tpu.memory_space<vmem>>, vector<16x32xbf16>
    %11 = arith.extf %10 : vector<16x32xbf16> to vector<16x32xf32>
    %c0_11 = arith.constant 0 : index
    %c0_12 = arith.constant 0 : index
    %12 = vector.load %arg4[%c0_11, %c0_12] : memref<1x32xf32, #tpu.memory_space<vmem>>, vector<1x32xf32>
    %13 = vector.broadcast %12 : vector<1x32xf32> to vector<16x32xf32>
    %14 = arith.mulf %13, %9 : vector<16x32xf32>
    %15 = arith.addf %11, %14 : vector<16x32xf32>
    %16 = arith.truncf %15 : vector<16x32xf32> to vector<16x32xbf16>
    %c0_13 = arith.constant 0 : index
    %c0_14 = arith.constant 0 : index
    %17 = vector.load %arg8[%c0_13, %c0_14] : memref<16x32xbf16, #tpu.memory_space<vmem>>, vector<16x32xbf16>
    tpu.vector_store %arg8[%c0_13, %c0_14], %16 {strides = array<i32>} : memref<16x32xbf16, #tpu.memory_space<vmem>>, vector<16x32xbf16>,
    return
  }
  func.func @transform_0(%arg0: i32, %arg1: i32) -> (i32, i32) {
    %c0_i32 = arith.constant 0 : i32
    %c0_i32_0 = arith.constant 0 : i32
    return %arg0, %c0_i32 : i32, i32
  }
  func.func @transform_1(%arg0: i32, %arg1: i32) -> (i32, i32) {
    %c0_i32 = arith.constant 0 : i32
    return %arg0, %arg1 : i32, i32
  }
  func.func @transform_2(%arg0: i32, %arg1: i32) -> (i32, i32) {
    %c0_i32 = arith.constant 0 : i32
    %c0_i32_0 = arith.constant 0 : i32
    return %c0_i32, %arg1 : i32, i32
  }
  func.func @transform_3(%arg0: i32, %arg1: i32) -> (i32, i32) {
    %c0_i32 = arith.constant 0 : i32
    %c0_i32_0 = arith.constant 0 : i32
    return %c0_i32, %arg1 : i32, i32
  }
  func.func @transform_4(%arg0: i32, %arg1: i32) -> (i32, i32) {
    %c0_i32 = arith.constant 0 : i32
    %c0_i32_0 = arith.constant 0 : i32
    %c0_i32_1 = arith.constant 0 : i32
    return %c0_i32, %c0_i32_0 : i32, i32
  }
  func.func @transform_5(%arg0: i32, %arg1: i32) -> (i32, i32) {
    %c0_i32 = arith.constant 0 : i32
    %c0_i32_0 = arith.constant 0 : i32
    return %c0_i32, %arg1 : i32, i32
  }
  func.func @transform_6(%arg0: i32, %arg1: i32) -> (i32, i32) {
    %c0_i32 = arith.constant 0 : i32
    return %arg0, %arg1 : i32, i32
  }
}

module attributes {stable_mosaic.version = 11 : i64} {
  func.func @_ln_head_kernel(%arg0: i32, %arg1: i32, %arg2: memref<16x32xbf16, #tpu.memory_space<vmem>>, %arg3: memref<1x32xf32, #tpu.memory_space<vmem>>, %arg4: memref<1x32xf32, #tpu.memory_space<vmem>>, %arg5: memref<64x32xbf16, #tpu.memory_space<vmem>>, %arg6: memref<16x64xf32, #tpu.memory_space<vmem>>, %arg7: memref<16x32xbf16, #tpu.memory_space<vmem>>) attributes {dimension_semantics = [#tpu.dimension_semantics<parallel>, #tpu.dimension_semantics<arbitrary>], iteration_bounds = array<i64: 1, 1>, scalar_prefetch = 0 : i64, scratch_operands = 1 : i64, tpu.core_type = #tpu.core_type<tc>, window_params = [{transform_indices = @transform_0, window_bounds = array<i64: 16, 32>}, {pipeline_mode = #tpu.pipeline_mode<synchronous>, transform_indices = @transform_1, window_bounds = array<i64: 1, 32>}, {pipeline_mode = #tpu.pipeline_mode<synchronous>, transform_indices = @transform_2, window_bounds = array<i64: 1, 32>}, {transform_indices = @transform_3, window_bounds = array<i64: 64, 32>}, {transform_indices = @transform_4, window_bounds = array<i64: 16, 64>}]} {
    %c0_i32 = arith.constant 0 : i32
    %0 = arith.cmpi eq, %arg1, %c0_i32 : i32
    %1 = arith.extui %0 : i1 to i32
    %c0_i32_0 = arith.constant 0 : i32
    %2 = arith.cmpi ne, %1, %c0_i32_0 : i32
    scf.if %2 {
      %c0_6 = arith.constant 0 : index
      %c0_7 = arith.constant 0 : index
      %7 = vector.load %arg2[%c0_6, %c0_7] : memref<16x32xbf16, #tpu.memory_space<vmem>>, vector<16x32xbf16>
      %8 = arith.extf %7 : vector<16x32xbf16> to vector<16x32xf32>
      %cst_8 = arith.constant dense<0.000000e+00> : vector<16xf32>
      %9 = vector.multi_reduction <add>, %8, %cst_8 [1] : vector<16x32xf32> to vector<16xf32>
      %10 = vector.shape_cast %9 : vector<16xf32> to vector<16x1xf32>
      %cst_9 = arith.constant 3.200000e+01 : f32
      %11 = vector.broadcast %cst_9 : f32 to vector<16x1xf32>
      %12 = arith.divf %10, %11 : vector<16x1xf32>
      %13 = arith.mulf %8, %8 : vector<16x32xf32>
      %cst_10 = arith.constant dense<0.000000e+00> : vector<16xf32>
      %14 = vector.multi_reduction <add>, %13, %cst_10 [1] : vector<16x32xf32> to vector<16xf32>
      %15 = vector.shape_cast %14 : vector<16xf32> to vector<16x1xf32>
      %cst_11 = arith.constant 3.200000e+01 : f32
      %16 = vector.broadcast %cst_11 : f32 to vector<16x1xf32>
      %17 = arith.divf %15, %16 : vector<16x1xf32>
      %18 = arith.mulf %12, %12 : vector<16x1xf32>
      %19 = arith.subf %17, %18 : vector<16x1xf32>
      %20 = vector.broadcast %12 : vector<16x1xf32> to vector<16x32xf32>
      %21 = arith.subf %8, %20 : vector<16x32xf32>
      %cst_12 = arith.constant 9.99999974E-6 : f32
      %22 = vector.broadcast %cst_12 : f32 to vector<16x1xf32>
      %23 = arith.addf %19, %22 : vector<16x1xf32>
      %24 = math.rsqrt %23 : vector<16x1xf32>
      %25 = vector.broadcast %24 : vector<16x1xf32> to vector<16x32xf32>
      %26 = arith.mulf %21, %25 : vector<16x32xf32>
      %c0_13 = arith.constant 0 : index
      %c0_14 = arith.constant 0 : index
      %27 = vector.load %arg3[%c0_13, %c0_14] : memref<1x32xf32, #tpu.memory_space<vmem>>, vector<1x32xf32>
      %28 = vector.broadcast %27 : vector<1x32xf32> to vector<16x32xf32>
      %29 = arith.mulf %26, %28 : vector<16x32xf32>
      %c0_15 = arith.constant 0 : index
      %c0_16 = arith.constant 0 : index
      %30 = vector.load %arg4[%c0_15, %c0_16] : memref<1x32xf32, #tpu.memory_space<vmem>>, vector<1x32xf32>
      %31 = vector.broadcast %30 : vector<1x32xf32> to vector<16x32xf32>
      %32 = arith.addf %29, %31 : vector<16x32xf32>
      %33 = arith.truncf %32 : vector<16x32xf32> to vector<16x32xbf16>
      %c0_17 = arith.constant 0 : index
      %c0_18 = arith.constant 0 : index
      %34 = vector.load %arg7[%c0_17, %c0_18] : memref<16x32xbf16, #tpu.memory_space<vmem>>, vector<16x32xbf16>
      tpu.vector_store %arg7[%c0_17, %c0_18], %33 {strides = array<i32>} : memref<16x32xbf16, #tpu.memory_space<vmem>>, vector<16x32xbf16>,
    } else {
    }
    %c0 = arith.constant 0 : index
    %c0_1 = arith.constant 0 : index
    %3 = vector.load %arg7[%c0, %c0_1] : memref<16x32xbf16, #tpu.memory_space<vmem>>, vector<16x32xbf16>
    %c0_2 = arith.constant 0 : index
    %c0_3 = arith.constant 0 : index
    %4 = vector.load %arg5[%c0_2, %c0_3] : memref<64x32xbf16, #tpu.memory_space<vmem>>, vector<64x32xbf16>
    %cst = arith.constant dense<0.000000e+00> : vector<16x64xf32>
    %5 = tpu.matmul %3, %4, %cst {dimension_numbers = #tpu.dot_dimension_numbers<[1], [1], [0], [0], [0, 0, 1, 0], [], []>} : vector<16x32xbf16>, vector<64x32xbf16>, vector<16x64xf32> -> vector<16x64xf32>
    %c0_4 = arith.constant 0 : index
    %c0_5 = arith.constant 0 : index
    %6 = vector.load %arg6[%c0_4, %c0_5] : memref<16x64xf32, #tpu.memory_space<vmem>>, vector<16x64xf32>
    tpu.vector_store %arg6[%c0_4, %c0_5], %5 {strides = array<i32>} : memref<16x64xf32, #tpu.memory_space<vmem>>, vector<16x64xf32>,
    return
  }
  func.func @transform_0(%arg0: i32, %arg1: i32) -> (i32, i32) {
    %c0_i32 = arith.constant 0 : i32
    %c0_i32_0 = arith.constant 0 : i32
    return %arg0, %c0_i32 : i32, i32
  }
  func.func @transform_1(%arg0: i32, %arg1: i32) -> (i32, i32) {
    %c0_i32 = arith.constant 0 : i32
    %c0_i32_0 = arith.constant 0 : i32
    %c0_i32_1 = arith.constant 0 : i32
    return %c0_i32, %c0_i32_0 : i32, i32
  }
  func.func @transform_2(%arg0: i32, %arg1: i32) -> (i32, i32) {
    %c0_i32 = arith.constant 0 : i32
    %c0_i32_0 = arith.constant 0 : i32
    %c0_i32_1 = arith.constant 0 : i32
    return %c0_i32, %c0_i32_0 : i32, i32
  }
  func.func @transform_3(%arg0: i32, %arg1: i32) -> (i32, i32) {
    %c0_i32 = arith.constant 0 : i32
    %c0_i32_0 = arith.constant 0 : i32
    return %arg1, %c0_i32 : i32, i32
  }
  func.func @transform_4(%arg0: i32, %arg1: i32) -> (i32, i32) {
    %c0_i32 = arith.constant 0 : i32
    return %arg0, %arg1 : i32, i32
  }
}

</mosaic_0001>

<llo_original>
// kernel: _lambda_.13
$region0: #{_lambda_.13}
  #allocation0 [shape = 'u32[]', space=smem, size = 0x4, offset = 0x4, fixed_abs, tag = 'smem constant byte address 0x4 - core index']
  #allocation1 [shape = 'u32[144,128]{1,0:T(1,128)}', space=vmem, size = 0x12000, scoped, tag = 'internal scratch']
  #allocation2 [shape = 'bf16[16,8]{1,0:T(8,128)(2,1)}', space=vmem, size = 0x1000, scoped, tag = 'scratch operand']
  %s0 = inlined_call_operand.vmem [shape: bf16[16,32], index: 0, kind: input, shape index: {}]
  %s1 = inlined_call_operand.vmem [shape: bf16[16,32], index: 1, kind: input, shape index: {}]
  %s2 = inlined_call_operand.vmem [shape: f32[1,32], index: 2, kind: input, shape index: {}]
  %s3 = inlined_call_operand.vmem [shape: bf16[32,32], index: 3, kind: input, shape index: {}]
  %s4 = inlined_call_operand.vmem [shape: bf16[32,8], index: 4, kind: input, shape index: {}]
  %s5 = inlined_call_operand.vmem [shape: bf16[8,32], index: 5, kind: input, shape index: {}]
  %s6 = inlined_call_operand.vmem [shape: bf16[16,32], index: 6, kind: output, shape index: {}]
  %s7 = sld [smem:[#allocation0]]
  $region38: #{_lambda_.13} parent=0
    _
  %s9 = ssub.s32 1, %s7
  %s10 = scalar_select 0, %s9, %s7
  // Predicated region
  $region2: #{_lambda_.13} parent=0 // pred_check
    _
  $region3: #{_lambda_.13} parent=0 // pred_check_branch
    %12 = sbr.rel (0) target = $region5
  $region4: #{_lambda_.13} parent=0 // pred_region
    _
  $region5: #{_lambda_.13} parent=0 // pred_fallthru
    _
  // Predicated region
  $region6: #{_lambda_.13} parent=0 // pred_check
    _
  $region7: #{_lambda_.13} parent=0 // pred_check_branch
    %14 = sbr.rel (0) target = $region9
  $region8: #{_lambda_.13} parent=0 // pred_region
    _
  $region9: #{_lambda_.13} parent=0 // pred_fallthru
    _
  // Predicated region
  $region10: #{_lambda_.13} parent=0 // pred_check
    _
  $region11: #{_lambda_.13} parent=0 // pred_check_branch
    %16 = sbr.rel (0) target = $region13
  $region12: #{_lambda_.13} parent=0 // pred_region
    _
  $region13: #{_lambda_.13} parent=0 // pred_fallthru
    _
  // Predicated region
  $region14: #{_lambda_.13} parent=0 // pred_check
    _
  $region15: #{_lambda_.13} parent=0 // pred_check_branch
    %18 = sbr.rel (0) target = $region17
  $region16: #{_lambda_.13} parent=0 // pred_region
    _
  $region17: #{_lambda_.13} parent=0 // pred_fallthru
    _
  // Predicated region
  $region18: #{_lambda_.13} parent=0 // pred_check
    _
  $region19: #{_lambda_.13} parent=0 // pred_check_branch
    %20 = sbr.rel (0) target = $region21
  $region20: #{_lambda_.13} parent=0 // pred_region
    _
  $region21: #{_lambda_.13} parent=0 // pred_fallthru
    _
  // Predicated region
  $region22: #{_lambda_.13} parent=0 // pred_check
    _
  $region23: #{_lambda_.13} parent=0 // pred_check_branch
    %22 = sbr.rel (0) target = $region25
  $region24: #{_lambda_.13} parent=0 // pred_region
    _
  $region25: #{_lambda_.13} parent=0 // pred_fallthru
    _
  %p24 = scmp.eq.s32.totalorder 0, 0
  // Predicated region
  $region26: #{_lambda_.13} parent=0 // pred_check
    %p25 = pneg %p24
  $region27: #{_lambda_.13} parent=0 // pred_check_branch
    %27 = sbr.rel (%p25) target = $region29
  $region28: #{_lambda_.13} parent=0 // pred_region
    %v28 = vld [vmem:[%s0] sm:$0xf]
    %v29 = vld [vmem:[%s0 + $0x4] sm:$0xf]
    %v30 = vld [vmem:[%s4] sm:$0xf]
    %v31 = vld [vmem:[%s4 + $0x4] sm:$0xf]
    %v32 = vld [vmem:[%s4 + $0x8] sm:$0xf]
    %v33 = vld [vmem:[%s4 + $0xc] sm:$0xf]
    %v36 = vunpack.c.l.b16 %v28
    %v37 = vunpack.c.l.b16 %v29
    %v38 = vpack.c.b16 %v37, %v36
    %v43 = vunpack.c.l.b16 %v30
    %v44 = vunpack.c.l.b16 %v31
    %v45 = vunpack.c.l.b16 %v32
    %v46 = vunpack.c.l.b16 %v33
    %v47 = vpack.c.b16 %v44, %v43
    %v48 = vpack.c.b16 %v46, %v45
    %vm51 = vcmask 261120
    %v53 = vsel %vm51, %v38, 0
    %55 = vmatprep.subr.bf16.mxu0 0
    %56 = vmatpush1.bf16.msra.mxu0 0
    %57 = vmatprep.subr.bf16.mxu0 0
    %58 = vmatpush1.bf16.msra.mxu0 0
    %59 = vmatprep.subr.bf16.mxu0 0
    %60 = vmatpush1.bf16.msra.mxu0 0
    %61 = vmatprep.subr.bf16.mxu0 0
    %62 = vmatpush1.bf16.msra.mxu0 0
    %63 = vmatprep.subr.bf16.mxu0 0
    %64 = vmatpush1.bf16.msra.mxu0 0
    %65 = vmatprep.subr.bf16.mxu0 0
    %66 = vmatpush1.bf16.msra.mxu0 0
    %67 = vmatprep.subr.bf16.mxu0 0
    %68 = vmatpush1.bf16.msra.mxu0 %v48
    %69 = vmatprep.subr.bf16.mxu0 0
    %70 = vmatpush1.bf16.msra.mxu0 %v47
    %71 = vmatprep.subr.bf16.mxu0 0
    %72 = vmatpush2.bf16.msra.mxu0 0
    %73 = vmatprep.subr.bf16.mxu0 0
    %74 = vmatpush2.bf16.msra.mxu0 0
    %75 = vmatprep.subr.bf16.mxu0 0
    %76 = vmatpush2.bf16.msra.mxu0 0
    %77 = vmatprep.subr.bf16.mxu0 0
    %78 = vmatpush2.bf16.msra.mxu0 0
    %79 = vmatprep.subr.bf16.mxu0 0
    %80 = vmatpush2.bf16.msra.mxu0 0
    %81 = vmatprep.subr.bf16.mxu0 0
    %82 = vmatpush2.bf16.msra.mxu0 0
    %83 = vmatprep.subr.bf16.mxu0 0
    %84 = vmatpush2.bf16.msra.mxu0 0
    %85 = vmatprep.subr.bf16.mxu0 0
    %86 = vmatpush2.bf16.msra.mxu0 0
    %87 = vmatprep.mubr.bf16.mxu0 0
    %88 = vmatmul.mubr.bf16.gmra.mxu0 %v53
    %v89 = vpop.f32.mrf.mxu0
    %v90 = vadd.f32 0.0, %v89
    %v91 = vpop.f32.mrf.mxu0
    %v92 = vpop.f32.mrf.mxu0
    %v93 = vadd.f32 0.0, %v92
    %v94 = vpop.f32.mrf.mxu0
    %95 = vdwg.mxu0
    %v96 = vpack.c.bf16 %v93, %v90
    %v98 = vunpack.c.l.b16 %v96
    %v99 = vunpack.c.h.b16 %v96
    %v100 = vpack.c.b16 %v98, %v98
    %v101 = vpack.c.b16 %v99, %v99
    %vm104 = vcmask 60416
    %105 = vst.msk [vmem:[#allocation2] sm:$0xf] %vm104, %v100
    %106 = vst.msk [vmem:[#allocation2 + $0x4] sm:$0xf] %vm104, %v101
  $region29: #{_lambda_.13} parent=0 // pred_fallthru
    _
  %v107 = vld [vmem:[%s0] sm:$0xf]
  %v108 = vld [vmem:[%s0 + $0x4] sm:$0xf]
  %v109 = vld [vmem:[%s3] sm:$0xf]
  %v110 = vld [vmem:[%s3 + $0x4] sm:$0xf]
  %v111 = vld [vmem:[%s3 + $0x8] sm:$0xf]
  %v112 = vld [vmem:[%s3 + $0xc] sm:$0xf]
  %v113 = vld [vmem:[#allocation2] sm:$0xf]
  %v114 = vld [vmem:[#allocation2 + $0x4] sm:$0xf]
  %v115 = vld [vmem:[%s5] sm:$0xf]
  %v118 = vunpack.c.l.b16 %v113
  %v119 = vunpack.c.l.b16 %v114
  %v120 = vpack.c.b16 %v119, %v118
  %vm121 = vcmask 64512
  %v123 = vsel %vm121, %v120, 0
  %vm125 = vcmask 1043456
  %v127 = vsel %vm125, %v115, 0
  %129 = vmatprep.subr.bf16.mxu0 0
  %130 = vmatpush1.bf16.msra.mxu0 0
  %131 = vmatprep.subr.bf16.mxu0 0
  %132 = vmatpush1.bf16.msra.mxu0 0
  %133 = vmatprep.subr.bf16.mxu0 0
  %134 = vmatpush1.bf16.msra.mxu0 0
  %135 = vmatprep.subr.bf16.mxu0 0
  %136 = vmatpush1.bf16.msra.mxu0 0
  %137 = vmatprep.subr.bf16.mxu0 0
  %138 = vmatpush1.bf16.msra.mxu0 0
  %139 = vmatprep.subr.bf16.mxu0 0
  %140 = vmatpush1.bf16.msra.mxu0 0
  %141 = vmatprep.subr.bf16.mxu0 0
  %142 = vmatpush1.bf16.msra.mxu0 0
  %143 = vmatprep.subr.bf16.mxu0 0
  %144 = vmatpush1.bf16.msra.mxu0 %v127
  %145 = vmatprep.subr.bf16.mxu0 0
  %146 = vmatpush2.bf16.msra.mxu0 0
  %147 = vmatprep.subr.bf16.mxu0 0
  %148 = vmatpush2.bf16.msra.mxu0 0
  %149 = vmatprep.subr.bf16.mxu0 0
  %150 = vmatpush2.bf16.msra.mxu0 0
  %151 = vmatprep.subr.bf16.mxu0 0
  %152 = vmatpush2.bf16.msra.mxu0 0
  %153 = vmatprep.subr.bf16.mxu0 0
  %154 = vmatpush2.bf16.msra.mxu0 0
  %155 = vmatprep.subr.bf16.mxu0 0
  %156 = vmatpush2.bf16.msra.mxu0 0
  %157 = vmatprep.subr.bf16.mxu0 0
  %158 = vmatpush2.bf16.msra.mxu0 0
  %159 = vmatprep.subr.bf16.mxu0 0
  %160 = vmatpush2.bf16.msra.mxu0 0
  %161 = vmatprep.mubr.bf16.mxu0 0
  %162 = vmatmul.mubr.bf16.gmra.mxu0 %v123
  %v163 = vpop.f32.mrf.mxu0
  %v164 = vadd.f32 0.0, %v163
  %v165 = vpop.f32.mrf.mxu0
  %v166 = vpop.f32.mrf.mxu0
  %v167 = vadd.f32 0.0, %v166
  %v168 = vpop.f32.mrf.mxu0
  %169 = vdwg.mxu0
  %v172 = vunpack.c.l.b16 %v107
  %v173 = vunpack.c.l.b16 %v108
  %v174 = vpack.c.b16 %v173, %v172
  %v179 = vunpack.c.l.b16 %v109
  %v180 = vunpack.c.l.b16 %v110
  %v181 = vunpack.c.l.b16 %v111
  %v182 = vunpack.c.l.b16 %v112
  %v183 = vpack.c.b16 %v180, %v179
  %v184 = vpack.c.b16 %v182, %v181
  %vm187 = vcmask 261120
  %v189 = vsel %vm187, %v174, 0
  %191 = vmatprep.subr.bf16.mxu0 0
  %192 = vmatpush1.bf16.msra.mxu0 0
  %193 = vmatprep.subr.bf16.mxu0 0
  %194 = vmatpush1.bf16.msra.mxu0 0
  %195 = vmatprep.subr.bf16.mxu0 0
  %196 = vmatpush1.bf16.msra.mxu0 0
  %197 = vmatprep.subr.bf16.mxu0 0
  %198 = vmatpush1.bf16.msra.mxu0 0
  %199 = vmatprep.subr.bf16.mxu0 0
  %200 = vmatpush1.bf16.msra.mxu0 0
  %201 = vmatprep.subr.bf16.mxu0 0
  %202 = vmatpush1.bf16.msra.mxu0 0
  %203 = vmatprep.subr.bf16.mxu0 0
  %204 = vmatpush1.bf16.msra.mxu0 %v184
  %205 = vmatprep.subr.bf16.mxu0 0
  %206 = vmatpush1.bf16.msra.mxu0 %v183
  %207 = vmatprep.subr.bf16.mxu0 0
  %208 = vmatpush2.bf16.msra.mxu0 0
  %209 = vmatprep.subr.bf16.mxu0 0
  %210 = vmatpush2.bf16.msra.mxu0 0
  %211 = vmatprep.subr.bf16.mxu0 0
  %212 = vmatpush2.bf16.msra.mxu0 0
  %213 = vmatprep.subr.bf16.mxu0 0
  %214 = vmatpush2.bf16.msra.mxu0 0
  %215 = vmatprep.subr.bf16.mxu0 0
  %216 = vmatpush2.bf16.msra.mxu0 0
  %217 = vmatprep.subr.bf16.mxu0 0
  %218 = vmatpush2.bf16.msra.mxu0 0
  %219 = vmatprep.subr.bf16.mxu0 0
  %220 = vmatpush2.bf16.msra.mxu0 0
  %221 = vmatprep.subr.bf16.mxu0 0
  %222 = vmatpush2.bf16.msra.mxu0 0
  %223 = vmatprep.mubr.bf16.mxu0 0
  %224 = vmatmul.mubr.bf16.gmra.mxu0 %v189
  %v225 = vpop.f32.mrf.mxu0
  %v226 = vadd.f32 %v164, %v225
  %v227 = vpop.f32.mrf.mxu0
  %v228 = vpop.f32.mrf.mxu0
  %v229 = vadd.f32 %v167, %v228
  %v230 = vpop.f32.mrf.mxu0
  %231 = vdwg.mxu0
  %v232 = vld [vmem:[%s1] sm:$0xf]
  %v233 = vld [vmem:[%s1 + $0x4] sm:$0xf]
  %v234 = vunpack.c.l.bf16 %v232
  %v235 = vunpack.c.l.bf16 %v233
  %v236 = vld [vmem:[%s2] sm:$0x1]
  %v238 = vlaneseq
  %v239 = vshrl.u32 %v238, 7
  %v240 = vsub.s32 0, %v239
  %v241 = vrot.slane %v236, %v240
  %v243 = vmul.f32 %v241, %v226
  %v244 = vmul.f32 %v241, %v229
  %v245 = vadd.f32 %v234, %v243
  %v246 = vadd.f32 %v235, %v244
  %v247 = vpack.c.bf16 %v246, %v245
  %v249 = vunpack.c.l.b16 %v247
  %v250 = vunpack.c.h.b16 %v247
  %v251 = vpack.c.b16 %v249, %v249
  %v252 = vpack.c.b16 %v250, %v250
  %vm255 = vcmask 257024
  %256 = vst.msk [vmem:[%s6] sm:$0xf] %vm255, %v251
  %257 = vst.msk [vmem:[%s6 + $0x4] sm:$0xf] %vm255, %v252
  // Predicated region
  $region30: #{_lambda_.13} parent=0 // pred_check
    _
  $region31: #{_lambda_.13} parent=0 // pred_check_branch
    %259 = sbr.rel (0) target = $region33
  $region32: #{_lambda_.13} parent=0 // pred_region
    _
  $region33: #{_lambda_.13} parent=0 // pred_fallthru
    _
  // Predicated region
  $region34: #{_lambda_.13} parent=0 // pred_check
    _
  $region35: #{_lambda_.13} parent=0 // pred_check_branch
    %261 = sbr.rel (0) target = $region37
  $region36: #{_lambda_.13} parent=0 // pred_region
    _
  $region37: #{_lambda_.13} parent=0 // pred_fallthru
    _

// kernel: _lambda_.11
$region0: #{_lambda_.11}
  #allocation0 [shape = 'u32[]', space=smem, size = 0x4, offset = 0x4, fixed_abs, tag = 'smem constant byte address 0x4 - core index']
  #allocation1 [shape = 'u32[144,128]{1,0:T(1,128)}', space=vmem, size = 0x12000, scoped, tag = 'internal scratch']
  #allocation2 [shape = 'bf16[16,32]{1,0:T(8,128)(2,1)}', space=vmem, size = 0x1000, scoped, tag = 'scratch operand']
  #allocation3 [shape = 'bf16[16,8]{1,0:T(8,128)(2,1)}', space=vmem, size = 0x1000, scoped, tag = 'scratch operand']
  %s0 = inlined_call_operand.vmem [shape: bf16[16,32], index: 0, kind: input, shape index: {}]
  %s1 = inlined_call_operand.vmem [shape: f32[1,32], index: 1, kind: input, shape index: {}]
  %s2 = inlined_call_operand.vmem [shape: f32[1,32], index: 2, kind: input, shape index: {}]
  %s3 = inlined_call_operand.vmem [shape: bf16[32,96], index: 3, kind: input, shape index: {}]
  %s4 = inlined_call_operand.vmem [shape: bf16[32,8], index: 4, kind: input, shape index: {}]
  %s5 = inlined_call_operand.vmem [shape: bf16[8,96], index: 5, kind: input, shape index: {}]
  %s6 = inlined_call_operand.vmem [shape: bf16[16,96], index: 6, kind: output, shape index: {}]
  %s7 = sld [smem:[#allocation0]]
  $region38: #{_lambda_.11} parent=0
    _
  %s9 = ssub.s32 1, %s7
  %s10 = scalar_select 0, %s9, %s7
  // Predicated region
  $region2: #{_lambda_.11} parent=0 // pred_check
    _
  $region3: #{_lambda_.11} parent=0 // pred_check_branch
    %12 = sbr.rel (0) target = $region5
  $region4: #{_lambda_.11} parent=0 // pred_region
    _
  $region5: #{_lambda_.11} parent=0 // pred_fallthru
    _
  // Predicated region
  $region6: #{_lambda_.11} parent=0 // pred_check
    _
  $region7: #{_lambda_.11} parent=0 // pred_check_branch
    %14 = sbr.rel (0) target = $region9
  $region8: #{_lambda_.11} parent=0 // pred_region
    _
  $region9: #{_lambda_.11} parent=0 // pred_fallthru
    _
  // Predicated region
  $region10: #{_lambda_.11} parent=0 // pred_check
    _
  $region11: #{_lambda_.11} parent=0 // pred_check_branch
    %16 = sbr.rel (0) target = $region13
  $region12: #{_lambda_.11} parent=0 // pred_region
    _
  $region13: #{_lambda_.11} parent=0 // pred_fallthru
    _
  // Predicated region
  $region14: #{_lambda_.11} parent=0 // pred_check
    _
  $region15: #{_lambda_.11} parent=0 // pred_check_branch
    %18 = sbr.rel (0) target = $region17
  $region16: #{_lambda_.11} parent=0 // pred_region
    _
  $region17: #{_lambda_.11} parent=0 // pred_fallthru
    _
  // Predicated region
  $region18: #{_lambda_.11} parent=0 // pred_check
    _
  $region19: #{_lambda_.11} parent=0 // pred_check_branch
    %20 = sbr.rel (0) target = $region21
  $region20: #{_lambda_.11} parent=0 // pred_region
    _
  $region21: #{_lambda_.11} parent=0 // pred_fallthru
    _
  // Predicated region
  $region22: #{_lambda_.11} parent=0 // pred_check
    _
  $region23: #{_lambda_.11} parent=0 // pred_check_branch
    %22 = sbr.rel (0) target = $region25
  $region24: #{_lambda_.11} parent=0 // pred_region
    _
  $region25: #{_lambda_.11} parent=0 // pred_fallthru
    _
  %p24 = scmp.eq.s32.totalorder 0, 0
  // Predicated region
  $region26: #{_lambda_.11} parent=0 // pred_check
    %p25 = pneg %p24
  $region27: #{_lambda_.11} parent=0 // pred_check_branch
    %27 = sbr.rel (%p25) target = $region29
  $region28: #{_lambda_.11} parent=0 // pred_region
    %v28 = vld [vmem:[%s0] sm:$0xf]
    %v29 = vld [vmem:[%s0 + $0x4] sm:$0xf]
    %v30 = vunpack.c.l.bf16 %v28
    %v31 = vunpack.c.l.bf16 %v29
    %vm32 = vcmask 261120
    %v33 = vsel %vm32, %v30, 0.0
    %34 = vadd.xlane.f32.xlu0 %v33
    %v35 = vpop.xlane.xlu0 %34
    %v36 = vsel %vm32, %v31, 0.0
    %37 = vadd.xlane.f32.xlu0 %v36
    %v38 = vpop.xlane.xlu0 %37
    %v39 = vrcp.pop 32.0
    %v40 = vmul.f32 %v35, %v39
    %v41 = vmul.f32 %v38, %v39
    %v42 = vmul.f32 %v30, %v30
    %v43 = vmul.f32 %v31, %v31
    %v44 = vsel %vm32, %v42, 0.0
    %45 = vadd.xlane.f32.xlu0 %v44
    %v46 = vpop.xlane.xlu0 %45
    %v47 = vsel %vm32, %v43, 0.0
    %48 = vadd.xlane.f32.xlu0 %v47
    %v49 = vpop.xlane.xlu0 %48
    %v50 = vmul.f32 %v46, %v39
    %v51 = vmul.f32 %v49, %v39
    %v52 = vmul.f32 %v40, %v40
    %v53 = vmul.f32 %v41, %v41
    %v54 = vsub.f32 %v50, %v52
    %v55 = vsub.f32 %v51, %v53
    %v56 = vsub.f32 %v30, %v40
    %v57 = vsub.f32 %v31, %v41
    %v58 = vadd.f32 %v54, 1e-05
    %v59 = vadd.f32 %v55, 1e-05
    %v60 = vrsqrt.pop %v58
    %v61 = vrsqrt.pop %v59
    %v62 = vmul.f32 %v56, %v60
    %v63 = vmul.f32 %v57, %v61
    %v64 = vld [vmem:[%s1] sm:$0x1]
    %v66 = vlaneseq
    %v67 = vshrl.u32 %v66, 7
    %v68 = vsub.s32 0, %v67
    %v69 = vrot.slane %v64, %v68
    %v71 = vmul.f32 %v62, %v69
    %v72 = vmul.f32 %v63, %v69
    %v73 = vld [vmem:[%s2] sm:$0x1]
    %v75 = vlaneseq
    %v76 = vshrl.u32 %v75, 7
    %v77 = vsub.s32 0, %v76
    %v78 = vrot.slane %v73, %v77
    %v80 = vadd.f32 %v71, %v78
    %v81 = vadd.f32 %v72, %v78
    %v82 = vpack.c.bf16 %v81, %v80
    %v84 = vunpack.c.l.b16 %v82
    %v85 = vunpack.c.h.b16 %v82
    %v86 = vpack.c.b16 %v84, %v84
    %v87 = vpack.c.b16 %v85, %v85
    %vm90 = vcmask 257024
    %91 = vst.msk [vmem:[#allocation2] sm:$0xf] %vm90, %v86
    %92 = vst.msk [vmem:[#allocation2 + $0x4] sm:$0xf] %vm90, %v87
    %v93 = vld [vmem:[#allocation2] sm:$0xf]
    %v94 = vld [vmem:[#allocation2 + $0x4] sm:$0xf]
    %v95 = vld [vmem:[%s4] sm:$0xf]
    %v96 = vld [vmem:[%s4 + $0x4] sm:$0xf]
    %v97 = vld [vmem:[%s4 + $0x8] sm:$0xf]
    %v98 = vld [vmem:[%s4 + $0xc] sm:$0xf]
    %v101 = vunpack.c.l.b16 %v93
    %v102 = vunpack.c.l.b16 %v94
    %v103 = vpack.c.b16 %v102, %v101
    %v108 = vunpack.c.l.b16 %v95
    %v109 = vunpack.c.l.b16 %v96
    %v110 = vunpack.c.l.b16 %v97
    %v111 = vunpack.c.l.b16 %v98
    %v112 = vpack.c.b16 %v109, %v108
    %v113 = vpack.c.b16 %v111, %v110
    %v117 = vsel %vm32, %v103, 0
    %119 = vmatprep.subr.bf16.mxu0 0
    %120 = vmatpush1.bf16.msra.mxu0 0
    %121 = vmatprep.subr.bf16.mxu0 0
    %122 = vmatpush1.bf16.msra.mxu0 0
    %123 = vmatprep.subr.bf16.mxu0 0
    %124 = vmatpush1.bf16.msra.mxu0 0
    %125 = vmatprep.subr.bf16.mxu0 0
    %126 = vmatpush1.bf16.msra.mxu0 0
    %127 = vmatprep.subr.bf16.mxu0 0
    %128 = vmatpush1.bf16.msra.mxu0 0
    %129 = vmatprep.subr.bf16.mxu0 0
    %130 = vmatpush1.bf16.msra.mxu0 0
    %131 = vmatprep.subr.bf16.mxu0 0
    %132 = vmatpush1.bf16.msra.mxu0 %v113
    %133 = vmatprep.subr.bf16.mxu0 0
    %134 = vmatpush1.bf16.msra.mxu0 %v112
    %135 = vmatprep.subr.bf16.mxu0 0
    %136 = vmatpush2.bf16.msra.mxu0 0
    %137 = vmatprep.subr.bf16.mxu0 0
    %138 = vmatpush2.bf16.msra.mxu0 0
    %139 = vmatprep.subr.bf16.mxu0 0
    %140 = vmatpush2.bf16.msra.mxu0 0
    %141 = vmatprep.subr.bf16.mxu0 0
    %142 = vmatpush2.bf16.msra.mxu0 0
    %143 = vmatprep.subr.bf16.mxu0 0
    %144 = vmatpush2.bf16.msra.mxu0 0
    %145 = vmatprep.subr.bf16.mxu0 0
    %146 = vmatpush2.bf16.msra.mxu0 0
    %147 = vmatprep.subr.bf16.mxu0 0
    %148 = vmatpush2.bf16.msra.mxu0 0
    %149 = vmatprep.subr.bf16.mxu0 0
    %150 = vmatpush2.bf16.msra.mxu0 0
    %151 = vmatprep.mubr.bf16.mxu0 0
    %152 = vmatmul.mubr.bf16.gmra.mxu0 %v117
    %v153 = vpop.f32.mrf.mxu0
    %v154 = vadd.f32 0.0, %v153
    %v155 = vpop.f32.mrf.mxu0
    %v156 = vpop.f32.mrf.mxu0
    %v157 = vadd.f32 0.0, %v156
    %v158 = vpop.f32.mrf.mxu0
    %159 = vdwg.mxu0
    %v160 = vpack.c.bf16 %v157, %v154
    %v162 = vunpack.c.l.b16 %v160
    %v163 = vunpack.c.h.b16 %v160
    %v164 = vpack.c.b16 %v162, %v162
    %v165 = vpack.c.b16 %v163, %v163
    %vm168 = vcmask 60416
    %169 = vst.msk [vmem:[#allocation3] sm:$0xf] %vm168, %v164
    %170 = vst.msk [vmem:[#allocation3 + $0x4] sm:$0xf] %vm168, %v165
  $region29: #{_lambda_.11} parent=0 // pred_fallthru
    _
  %v171 = vld [vmem:[#allocation2] sm:$0xf]
  %v172 = vld [vmem:[#allocation2 + $0x4] sm:$0xf]
  %v173 = vld [vmem:[%s3] sm:$0xf]
  %v174 = vld [vmem:[%s3 + $0x4] sm:$0xf]
  %v175 = vld [vmem:[%s3 + $0x8] sm:$0xf]
  %v176 = vld [vmem:[%s3 + $0xc] sm:$0xf]
  %v177 = vld [vmem:[#allocation3] sm:$0xf]
  %v178 = vld [vmem:[#allocation3 + $0x4] sm:$0xf]
  %v179 = vld [vmem:[%s5] sm:$0xf]
  %v182 = vunpack.c.l.b16 %v177
  %v183 = vunpack.c.l.b16 %v178
  %v184 = vpack.c.b16 %v183, %v182
  %vm185 = vcmask 64512
  %v187 = vsel %vm185, %v184, 0
  %vm189 = vcmask 1043456
  %v191 = vsel %vm189, %v179, 0
  %193 = vmatprep.subr.bf16.mxu0 0
  %194 = vmatpush1.bf16.msra.mxu0 0
  %195 = vmatprep.subr.bf16.mxu0 0
  %196 = vmatpush1.bf16.msra.mxu0 0
  %197 = vmatprep.subr.bf16.mxu0 0
  %198 = vmatpush1.bf16.msra.mxu0 0
  %199 = vmatprep.subr.bf16.mxu0 0
  %200 = vmatpush1.bf16.msra.mxu0 0
  %201 = vmatprep.subr.bf16.mxu0 0
  %202 = vmatpush1.bf16.msra.mxu0 0
  %203 = vmatprep.subr.bf16.mxu0 0
  %204 = vmatpush1.bf16.msra.mxu0 0
  %205 = vmatprep.subr.bf16.mxu0 0
  %206 = vmatpush1.bf16.msra.mxu0 0
  %207 = vmatprep.subr.bf16.mxu0 0
  %208 = vmatpush1.bf16.msra.mxu0 %v191
  %209 = vmatprep.subr.bf16.mxu0 0
  %210 = vmatpush2.bf16.msra.mxu0 0
  %211 = vmatprep.subr.bf16.mxu0 0
  %212 = vmatpush2.bf16.msra.mxu0 0
  %213 = vmatprep.subr.bf16.mxu0 0
  %214 = vmatpush2.bf16.msra.mxu0 0
  %215 = vmatprep.subr.bf16.mxu0 0
  %216 = vmatpush2.bf16.msra.mxu0 0
  %217 = vmatprep.subr.bf16.mxu0 0
  %218 = vmatpush2.bf16.msra.mxu0 0
  %219 = vmatprep.subr.bf16.mxu0 0
  %220 = vmatpush2.bf16.msra.mxu0 0
  %221 = vmatprep.subr.bf16.mxu0 0
  %222 = vmatpush2.bf16.msra.mxu0 0
  %223 = vmatprep.subr.bf16.mxu0 0
  %224 = vmatpush2.bf16.msra.mxu0 0
  %225 = vmatprep.mubr.bf16.mxu0 0
  %226 = vmatmul.mubr.bf16.gmra.mxu0 %v187
  %v227 = vpop.f32.mrf.mxu0
  %v228 = vadd.f32 0.0, %v227
  %v229 = vpop.f32.mrf.mxu0
  %v230 = vpop.f32.mrf.mxu0
  %v231 = vadd.f32 0.0, %v230
  %v232 = vpop.f32.mrf.mxu0
  %233 = vdwg.mxu0
  %v236 = vunpack.c.l.b16 %v171
  %v237 = vunpack.c.l.b16 %v172
  %v238 = vpack.c.b16 %v237, %v236
  %v243 = vunpack.c.l.b16 %v173
  %v244 = vunpack.c.l.b16 %v174
  %v245 = vunpack.c.l.b16 %v175
  %v246 = vunpack.c.l.b16 %v176
  %v247 = vpack.c.b16 %v244, %v243
  %v248 = vpack.c.b16 %v246, %v245
  %vm251 = vcmask 261120
  %v253 = vsel %vm251, %v238, 0
  %255 = vmatprep.subr.bf16.mxu0 0
  %256 = vmatpush1.bf16.msra.mxu0 0
  %257 = vmatprep.subr.bf16.mxu0 0
  %258 = vmatpush1.bf16.msra.mxu0 0
  %259 = vmatprep.subr.bf16.mxu0 0
  %260 = vmatpush1.bf16.msra.mxu0 0
  %261 = vmatprep.subr.bf16.mxu0 0
  %262 = vmatpush1.bf16.msra.mxu0 0
  %263 = vmatprep.subr.bf16.mxu0 0
  %264 = vmatpush1.bf16.msra.mxu0 0
  %265 = vmatprep.subr.bf16.mxu0 0
  %266 = vmatpush1.bf16.msra.mxu0 0
  %267 = vmatprep.subr.bf16.mxu0 0
  %268 = vmatpush1.bf16.msra.mxu0 %v248
  %269 = vmatprep.subr.bf16.mxu0 0
  %270 = vmatpush1.bf16.msra.mxu0 %v247
  %271 = vmatprep.subr.bf16.mxu0 0
  %272 = vmatpush2.bf16.msra.mxu0 0
  %273 = vmatprep.subr.bf16.mxu0 0
  %274 = vmatpush2.bf16.msra.mxu0 0
  %275 = vmatprep.subr.bf16.mxu0 0
  %276 = vmatpush2.bf16.msra.mxu0 0
  %277 = vmatprep.subr.bf16.mxu0 0
  %278 = vmatpush2.bf16.msra.mxu0 0
  %279 = vmatprep.subr.bf16.mxu0 0
  %280 = vmatpush2.bf16.msra.mxu0 0
  %281 = vmatprep.subr.bf16.mxu0 0
  %282 = vmatpush2.bf16.msra.mxu0 0
  %283 = vmatprep.subr.bf16.mxu0 0
  %284 = vmatpush2.bf16.msra.mxu0 0
  %285 = vmatprep.subr.bf16.mxu0 0
  %286 = vmatpush2.bf16.msra.mxu0 0
  %287 = vmatprep.mubr.bf16.mxu0 0
  %288 = vmatmul.mubr.bf16.gmra.mxu0 %v253
  %v289 = vpop.f32.mrf.mxu0
  %v290 = vadd.f32 %v228, %v289
  %v291 = vpop.f32.mrf.mxu0
  %v292 = vpop.f32.mrf.mxu0
  %v293 = vadd.f32 %v231, %v292
  %v294 = vpop.f32.mrf.mxu0
  %295 = vdwg.mxu0
  %v296 = vpack.c.bf16 %v293, %v290
  %v298 = vunpack.c.l.b16 %v296
  %v299 = vunpack.c.h.b16 %v296
  %v300 = vpack.c.b16 %v298, %v298
  %v301 = vpack.c.b16 %v299, %v299
  %vm304 = vcmask 781312
  %305 = vst.msk [vmem:[%s6] sm:$0xf] %vm304, %v300
  %306 = vst.msk [vmem:[%s6 + $0x4] sm:$0xf] %vm304, %v301
  // Predicated region
  $region30: #{_lambda_.11} parent=0 // pred_check
    _
  $region31: #{_lambda_.11} parent=0 // pred_check_branch
    %308 = sbr.rel (0) target = $region33
  $region32: #{_lambda_.11} parent=0 // pred_region
    _
  $region33: #{_lambda_.11} parent=0 // pred_fallthru
    _
  // Predicated region
  $region34: #{_lambda_.11} parent=0 // pred_check
    _
  $region35: #{_lambda_.11} parent=0 // pred_check_branch
    %310 = sbr.rel (0) target = $region37
  $region36: #{_lambda_.11} parent=0 // pred_region
    _
  $region37: #{_lambda_.11} parent=0 // pred_fallthru
    _

// kernel: _lambda_.12
$region0: #{_lambda_.12}
  #allocation0 [shape = 'u32[]', space=smem, size = 0x4, offset = 0x4, fixed_abs, tag = 'smem constant byte address 0x4 - core index']
  #allocation1 [shape = 'u32[144,128]{1,0:T(1,128)}', space=vmem, size = 0x12000, scoped, tag = 'internal scratch']
  #allocation2 [shape = 'f32[8,4]{1,0:T(8,128)}', space=vmem, size = 0x1000, scoped, tag = 'scratch operand']
  #allocation3 [shape = 'f32[8,4]{1,0:T(8,128)}', space=vmem, size = 0x1000, scoped, tag = 'scratch operand']
  #allocation4 [shape = 'f32[8,32]{1,0:T(8,128)}', space=vmem, size = 0x1000, scoped, tag = 'scratch operand']
  %s0 = inlined_call_operand.vmem [shape: bf16[16,96], index: 0, kind: input, shape index: {}, may-alias: {0,1}]
  %s1 = inlined_call_operand.vmem [shape: bf16[16,96], index: 1, kind: input, shape index: {}, may-alias: {0,1}]
  %s2 = inlined_call_operand.vmem [shape: bf16[16,32], index: 2, kind: output, shape index: {}]
  %s3 = sld [smem:[#allocation0]]
  $region53: #{_lambda_.12} parent=0
    _
  %s5 = ssub.s32 1, %s3
  %s6 = scalar_select 0, %s5, %s3
  loop: start=0, step=1, limit=4
  $region2: #{_lambda_.12} parent=0 // loop_pre_header
    _
  $region3: #{_lambda_.12} parent=0 // loop_header
    %s8 = sphi 0, %s12
    %p9 = scmp.ge.s32.totalorder %s8, 4
    %s15 = sphi 0, %s34
    %s16 = sphi 0, %s30
    %s17 = sphi 0, %s26
    %s18 = sphi 0, %s15
    %s19 = sphi 0, %s16
    %s20 = sphi 0, %s17
    %s21 = sphi 0, %s18
    %s22 = sphi 0, %s19
    %s23 = sphi 0, %s20
    %s39 = sphi 0, %s41
    %s42 = sphi 0, %s39
    %s43 = sphi 0, %s42
    %s59 = sphi 0, %s43
    %s67 = sphi 0, %s69
    %s70 = sphi 0, %s67
    %s71 = sphi 0, %s70
    %s87 = sphi 0, %s71
    %s95 = sphi 0, %s97
    %s98 = sphi 0, %s95
    %s99 = sphi 0, %s98
    %s115 = sphi 0, %s99
  $region4: #{_lambda_.12} parent=0 // loop_header_branch
    %11 = sbr.rel (%p9) target = $region8
  $region5: #{_lambda_.12} parent=0 // loop_body
    %s13 = ssub.s32 %s8, 1
    %s14 = ssub.s32 %s8, 2
    %s24 = sadd.s32 1, %s17
    %p25 = scmp.ge.s32.totalorder %s24, 1
    %s26 = scalar_select %p25, 0, %s24
    %s27 = sadd.s32 1, %s16
    %s28 = scalar_select %p25, %s27, %s16
    %p29 = scmp.ge.s32.totalorder %s28, 1
    %s30 = scalar_select %p29, 0, %s28
    %s31 = sadd.s32 1, %s15
    %s32 = scalar_select %p29, %s31, %s15
    %p33 = scmp.ge.s32.totalorder %s32, 2
    %s34 = scalar_select %p33, 0, %s32
    %s35 = sadd.s32 %s15, %s16
    %s36 = sadd.s32 %s34, %s30
    %s37 = ssub.s32 %s35, %s36
    %p38 = scmp.eq.s32.totalorder %s37, 0
    %s40 = sadd.s32 %s39, 1
    %s41 = scalar_select %p38, %s39, %s40
    %p44 = pneg %p38
    %p45 = scmp.eq.s32.totalorder %s8, 1
    %p46 = por %p44, %p45
    %p47 = scmp.ne.s32.totalorder %s39, %s42
    %p48 = scmp.eq.s32.totalorder %s8, 0
    %p49 = por %p47, %p48
    %p50 = scmp.ne.s32.totalorder %s39, %s42
    %p51 = scmp.eq.s32.totalorder %s13, 1
    %p52 = por %p50, %p51
    %p53 = scmp.ne.s32.totalorder %s42, %s43
    %p54 = scmp.eq.s32.totalorder %s13, 0
    %p55 = por %p53, %p54
    %p56 = scmp.ne.s32.totalorder %s42, %s43
    %p57 = scmp.eq.s32.totalorder %s14, 1
    %p58 = por %p56, %p57
    %p60 = scmp.ne.s32.totalorder %s43, %s59
    %p61 = scmp.eq.s32.totalorder %s14, 0
    %p62 = por %p60, %p61
    %s63 = sadd.s32 %s15, %s17
    %s64 = sadd.s32 %s34, %s26
    %s65 = ssub.s32 %s63, %s64
    %p66 = scmp.eq.s32.totalorder %s65, 0
    %s68 = sadd.s32 %s67, 1
    %s69 = scalar_select %p66, %s67, %s68
    %p72 = pneg %p66
    %p73 = scmp.eq.s32.totalorder %s8, 1
    %p74 = por %p72, %p73
    %p75 = scmp.ne.s32.totalorder %s67, %s70
    %p76 = scmp.eq.s32.totalorder %s8, 0
    %p77 = por %p75, %p76
    %p78 = scmp.ne.s32.totalorder %s67, %s70
    %p79 = scmp.eq.s32.totalorder %s13, 1
    %p80 = por %p78, %p79
    %p81 = scmp.ne.s32.totalorder %s70, %s71
    %p82 = scmp.eq.s32.totalorder %s13, 0
    %p83 = por %p81, %p82
    %p84 = scmp.ne.s32.totalorder %s70, %s71
    %p85 = scmp.eq.s32.totalorder %s14, 1
    %p86 = por %p84, %p85
    %p88 = scmp.ne.s32.totalorder %s71, %s87
    %p89 = scmp.eq.s32.totalorder %s14, 0
    %p90 = por %p88, %p89
    %s91 = sadd.s32 %s15, %s16
    %s92 = sadd.s32 %s34, %s30
    %s93 = ssub.s32 %s91, %s92
    %p94 = scmp.eq.s32.totalorder %s93, 0
    %s96 = sadd.s32 %s95, 1
    %s97 = scalar_select %p94, %s95, %s96
    %p100 = pneg %p94
    %p101 = scmp.eq.s32.totalorder %s8, 1
    %p102 = por %p100, %p101
    %p103 = scmp.ne.s32.totalorder %s95, %s98
    %p104 = scmp.eq.s32.totalorder %s8, 0
    %p105 = por %p103, %p104
    %p106 = scmp.ne.s32.totalorder %s95, %s98
    %p107 = scmp.eq.s32.totalorder %s13, 1
    %p108 = por %p106, %p107
    %p109 = scmp.ne.s32.totalorder %s98, %s99
    %p110 = scmp.eq.s32.totalorder %s13, 0
    %p111 = por %p109, %p110
    %p112 = scmp.ne.s32.totalorder %s98, %s99
    %p113 = scmp.eq.s32.totalorder %s14, 1
    %p114 = por %p112, %p113
    %p116 = scmp.ne.s32.totalorder %s99, %s115
    %p117 = scmp.eq.s32.totalorder %s14, 0
    %p118 = por %p116, %p117
    %p119 = scmp.le.s32.totalorder 1, %s8
    %p120 = scmp.lt.s32.totalorder %s8, 3
    %p121 = pnand %p119, %p120
    %p122 = pneg %p121
    // Predicated region
    $region9: #{_lambda_.12} parent=5 // pred_check
      _
    $region10: #{_lambda_.12} parent=5 // pred_check_branch
      %124 = sbr.rel (%p121) target = $region12
    $region11: #{_lambda_.12} parent=5 // pred_region
      %s125 = ssub.s32 %s8, 1
    $region12: #{_lambda_.12} parent=5 // pred_fallthru
      _
    %p126 = scmp.lt.s32.totalorder %s8, 2
    // Predicated region
    $region13: #{_lambda_.12} parent=5 // pred_check
      %p127 = pneg %p126
    $region14: #{_lambda_.12} parent=5 // pred_check_branch
      %129 = sbr.rel (%p127) target = $region16
    $region15: #{_lambda_.12} parent=5 // pred_region
      // Predicated region
      $region17: #{_lambda_.12} parent=15 // pred_check
        %p130 = pneg %p49
      $region18: #{_lambda_.12} parent=15 // pred_check_branch
        %132 = sbr.rel (%p130) target = $region20
      $region19: #{_lambda_.12} parent=15 // pred_region
        %s133 = sadd.s32 %s15, %s16
        %p134 = scmp.lt.s32.totalorder %s133, 1
        %s135 = scalar_select %p134, %s133, 1
        %s136 = smul.addr %s135, 4
        %s137 = scalar_lea.vmem %s0, %s136
        %s138 = sadd.s32 %s15, %s16
      $region20: #{_lambda_.12} parent=15 // pred_fallthru
        _
      // Predicated region
      $region21: #{_lambda_.12} parent=15 // pred_check
        %p139 = pneg %p77
      $region22: #{_lambda_.12} parent=15 // pred_check_branch
        %141 = sbr.rel (%p139) target = $region24
      $region23: #{_lambda_.12} parent=15 // pred_region
        %s142 = sadd.s32 %s15, %s17
        %p143 = scmp.lt.s32.totalorder %s142, 1
        %s144 = scalar_select %p143, %s142, 1
        %s145 = smul.addr %s144, 4
        %s146 = scalar_lea.vmem %s1, %s145
        %s147 = sadd.s32 %s15, %s17
      $region24: #{_lambda_.12} parent=15 // pred_fallthru
        _
    $region16: #{_lambda_.12} parent=5 // pred_fallthru
      _
    %p148 = scmp.le.s32.totalorder 1, %s8
    %p149 = scmp.lt.s32.totalorder %s8, 3
    %p150 = pnand %p148, %p149
    %p151 = pneg %p150
    // Predicated region
    $region25: #{_lambda_.12} parent=5 // pred_check
      _
    $region26: #{_lambda_.12} parent=5 // pred_check_branch
      %153 = sbr.rel (%p150) target = $region28
    $region27: #{_lambda_.12} parent=5 // pred_region
      %s154 = ssub.s32 %s8, 1
      %s155 = sadd.s32 %s18, %s19
      %p156 = scmp.lt.s32.totalorder %s155, 1
      %s157 = scalar_select %p156, %s155, 1
      %s158 = smul.addr %s157, 4
      %s159 = scalar_lea.vmem %s0, %s158
      %p160 = pneg %p55
      %p161 = pneg %p52
      %s162 = sadd.s32 %s18, %s20
      %p163 = scmp.lt.s32.totalorder %s162, 1
      %s164 = scalar_select %p163, %s162, 1
      %s165 = smul.addr %s164, 4
      %s166 = scalar_lea.vmem %s1, %s165
      %p167 = pneg %p83
      %p168 = pneg %p80
      %p169 = pneg %p111
      %p170 = pneg %p108
      %s171 = sadd.s32 %s18, %s19
      %p172 = scmp.lt.s32.totalorder %s171, 1
      %s173 = scalar_select %p172, %s171, 1
      %s174 = smul.addr %s173, 4
      %s175 = scalar_lea.vmem %s2, %s174
      %s176 = sadd.s32 %s18, %s19
      %p177 = scmp.lt.s32.totalorder %s176, 1
      %s178 = scalar_select %p177, %s176, 1
      %s179 = smul.addr %s178, 4
      %s180 = scalar_lea.vmem %s0, %s179
      %s181 = sadd.s32 %s18, %s19
      %s182 = sadd.s32 %s18, %s20
      %p183 = scmp.lt.s32.totalorder %s182, 1
      %s184 = scalar_select %p183, %s182, 1
      %s185 = smul.addr %s184, 4
      %s186 = scalar_lea.vmem %s1, %s185
      %s187 = sadd.s32 %s18, %s20
      %s188 = sadd.s32 %s18, %s19
      %p189 = scmp.lt.s32.totalorder %s188, 1
      %s190 = scalar_select %p189, %s188, 1
      %s191 = smul.addr %s190, 4
      %s192 = scalar_lea.vmem %s2, %s191
      %s193 = sadd.s32 %s18, %s19
      %p195 = scmp.eq.s32.totalorder %s20, 0
      // Predicated region
      $region29: #{_lambda_.12} parent=27 // pred_check
        %p196 = pneg %p195
      $region30: #{_lambda_.12} parent=27 // pred_check_branch
        %198 = sbr.rel (%p196) target = $region32
      $region31: #{_lambda_.12} parent=27 // pred_region
        %vm199 = vcmask 31744
        %200 = vst.msk [vmem:[#allocation2] sm:$0xff] %vm199, -1e+30
        %201 = vst.msk [vmem:[#allocation3] sm:$0xff] %vm199, 0.0
        %vm202 = vcmask 261120
        %203 = vst.msk [vmem:[#allocation4] sm:$0xff] %vm202, 0.0
      $region32: #{_lambda_.12} parent=27 // pred_fallthru
        _
      %s204 = smul.u32 %s19, 8
      %s205 = smul.u32 %s20, 8
      %s206 = sadd.s32 %s204, 7
      %p207 = scmp.le.s32.totalorder %s205, %s206
      // Predicated region
      $region33: #{_lambda_.12} parent=27 // pred_check
        %p208 = pneg %p207
      $region34: #{_lambda_.12} parent=27 // pred_check_branch
        %210 = sbr.rel (%p208) target = $region36
      $region35: #{_lambda_.12} parent=27 // pred_region
        %v211 = vlaneseq
        %v212 = vshrl.u32 %v211, 7
        %v213 = vstv %s204
        %v214 = vadd.s32 %v213, %v212
        %v215 = vlaneseq
        %v216 = vand.u32 %v215, 127
        %v217 = vstv %s205
        %v218 = vadd.s32 %v217, %v216
        %vm219 = vcmp.le.s32.totalorder %v218, %v214
        %v220 = vld [vmem:[%s180] sm:$0xf]
        %v221 = vld [vmem:[%s186] sm:$0xf]
        %v223 = vunpack.c.l.b16 %v221
        %v224 = vpack.c.b16 %v223, %v223
        %225 = vrot.lane.b32.xlu0 %v224, 96
        %v226 = vpop.permute.xlu0 %225
        %vm227 = vcmask 64512
        %v229 = vsel %vm227, %v220, 0
        %v232 = vsel %vm227, %v226, 0
        %234 = vmatprep.subr.bf16.mxu0 0
        %235 = vmatpush1.bf16.xpose.msra.mxu0 0
        %236 = vmatprep.subr.bf16.mxu0 0
        %237 = vmatpush1.bf16.xpose.msra.mxu0 0
        %238 = vmatprep.subr.bf16.mxu0 0
        %239 = vmatpush1.bf16.xpose.msra.mxu0 0
        %240 = vmatprep.subr.bf16.mxu0 0
        %241 = vmatpush1.bf16.xpose.msra.mxu0 0
        %242 = vmatprep.subr.bf16.mxu0 0
        %243 = vmatpush1.bf16.xpose.msra.mxu0 0
        %244 = vmatprep.subr.bf16.mxu0 0
        %245 = vmatpush1.bf16.xpose.msra.mxu0 0
        %246 = vmatprep.subr.bf16.mxu0 0
        %247 = vmatpush1.bf16.xpose.msra.mxu0 0
        %248 = vmatprep.subr.bf16.mxu0 0
        %249 = vmatpush1.bf16.xpose.msra.mxu0 %v232
        %250 = vmatprep.subr.bf16.mxu0 0
        %251 = vmatpush2.bf16.xpose.msra.mxu0 0
        %252 = vmatprep.subr.bf16.mxu0 0
        %253 = vmatpush2.bf16.xpose.msra.mxu0 0
        %254 = vmatprep.subr.bf16.mxu0 0
        %255 = vmatpush2.bf16.xpose.msra.mxu0 0
        %256 = vmatprep.subr.bf16.mxu0 0
        %257 = vmatpush2.bf16.xpose.msra.mxu0 0
        %258 = vmatprep.subr.bf16.mxu0 0
        %259 = vmatpush2.bf16.xpose.msra.mxu0 0
        %260 = vmatprep.subr.bf16.mxu0 0
        %261 = vmatpush2.bf16.xpose.msra.mxu0 0
        %262 = vmatprep.subr.bf16.mxu0 0
        %263 = vmatpush2.bf16.xpose.msra.mxu0 0
        %264 = vmatprep.subr.bf16.mxu0 0
        %265 = vmatpush2.bf16.xpose.msra.mxu0 0
        %266 = vmatprep.mubr.bf16.mxu0 0
        %267 = vmatmul.mubr.bf16.gmra.mxu0 %v229
        %v268 = vpop.f32.mrf.mxu0
        %v269 = vadd.f32 0.0, %v268
        %v270 = vpop.f32.mrf.mxu0
        %v271 = vpop.f32.mrf.mxu0
        %v272 = vpop.f32.mrf.mxu0
        %273 = vdwg.mxu0
        %v274 = vmul.f32 %v269, 0.35355338
        %v275 = vsel %vm219, %v274, -1e+30
        %v276 = vld [vmem:[#allocation2] sm:$0xff]
        %v277 = vsel %vm227, %v275, -inf
        %278 = vmax.xlane.f32.xlu0 %v277
        %v279 = vpop.xlane.xlu0 %278
        %v280 = vmax.f32 %v276, %v279
        %282 = vset.pattern.permute.xlu0 0
        %283 = vperm.xlu0 %282, %v280
        %v284 = vpop.permute.xlu0 %283
        %v286 = vsub.f32 %v275, %v284
        %v287 = vmul.f32 %v286, 1.442695
        %v288 = vpow.pop %v287
        %v289 = vsub.f32 %v276, %v280
        %v290 = vmul.f32 %v289, 1.442695
        %v291 = vpow.pop %v290
        %v292 = vld [vmem:[#allocation3] sm:$0xff]
        %v293 = vmul.f32 %v291, %v292
        %v294 = vsel %vm227, %v288, 0.0
        %295 = vadd.xlane.f32.xlu0 %v294
        %v296 = vpop.xlane.xlu0 %295
        %v297 = vadd.f32 %v293, %v296
        %vm298 = vcmask 7168
        %299 = vst.msk [vmem:[#allocation3] sm:$0xff] %vm298, %v297
        %v300 = vpack.c.bf16 %v288, %v288
        %301 = vrot.lane.b32.xlu0 %v224, 64
        %v302 = vpop.permute.xlu0 %301
        %v304 = vsel %vm227, %v300, 0
        %vm306 = vcmask 1043456
        %v308 = vsel %vm306, %v302, 0
        %310 = vmatprep.subr.bf16.mxu0 0
        %311 = vmatpush1.bf16.msra.mxu0 0
        %312 = vmatprep.subr.bf16.mxu0 0
        %313 = vmatpush1.bf16.msra.mxu0 0
        %314 = vmatprep.subr.bf16.mxu0 0
        %315 = vmatpush1.bf16.msra.mxu0 0
        %316 = vmatprep.subr.bf16.mxu0 0
        %317 = vmatpush1.bf16.msra.mxu0 0
        %318 = vmatprep.subr.bf16.mxu0 0
        %319 = vmatpush1.bf16.msra.mxu0 0
        %320 = vmatprep.subr.bf16.mxu0 0
        %321 = vmatpush1.bf16.msra.mxu0 0
        %322 = vmatprep.subr.bf16.mxu0 0
        %323 = vmatpush1.bf16.msra.mxu0 0
        %324 = vmatprep.subr.bf16.mxu0 0
        %325 = vmatpush1.bf16.msra.mxu0 %v308
        %326 = vmatprep.subr.bf16.mxu0 0
        %327 = vmatpush2.bf16.msra.mxu0 0
        %328 = vmatprep.subr.bf16.mxu0 0
        %329 = vmatpush2.bf16.msra.mxu0 0
        %330 = vmatprep.subr.bf16.mxu0 0
        %331 = vmatpush2.bf16.msra.mxu0 0
        %332 = vmatprep.subr.bf16.mxu0 0
        %333 = vmatpush2.bf16.msra.mxu0 0
        %334 = vmatprep.subr.bf16.mxu0 0
        %335 = vmatpush2.bf16.msra.mxu0 0
        %336 = vmatprep.subr.bf16.mxu0 0
        %337 = vmatpush2.bf16.msra.mxu0 0
        %338 = vmatprep.subr.bf16.mxu0 0
        %339 = vmatpush2.bf16.msra.mxu0 0
        %340 = vmatprep.subr.bf16.mxu0 0
        %341 = vmatpush2.bf16.msra.mxu0 0
        %342 = vmatprep.mubr.bf16.mxu0 0
        %343 = vmatmul.mubr.bf16.gmra.mxu0 %v304
        %v344 = vpop.f32.mrf.mxu0
        %v345 = vadd.f32 0.0, %v344
        %v346 = vpop.f32.mrf.mxu0
        %v347 = vpop.f32.mrf.mxu0
        %v348 = vpop.f32.mrf.mxu0
        %349 = vdwg.mxu0
        %v350 = vld [vmem:[#allocation4] sm:$0xff]
        %352 = vset.pattern.permute.xlu0 0
        %353 = vperm.xlu0 %352, %v291
        %v354 = vpop.permute.xlu0 %353
        %v356 = vmul.f32 %v354, %v350
        %v357 = vadd.f32 %v356, %v345
        %358 = vst.msk [vmem:[#allocation4] sm:$0xff] %vm227, %v357
        %359 = vst.msk [vmem:[#allocation2] sm:$0xff] %vm298, %v280
        %v360 = vld [vmem:[%s180] sm:$0xf]
        %v361 = vld [vmem:[%s186] sm:$0xf]
        %v363 = vunpack.c.l.b16 %v360
        %v364 = vpack.c.b16 %v363, %v363
        %365 = vrot.lane.b32.xlu0 %v364, 120
        %v366 = vpop.permute.xlu0 %365
        %v368 = vunpack.c.l.b16 %v361
        %v369 = vpack.c.b16 %v368, %v368
        %370 = vrot.lane.b32.xlu0 %v369, 88
        %v371 = vpop.permute.xlu0 %370
        %v373 = vsel %vm227, %v366, 0
        %v376 = vsel %vm227, %v371, 0
        %378 = vmatprep.subr.bf16.mxu0 0
        %379 = vmatpush1.bf16.xpose.msra.mxu0 0
        %380 = vmatprep.subr.bf16.mxu0 0
        %381 = vmatpush1.bf16.xpose.msra.mxu0 0
        %382 = vmatprep.subr.bf16.mxu0 0
        %383 = vmatpush1.bf16.xpose.msra.mxu0 0
        %384 = vmatprep.subr.bf16.mxu0 0
        %385 = vmatpush1.bf16.xpose.msra.mxu0 0
        %386 = vmatprep.subr.bf16.mxu0 0
        %387 = vmatpush1.bf16.xpose.msra.mxu0 0
        %388 = vmatprep.subr.bf16.mxu0 0
        %389 = vmatpush1.bf16.xpose.msra.mxu0 0
        %390 = vmatprep.subr.bf16.mxu0 0
        %391 = vmatpush1.bf16.xpose.msra.mxu0 0
        %392 = vmatprep.subr.bf16.mxu0 0
        %393 = vmatpush1.bf16.xpose.msra.mxu0 %v376
        %394 = vmatprep.subr.bf16.mxu0 0
        %395 = vmatpush2.bf16.xpose.msra.mxu0 0
        %396 = vmatprep.subr.bf16.mxu0 0
        %397 = vmatpush2.bf16.xpose.msra.mxu0 0
        %398 = vmatprep.subr.bf16.mxu0 0
        %399 = vmatpush2.bf16.xpose.msra.mxu0 0
        %400 = vmatprep.subr.bf16.mxu0 0
        %401 = vmatpush2.bf16.xpose.msra.mxu0 0
        %402 = vmatprep.subr.bf16.mxu0 0
        %403 = vmatpush2.bf16.xpose.msra.mxu0 0
        %404 = vmatprep.subr.bf16.mxu0 0
        %405 = vmatpush2.bf16.xpose.msra.mxu0 0
        %406 = vmatprep.subr.bf16.mxu0 0
        %407 = vmatpush2.bf16.xpose.msra.mxu0 0
        %408 = vmatprep.subr.bf16.mxu0 0
        %409 = vmatpush2.bf16.xpose.msra.mxu0 0
        %410 = vmatprep.mubr.bf16.mxu0 0
        %411 = vmatmul.mubr.bf16.gmra.mxu0 %v373
        %v412 = vpop.f32.mrf.mxu0
        %v413 = vadd.f32 0.0, %v412
        %v414 = vpop.f32.mrf.mxu0
        %v415 = vpop.f32.mrf.mxu0
        %v416 = vpop.f32.mrf.mxu0
        %417 = vdwg.mxu0
        %v418 = vmul.f32 %v413, 0.35355338
        %v419 = vsel %vm219, %v418, -1e+30
        %v420 = vld [vmem:[#allocation2] sm:$0xff]
        %v421 = vsel %vm227, %v419, -inf
        %422 = vmax.xlane.f32.xlu0 %v421
        %v423 = vpop.xlane.xlu0 %422
        %v424 = vmax.f32 %v420, %v423
        %426 = vset.pattern.permute.xlu0 1
        %427 = vperm.xlu0 %426, %v424
        %v428 = vpop.permute.xlu0 %427
        %v430 = vsub.f32 %v419, %v428
        %v431 = vmul.f32 %v430, 1.442695
        %v432 = vpow.pop %v431
        %v433 = vsub.f32 %v420, %v424
        %v434 = vmul.f32 %v433, 1.442695
        %v435 = vpow.pop %v434
        %v436 = vld [vmem:[#allocation3] sm:$0xff]
        %v437 = vmul.f32 %v435, %v436
        %v438 = vsel %vm227, %v432, 0.0
        %439 = vadd.xlane.f32.xlu0 %v438
        %v440 = vpop.xlane.xlu0 %439
        %v441 = vadd.f32 %v437, %v440
        %vm442 = vcmask 15368
        %443 = vst.msk [vmem:[#allocation3] sm:$0xff] %vm442, %v441
        %v444 = vpack.c.bf16 %v432, %v432
        %445 = vrot.lane.b32.xlu0 %v369, 56
        %v446 = vpop.permute.xlu0 %445
        %v448 = vsel %vm227, %v444, 0
        %v451 = vsel %vm306, %v446, 0
        %453 = vmatprep.subr.bf16.mxu0 0
        %454 = vmatpush1.bf16.msra.mxu0 0
        %455 = vmatprep.subr.bf16.mxu0 0
        %456 = vmatpush1.bf16.msra.mxu0 0
        %457 = vmatprep.subr.bf16.mxu0 0
        %458 = vmatpush1.bf16.msra.mxu0 0
        %459 = vmatprep.subr.bf16.mxu0 0
        %460 = vmatpush1.bf16.msra.mxu0 0
        %461 = vmatprep.subr.bf16.mxu0 0
        %462 = vmatpush1.bf16.msra.mxu0 0
        %463 = vmatprep.subr.bf16.mxu0 0
        %464 = vmatpush1.bf16.msra.mxu0 0
        %465 = vmatprep.subr.bf16.mxu0 0
        %466 = vmatpush1.bf16.msra.mxu0 0
        %467 = vmatprep.subr.bf16.mxu0 0
        %468 = vmatpush1.bf16.msra.mxu0 %v451
        %469 = vmatprep.subr.bf16.mxu0 0
        %470 = vmatpush2.bf16.msra.mxu0 0
        %471 = vmatprep.subr.bf16.mxu0 0
        %472 = vmatpush2.bf16.msra.mxu0 0
        %473 = vmatprep.subr.bf16.mxu0 0
        %474 = vmatpush2.bf16.msra.mxu0 0
        %475 = vmatprep.subr.bf16.mxu0 0
        %476 = vmatpush2.bf16.msra.mxu0 0
        %477 = vmatprep.subr.bf16.mxu0 0
        %478 = vmatpush2.bf16.msra.mxu0 0
        %479 = vmatprep.subr.bf16.mxu0 0
        %480 = vmatpush2.bf16.msra.mxu0 0
        %481 = vmatprep.subr.bf16.mxu0 0
        %482 = vmatpush2.bf16.msra.mxu0 0
        %483 = vmatprep.subr.bf16.mxu0 0
        %484 = vmatpush2.bf16.msra.mxu0 0
        %485 = vmatprep.mubr.bf16.mxu0 0
        %486 = vmatmul.mubr.bf16.gmra.mxu0 %v448
        %v487 = vpop.f32.mrf.mxu0
        %v488 = vadd.f32 0.0, %v487
        %v489 = vpop.f32.mrf.mxu0
        %v490 = vpop.f32.mrf.mxu0
        %v491 = vpop.f32.mrf.mxu0
        %492 = vdwg.mxu0
        %v493 = vld [vmem:[#allocation4] sm:$0xff]
        %495 = vset.pattern.permute.xlu0 1
        %496 = vperm.xlu0 %495, %v435
        %v497 = vpop.permute.xlu0 %496
        %v499 = vmul.f32 %v497, %v493
        %501 = vrot.lane.b32.xlu0 %v488, 8
        %v502 = vpop.permute.xlu0 %501
        %v504 = vadd.f32 %v499, %v502
        %vm505 = vcmask 130112
        %506 = vst.msk [vmem:[#allocation4] sm:$0xff] %vm505, %v504
        %507 = vst.msk [vmem:[#allocation2] sm:$0xff] %vm442, %v424
        %v508 = vld [vmem:[%s180] sm:$0xf]
        %v509 = vld [vmem:[%s186] sm:$0xf]
        %v511 = vunpack.c.l.b16 %v508
        %v512 = vpack.c.b16 %v511, %v511
        %513 = vrot.lane.b32.xlu0 %v512, 112
        %v514 = vpop.permute.xlu0 %513
        %v516 = vunpack.c.l.b16 %v509
        %v517 = vpack.c.b16 %v516, %v516
        %518 = vrot.lane.b32.xlu0 %v517, 80
        %v519 = vpop.permute.xlu0 %518
        %v521 = vsel %vm227, %v514, 0
        %v524 = vsel %vm227, %v519, 0
        %526 = vmatprep.subr.bf16.mxu0 0
        %527 = vmatpush1.bf16.xpose.msra.mxu0 0
        %528 = vmatprep.subr.bf16.mxu0 0
        %529 = vmatpush1.bf16.xpose.msra.mxu0 0
        %530 = vmatprep.subr.bf16.mxu0 0
        %531 = vmatpush1.bf16.xpose.msra.mxu0 0
        %532 = vmatprep.subr.bf16.mxu0 0
        %533 = vmatpush1.bf16.xpose.msra.mxu0 0
        %534 = vmatprep.subr.bf16.mxu0 0
        %535 = vmatpush1.bf16.xpose.msra.mxu0 0
        %536 = vmatprep.subr.bf16.mxu0 0
        %537 = vmatpush1.bf16.xpose.msra.mxu0 0
        %538 = vmatprep.subr.bf16.mxu0 0
        %539 = vmatpush1.bf16.xpose.msra.mxu0 0
        %540 = vmatprep.subr.bf16.mxu0 0
        %541 = vmatpush1.bf16.xpose.msra.mxu0 %v524
        %542 = vmatprep.subr.bf16.mxu0 0
        %543 = vmatpush2.bf16.xpose.msra.mxu0 0
        %544 = vmatprep.subr.bf16.mxu0 0
        %545 = vmatpush2.bf16.xpose.msra.mxu0 0
        %546 = vmatprep.subr.bf16.mxu0 0
        %547 = vmatpush2.bf16.xpose.msra.mxu0 0
        %548 = vmatprep.subr.bf16.mxu0 0
        %549 = vmatpush2.bf16.xpose.msra.mxu0 0
        %550 = vmatprep.subr.bf16.mxu0 0
        %551 = vmatpush2.bf16.xpose.msra.mxu0 0
        %552 = vmatprep.subr.bf16.mxu0 0
        %553 = vmatpush2.bf16.xpose.msra.mxu0 0
        %554 = vmatprep.subr.bf16.mxu0 0
        %555 = vmatpush2.bf16.xpose.msra.mxu0 0
        %556 = vmatprep.subr.bf16.mxu0 0
        %557 = vmatpush2.bf16.xpose.msra.mxu0 0
        %558 = vmatprep.mubr.bf16.mxu0 0
        %559 = vmatmul.mubr.bf16.gmra.mxu0 %v521
        %v560 = vpop.f32.mrf.mxu0
        %v561 = vadd.f32 0.0, %v560
        %v562 = vpop.f32.mrf.mxu0
        %v563 = vpop.f32.mrf.mxu0
        %v564 = vpop.f32.mrf.mxu0
        %565 = vdwg.mxu0
        %v566 = vmul.f32 %v561, 0.35355338
        %v567 = vsel %vm219, %v566, -1e+30
        %v568 = vld [vmem:[#allocation2] sm:$0xff]
        %v569 = vsel %vm227, %v567, -inf
        %570 = vmax.xlane.f32.xlu0 %v569
        %v571 = vpop.xlane.xlu0 %570
        %v572 = vmax.f32 %v568, %v571
        %574 = vset.pattern.permute.xlu0 2
        %575 = vperm.xlu0 %574, %v572
        %v576 = vpop.permute.xlu0 %575
        %v578 = vsub.f32 %v567, %v576
        %v579 = vmul.f32 %v578, 1.442695
        %v580 = vpow.pop %v579
        %v581 = vsub.f32 %v568, %v572
        %v582 = vmul.f32 %v581, 1.442695
        %v583 = vpow.pop %v582
        %v584 = vld [vmem:[#allocation3] sm:$0xff]
        %v585 = vmul.f32 %v583, %v584
        %v586 = vsel %vm227, %v580, 0.0
        %587 = vadd.xlane.f32.xlu0 %v586
        %v588 = vpop.xlane.xlu0 %587
        %v589 = vadd.f32 %v585, %v588
        %vm590 = vcmask 23568
        %591 = vst.msk [vmem:[#allocation3] sm:$0xff] %vm590, %v589
        %v592 = vpack.c.bf16 %v580, %v580
        %593 = vrot.lane.b32.xlu0 %v517, 48
        %v594 = vpop.permute.xlu0 %593
        %v596 = vsel %vm227, %v592, 0
        %v599 = vsel %vm306, %v594, 0
        %601 = vmatprep.subr.bf16.mxu0 0
        %602 = vmatpush1.bf16.msra.mxu0 0
        %603 = vmatprep.subr.bf16.mxu0 0
        %604 = vmatpush1.bf16.msra.mxu0 0
        %605 = vmatprep.subr.bf16.mxu0 0
        %606 = vmatpush1.bf16.msra.mxu0 0
        %607 = vmatprep.subr.bf16.mxu0 0
        %608 = vmatpush1.bf16.msra.mxu0 0
        %609 = vmatprep.subr.bf16.mxu0 0
        %610 = vmatpush1.bf16.msra.mxu0 0
        %611 = vmatprep.subr.bf16.mxu0 0
        %612 = vmatpush1.bf16.msra.mxu0 0
        %613 = vmatprep.subr.bf16.mxu0 0
        %614 = vmatpush1.bf16.msra.mxu0 0
        %615 = vmatprep.subr.bf16.mxu0 0
        %616 = vmatpush1.bf16.msra.mxu0 %v599
        %617 = vmatprep.subr.bf16.mxu0 0
        %618 = vmatpush2.bf16.msra.mxu0 0
        %619 = vmatprep.subr.bf16.mxu0 0
        %620 = vmatpush2.bf16.msra.mxu0 0
        %621 = vmatprep.subr.bf16.mxu0 0
        %622 = vmatpush2.bf16.msra.mxu0 0
        %623 = vmatprep.subr.bf16.mxu0 0
        %624 = vmatpush2.bf16.msra.mxu0 0
        %625 = vmatprep.subr.bf16.mxu0 0
        %626 = vmatpush2.bf16.msra.mxu0 0
        %627 = vmatprep.subr.bf16.mxu0 0
        %628 = vmatpush2.bf16.msra.mxu0 0
        %629 = vmatprep.subr.bf16.mxu0 0
        %630 = vmatpush2.bf16.msra.mxu0 0
        %631 = vmatprep.subr.bf16.mxu0 0
        %632 = vmatpush2.bf16.msra.mxu0 0
        %633 = vmatprep.mubr.bf16.mxu0 0
        %634 = vmatmul.mubr.bf16.gmra.mxu0 %v596
        %v635 = vpop.f32.mrf.mxu0
        %v636 = vadd.f32 0.0, %v635
        %v637 = vpop.f32.mrf.mxu0
        %v638 = vpop.f32.mrf.mxu0
        %v639 = vpop.f32.mrf.mxu0
        %640 = vdwg.mxu0
        %v641 = vld [vmem:[#allocation4] sm:$0xff]
        %643 = vset.pattern.permute.xlu0 2
        %644 = vperm.xlu0 %643, %v583
        %v645 = vpop.permute.xlu0 %644
        %v647 = vmul.f32 %v645, %v641
        %649 = vrot.lane.b32.xlu0 %v636, 16
        %v650 = vpop.permute.xlu0 %649
        %v652 = vadd.f32 %v647, %v650
        %vm653 = vcmask 195712
        %654 = vst.msk [vmem:[#allocation4] sm:$0xff] %vm653, %v652
        %655 = vst.msk [vmem:[#allocation2] sm:$0xff] %vm590, %v572
        %v656 = vld [vmem:[%s180] sm:$0xf]
        %v657 = vld [vmem:[%s186] sm:$0xf]
        %v659 = vunpack.c.l.b16 %v656
        %v660 = vpack.c.b16 %v659, %v659
        %661 = vrot.lane.b32.xlu0 %v660, 104
        %v662 = vpop.permute.xlu0 %661
        %v664 = vunpack.c.l.b16 %v657
        %v665 = vpack.c.b16 %v664, %v664
        %666 = vrot.lane.b32.xlu0 %v665, 72
        %v667 = vpop.permute.xlu0 %666
        %v669 = vsel %vm227, %v662, 0
        %v672 = vsel %vm227, %v667, 0
        %674 = vmatprep.subr.bf16.mxu0 0
        %675 = vmatpush1.bf16.xpose.msra.mxu0 0
        %676 = vmatprep.subr.bf16.mxu0 0
        %677 = vmatpush1.bf16.xpose.msra.mxu0 0
        %678 = vmatprep.subr.bf16.mxu0 0
        %679 = vmatpush1.bf16.xpose.msra.mxu0 0
        %680 = vmatprep.subr.bf16.mxu0 0
        %681 = vmatpush1.bf16.xpose.msra.mxu0 0
        %682 = vmatprep.subr.bf16.mxu0 0
        %683 = vmatpush1.bf16.xpose.msra.mxu0 0
        %684 = vmatprep.subr.bf16.mxu0 0
        %685 = vmatpush1.bf16.xpose.msra.mxu0 0
        %686 = vmatprep.subr.bf16.mxu0 0
        %687 = vmatpush1.bf16.xpose.msra.mxu0 0
        %688 = vmatprep.subr.bf16.mxu0 0
        %689 = vmatpush1.bf16.xpose.msra.mxu0 %v672
        %690 = vmatprep.subr.bf16.mxu0 0
        %691 = vmatpush2.bf16.xpose.msra.mxu0 0
        %692 = vmatprep.subr.bf16.mxu0 0
        %693 = vmatpush2.bf16.xpose.msra.mxu0 0
        %694 = vmatprep.subr.bf16.mxu0 0
        %695 = vmatpush2.bf16.xpose.msra.mxu0 0
        %696 = vmatprep.subr.bf16.mxu0 0
        %697 = vmatpush2.bf16.xpose.msra.mxu0 0
        %698 = vmatprep.subr.bf16.mxu0 0
        %699 = vmatpush2.bf16.xpose.msra.mxu0 0
        %700 = vmatprep.subr.bf16.mxu0 0
        %701 = vmatpush2.bf16.xpose.msra.mxu0 0
        %702 = vmatprep.subr.bf16.mxu0 0
        %703 = vmatpush2.bf16.xpose.msra.mxu0 0
        %704 = vmatprep.subr.bf16.mxu0 0
        %705 = vmatpush2.bf16.xpose.msra.mxu0 0
        %706 = vmatprep.mubr.bf16.mxu0 0
        %707 = vmatmul.mubr.bf16.gmra.mxu0 %v669
        %v708 = vpop.f32.mrf.mxu0
        %v709 = vadd.f32 0.0, %v708
        %v710 = vpop.f32.mrf.mxu0
        %v711 = vpop.f32.mrf.mxu0
        %v712 = vpop.f32.mrf.mxu0
        %713 = vdwg.mxu0
        %v714 = vmul.f32 %v709, 0.35355338
        %v715 = vsel %vm219, %v714, -1e+30
        %v716 = vld [vmem:[#allocation2] sm:$0xff]
        %v717 = vsel %vm227, %v715, -inf
        %718 = vmax.xlane.f32.xlu0 %v717
        %v719 = vpop.xlane.xlu0 %718
        %v720 = vmax.f32 %v716, %v719
        %722 = vset.pattern.permute.xlu0 3
        %723 = vperm.xlu0 %722, %v720
        %v724 = vpop.permute.xlu0 %723
        %v726 = vsub.f32 %v715, %v724
        %v727 = vmul.f32 %v726, 1.442695
        %v728 = vpow.pop %v727
        %v729 = vsub.f32 %v716, %v720
        %v730 = vmul.f32 %v729, 1.442695
        %v731 = vpow.pop %v730
        %v732 = vld [vmem:[#allocation3] sm:$0xff]
        %v733 = vmul.f32 %v731, %v732
        %v734 = vsel %vm227, %v728, 0.0
        %735 = vadd.xlane.f32.xlu0 %v734
        %v736 = vpop.xlane.xlu0 %735
        %v737 = vadd.f32 %v733, %v736
        %vm738 = vcmask 31768
        %739 = vst.msk [vmem:[#allocation3] sm:$0xff] %vm738, %v737
        %v740 = vpack.c.bf16 %v728, %v728
        %741 = vrot.lane.b32.xlu0 %v665, 40
        %v742 = vpop.permute.xlu0 %741
        %v744 = vsel %vm227, %v740, 0
        %v747 = vsel %vm306, %v742, 0
        %749 = vmatprep.subr.bf16.mxu0 0
        %750 = vmatpush1.bf16.msra.mxu0 0
        %751 = vmatprep.subr.bf16.mxu0 0
        %752 = vmatpush1.bf16.msra.mxu0 0
        %753 = vmatprep.subr.bf16.mxu0 0
        %754 = vmatpush1.bf16.msra.mxu0 0
        %755 = vmatprep.subr.bf16.mxu0 0
        %756 = vmatpush1.bf16.msra.mxu0 0
        %757 = vmatprep.subr.bf16.mxu0 0
        %758 = vmatpush1.bf16.msra.mxu0 0
        %759 = vmatprep.subr.bf16.mxu0 0
        %760 = vmatpush1.bf16.msra.mxu0 0
        %761 = vmatprep.subr.bf16.mxu0 0
        %762 = vmatpush1.bf16.msra.mxu0 0
        %763 = vmatprep.subr.bf16.mxu0 0
        %764 = vmatpush1.bf16.msra.mxu0 %v747
        %765 = vmatprep.subr.bf16.mxu0 0
        %766 = vmatpush2.bf16.msra.mxu0 0
        %767 = vmatprep.subr.bf16.mxu0 0
        %768 = vmatpush2.bf16.msra.mxu0 0
        %769 = vmatprep.subr.bf16.mxu0 0
        %770 = vmatpush2.bf16.msra.mxu0 0
        %771 = vmatprep.subr.bf16.mxu0 0
        %772 = vmatpush2.bf16.msra.mxu0 0
        %773 = vmatprep.subr.bf16.mxu0 0
        %774 = vmatpush2.bf16.msra.mxu0 0
        %775 = vmatprep.subr.bf16.mxu0 0
        %776 = vmatpush2.bf16.msra.mxu0 0
        %777 = vmatprep.subr.bf16.mxu0 0
        %778 = vmatpush2.bf16.msra.mxu0 0
        %779 = vmatprep.subr.bf16.mxu0 0
        %780 = vmatpush2.bf16.msra.mxu0 0
        %781 = vmatprep.mubr.bf16.mxu0 0
        %782 = vmatmul.mubr.bf16.gmra.mxu0 %v744
        %v783 = vpop.f32.mrf.mxu0
        %v784 = vadd.f32 0.0, %v783
        %v785 = vpop.f32.mrf.mxu0
        %v786 = vpop.f32.mrf.mxu0
        %v787 = vpop.f32.mrf.mxu0
        %788 = vdwg.mxu0
        %v789 = vld [vmem:[#allocation4] sm:$0xff]
        %791 = vset.pattern.permute.xlu0 3
        %792 = vperm.xlu0 %791, %v731
        %v793 = vpop.permute.xlu0 %792
        %v795 = vmul.f32 %v793, %v789
        %797 = vrot.lane.b32.xlu0 %v784, 24
        %v798 = vpop.permute.xlu0 %797
        %v800 = vadd.f32 %v795, %v798
        %vm801 = vcmask 261312
        %802 = vst.msk [vmem:[#allocation4] sm:$0xff] %vm801, %v800
        %803 = vst.msk [vmem:[#allocation2] sm:$0xff] %vm738, %v720
      $region36: #{_lambda_.12} parent=27 // pred_fallthru
        _
      // Predicated region
      $region37: #{_lambda_.12} parent=27 // pred_check
        %p804 = pneg %p195
      $region38: #{_lambda_.12} parent=27 // pred_check_branch
        %806 = sbr.rel (%p804) target = $region40
      $region39: #{_lambda_.12} parent=27 // pred_region
        %v807 = vld [vmem:[#allocation3] sm:$0xff]
        %v808 = vrcp.pop %v807
        %v809 = vld [vmem:[#allocation4] sm:$0xff]
        %811 = vset.pattern.permute.xlu0 0
        %812 = vperm.xlu0 %811, %v808
        %v813 = vpop.permute.xlu0 %812
        %v815 = vmul.f32 %v809, %v813
        %v816 = vpack.c.bf16 %v815, %v815
        %vm817 = vcmask 60416
        %818 = vst.msk [vmem:[%s192] sm:$0xf] %vm817, %v816
        %v819 = vld [vmem:[#allocation3] sm:$0xff]
        %v820 = vrcp.pop %v819
        %v821 = vld [vmem:[#allocation4] sm:$0xff]
        %823 = vset.pattern.permute.xlu0 1
        %824 = vperm.xlu0 %823, %v820
        %v825 = vpop.permute.xlu0 %824
        %v827 = vmul.f32 %v821, %v825
        %v828 = vpack.c.bf16 %v827, %v827
        %vm829 = vcmask 126016
        %830 = vst.msk [vmem:[%s192] sm:$0xf] %vm829, %v828
        %v831 = vld [vmem:[#allocation3] sm:$0xff]
        %v832 = vrcp.pop %v831
        %v833 = vld [vmem:[#allocation4] sm:$0xff]
        %835 = vset.pattern.permute.xlu0 2
        %836 = vperm.xlu0 %835, %v832
        %v837 = vpop.permute.xlu0 %836
        %v839 = vmul.f32 %v833, %v837
        %v840 = vpack.c.bf16 %v839, %v839
        %vm841 = vcmask 191616
        %842 = vst.msk [vmem:[%s192] sm:$0xf] %vm841, %v840
        %v843 = vld [vmem:[#allocation3] sm:$0xff]
        %v844 = vrcp.pop %v843
        %v845 = vld [vmem:[#allocation4] sm:$0xff]
        %847 = vset.pattern.permute.xlu0 3
        %848 = vperm.xlu0 %847, %v844
        %v849 = vpop.permute.xlu0 %848
        %v851 = vmul.f32 %v845, %v849
        %v852 = vpack.c.bf16 %v851, %v851
        %vm853 = vcmask 257216
        %854 = vst.msk [vmem:[%s192] sm:$0xf] %vm853, %v852
      $region40: #{_lambda_.12} parent=27 // pred_fallthru
        _
      %s855 = sadd.s32 %s18, %s19
      %p856 = scmp.lt.s32.totalorder %s855, 1
      %s857 = scalar_select %p856, %s855, 1
      %s858 = smul.addr %s857, 4
      %s859 = scalar_lea.vmem %s2, %s858
      // Predicated region
      $region41: #{_lambda_.12} parent=27 // pred_check
        %p860 = pneg %p108
      $region42: #{_lambda_.12} parent=27 // pred_check_branch
        %862 = sbr.rel (%p860) target = $region44
      $region43: #{_lambda_.12} parent=27 // pred_region
        %s863 = sadd.s32 %s18, %s19
      $region44: #{_lambda_.12} parent=27 // pred_fallthru
        _
    $region28: #{_lambda_.12} parent=5 // pred_fallthru
      _
    %p864 = scmp.le.s32.totalorder 2, %s8
    // Predicated region
    $region45: #{_lambda_.12} parent=5 // pred_check
      %p865 = pneg %p864
    $region46: #{_lambda_.12} parent=5 // pred_check_branch
      %867 = sbr.rel (%p865) target = $region48
    $region47: #{_lambda_.12} parent=5 // pred_region
      %s868 = ssub.s32 %s8, 2
      // Predicated region
      $region49: #{_lambda_.12} parent=47 // pred_check
        %p869 = pneg %p114
      $region50: #{_lambda_.12} parent=47 // pred_check_branch
        %871 = sbr.rel (%p869) target = $region52
      $region51: #{_lambda_.12} parent=47 // pred_region
        %s872 = sadd.s32 %s21, %s22
        %p873 = scmp.lt.s32.totalorder %s872, 1
        %s874 = scalar_select %p873, %s872, 1
        %s875 = smul.addr %s874, 4
        %s876 = scalar_lea.vmem %s2, %s875
      $region52: #{_lambda_.12} parent=47 // pred_fallthru
        _
    $region48: #{_lambda_.12} parent=5 // pred_fallthru
      _
  $region6: #{_lambda_.12} parent=0 // loop_footer
    %s12 = sadd.s32 1, %s8
  $region7: #{_lambda_.12} parent=0 // loop_footer_branch
    %7 = sbr.rel target = $region3
  $region8: #{_lambda_.12} parent=0 // loop_exit
    _

// kernel: _lambda_.14
$region0: #{_lambda_.14}
  #allocation0 [shape = 'u32[]', space=smem, size = 0x4, offset = 0x4, fixed_abs, tag = 'smem constant byte address 0x4 - core index']
  #allocation1 [shape = 'u32[144,128]{1,0:T(1,128)}', space=vmem, size = 0x12000, scoped, tag = 'internal scratch']
  #allocation2 [shape = 'bf16[16,32]{1,0:T(8,128)(2,1)}', space=vmem, size = 0x1000, scoped, tag = 'scratch operand']
  #allocation3 [shape = 'bf16[16,8]{1,0:T(8,128)(2,1)}', space=vmem, size = 0x1000, scoped, tag = 'scratch operand']
  %s0 = inlined_call_operand.vmem [shape: bf16[16,32], index: 0, kind: input, shape index: {}]
  %s1 = inlined_call_operand.vmem [shape: f32[1,32], index: 1, kind: input, shape index: {}]
  %s2 = inlined_call_operand.vmem [shape: f32[1,32], index: 2, kind: input, shape index: {}]
  %s3 = inlined_call_operand.vmem [shape: bf16[32,96], index: 3, kind: input, shape index: {}]
  %s4 = inlined_call_operand.vmem [shape: bf16[32,96], index: 4, kind: input, shape index: {}]
  %s5 = inlined_call_operand.vmem [shape: bf16[32,8], index: 5, kind: input, shape index: {}]
  %s6 = inlined_call_operand.vmem [shape: bf16[8,96], index: 6, kind: input, shape index: {}]
  %s7 = inlined_call_operand.vmem [shape: bf16[8,96], index: 7, kind: input, shape index: {}]
  %s8 = inlined_call_operand.vmem [shape: bf16[16,96], index: 8, kind: output, shape index: {}]
  %s9 = sld [smem:[#allocation0]]
  $region46: #{_lambda_.14} parent=0
    _
  %s11 = ssub.s32 1, %s9
  %s12 = scalar_select 0, %s11, %s9
  // Predicated region
  $region2: #{_lambda_.14} parent=0 // pred_check
    _
  $region3: #{_lambda_.14} parent=0 // pred_check_branch
    %14 = sbr.rel (0) target = $region5
  $region4: #{_lambda_.14} parent=0 // pred_region
    _
  $region5: #{_lambda_.14} parent=0 // pred_fallthru
    _
  // Predicated region
  $region6: #{_lambda_.14} parent=0 // pred_check
    _
  $region7: #{_lambda_.14} parent=0 // pred_check_branch
    %16 = sbr.rel (0) target = $region9
  $region8: #{_lambda_.14} parent=0 // pred_region
    _
  $region9: #{_lambda_.14} parent=0 // pred_fallthru
    _
  // Predicated region
  $region10: #{_lambda_.14} parent=0 // pred_check
    _
  $region11: #{_lambda_.14} parent=0 // pred_check_branch
    %18 = sbr.rel (0) target = $region13
  $region12: #{_lambda_.14} parent=0 // pred_region
    _
  $region13: #{_lambda_.14} parent=0 // pred_fallthru
    _
  // Predicated region
  $region14: #{_lambda_.14} parent=0 // pred_check
    _
  $region15: #{_lambda_.14} parent=0 // pred_check_branch
    %20 = sbr.rel (0) target = $region17
  $region16: #{_lambda_.14} parent=0 // pred_region
    _
  $region17: #{_lambda_.14} parent=0 // pred_fallthru
    _
  // Predicated region
  $region18: #{_lambda_.14} parent=0 // pred_check
    _
  $region19: #{_lambda_.14} parent=0 // pred_check_branch
    %22 = sbr.rel (0) target = $region21
  $region20: #{_lambda_.14} parent=0 // pred_region
    _
  $region21: #{_lambda_.14} parent=0 // pred_fallthru
    _
  // Predicated region
  $region22: #{_lambda_.14} parent=0 // pred_check
    _
  $region23: #{_lambda_.14} parent=0 // pred_check_branch
    %24 = sbr.rel (0) target = $region25
  $region24: #{_lambda_.14} parent=0 // pred_region
    _
  $region25: #{_lambda_.14} parent=0 // pred_fallthru
    _
  // Predicated region
  $region26: #{_lambda_.14} parent=0 // pred_check
    _
  $region27: #{_lambda_.14} parent=0 // pred_check_branch
    %26 = sbr.rel (0) target = $region29
  $region28: #{_lambda_.14} parent=0 // pred_region
    _
  $region29: #{_lambda_.14} parent=0 // pred_fallthru
    _
  // Predicated region
  $region30: #{_lambda_.14} parent=0 // pred_check
    _
  $region31: #{_lambda_.14} parent=0 // pred_check_branch
    %28 = sbr.rel (0) target = $region33
  $region32: #{_lambda_.14} parent=0 // pred_region
    _
  $region33: #{_lambda_.14} parent=0 // pred_fallthru
    _
  %p30 = scmp.eq.s32.totalorder 0, 0
  // Predicated region
  $region34: #{_lambda_.14} parent=0 // pred_check
    %p31 = pneg %p30
  $region35: #{_lambda_.14} parent=0 // pred_check_branch
    %33 = sbr.rel (%p31) target = $region37
  $region36: #{_lambda_.14} parent=0 // pred_region
    %v34 = vld [vmem:[%s0] sm:$0xf]
    %v35 = vld [vmem:[%s0 + $0x4] sm:$0xf]
    %v36 = vunpack.c.l.bf16 %v34
    %v37 = vunpack.c.l.bf16 %v35
    %vm38 = vcmask 261120
    %v39 = vsel %vm38, %v36, 0.0
    %40 = vadd.xlane.f32.xlu0 %v39
    %v41 = vpop.xlane.xlu0 %40
    %v42 = vsel %vm38, %v37, 0.0
    %43 = vadd.xlane.f32.xlu0 %v42
    %v44 = vpop.xlane.xlu0 %43
    %v45 = vrcp.pop 32.0
    %v46 = vmul.f32 %v41, %v45
    %v47 = vmul.f32 %v44, %v45
    %v48 = vmul.f32 %v36, %v36
    %v49 = vmul.f32 %v37, %v37
    %v50 = vsel %vm38, %v48, 0.0
    %51 = vadd.xlane.f32.xlu0 %v50
    %v52 = vpop.xlane.xlu0 %51
    %v53 = vsel %vm38, %v49, 0.0
    %54 = vadd.xlane.f32.xlu0 %v53
    %v55 = vpop.xlane.xlu0 %54
    %v56 = vmul.f32 %v52, %v45
    %v57 = vmul.f32 %v55, %v45
    %v58 = vmul.f32 %v46, %v46
    %v59 = vmul.f32 %v47, %v47
    %v60 = vsub.f32 %v56, %v58
    %v61 = vsub.f32 %v57, %v59
    %v62 = vsub.f32 %v36, %v46
    %v63 = vsub.f32 %v37, %v47
    %v64 = vadd.f32 %v60, 1e-05
    %v65 = vadd.f32 %v61, 1e-05
    %v66 = vrsqrt.pop %v64
    %v67 = vrsqrt.pop %v65
    %v68 = vmul.f32 %v62, %v66
    %v69 = vmul.f32 %v63, %v67
    %v70 = vld [vmem:[%s1] sm:$0x1]
    %v72 = vlaneseq
    %v73 = vshrl.u32 %v72, 7
    %v74 = vsub.s32 0, %v73
    %v75 = vrot.slane %v70, %v74
    %v77 = vmul.f32 %v68, %v75
    %v78 = vmul.f32 %v69, %v75
    %v79 = vld [vmem:[%s2] sm:$0x1]
    %v81 = vlaneseq
    %v82 = vshrl.u32 %v81, 7
    %v83 = vsub.s32 0, %v82
    %v84 = vrot.slane %v79, %v83
    %v86 = vadd.f32 %v77, %v84
    %v87 = vadd.f32 %v78, %v84
    %v88 = vpack.c.bf16 %v87, %v86
    %v90 = vunpack.c.l.b16 %v88
    %v91 = vunpack.c.h.b16 %v88
    %v92 = vpack.c.b16 %v90, %v90
    %v93 = vpack.c.b16 %v91, %v91
    %vm96 = vcmask 257024
    %97 = vst.msk [vmem:[#allocation2] sm:$0xf] %vm96, %v92
    %98 = vst.msk [vmem:[#allocation2 + $0x4] sm:$0xf] %vm96, %v93
    %v99 = vld [vmem:[#allocation2] sm:$0xf]
    %v100 = vld [vmem:[#allocation2 + $0x4] sm:$0xf]
    %v101 = vld [vmem:[%s5] sm:$0xf]
    %v102 = vld [vmem:[%s5 + $0x4] sm:$0xf]
    %v103 = vld [vmem:[%s5 + $0x8] sm:$0xf]
    %v104 = vld [vmem:[%s5 + $0xc] sm:$0xf]
    %v107 = vunpack.c.l.b16 %v99
    %v108 = vunpack.c.l.b16 %v100
    %v109 = vpack.c.b16 %v108, %v107
    %v114 = vunpack.c.l.b16 %v101
    %v115 = vunpack.c.l.b16 %v102
    %v116 = vunpack.c.l.b16 %v103
    %v117 = vunpack.c.l.b16 %v104
    %v118 = vpack.c.b16 %v115, %v114
    %v119 = vpack.c.b16 %v117, %v116
    %v123 = vsel %vm38, %v109, 0
    %125 = vmatprep.subr.bf16.mxu0 0
    %126 = vmatpush1.bf16.msra.mxu0 0
    %127 = vmatprep.subr.bf16.mxu0 0
    %128 = vmatpush1.bf16.msra.mxu0 0
    %129 = vmatprep.subr.bf16.mxu0 0
    %130 = vmatpush1.bf16.msra.mxu0 0
    %131 = vmatprep.subr.bf16.mxu0 0
    %132 = vmatpush1.bf16.msra.mxu0 0
    %133 = vmatprep.subr.bf16.mxu0 0
    %134 = vmatpush1.bf16.msra.mxu0 0
    %135 = vmatprep.subr.bf16.mxu0 0
    %136 = vmatpush1.bf16.msra.mxu0 0
    %137 = vmatprep.subr.bf16.mxu0 0
    %138 = vmatpush1.bf16.msra.mxu0 %v119
    %139 = vmatprep.subr.bf16.mxu0 0
    %140 = vmatpush1.bf16.msra.mxu0 %v118
    %141 = vmatprep.subr.bf16.mxu0 0
    %142 = vmatpush2.bf16.msra.mxu0 0
    %143 = vmatprep.subr.bf16.mxu0 0
    %144 = vmatpush2.bf16.msra.mxu0 0
    %145 = vmatprep.subr.bf16.mxu0 0
    %146 = vmatpush2.bf16.msra.mxu0 0
    %147 = vmatprep.subr.bf16.mxu0 0
    %148 = vmatpush2.bf16.msra.mxu0 0
    %149 = vmatprep.subr.bf16.mxu0 0
    %150 = vmatpush2.bf16.msra.mxu0 0
    %151 = vmatprep.subr.bf16.mxu0 0
    %152 = vmatpush2.bf16.msra.mxu0 0
    %153 = vmatprep.subr.bf16.mxu0 0
    %154 = vmatpush2.bf16.msra.mxu0 0
    %155 = vmatprep.subr.bf16.mxu0 0
    %156 = vmatpush2.bf16.msra.mxu0 0
    %157 = vmatprep.mubr.bf16.mxu0 0
    %158 = vmatmul.mubr.bf16.gmra.mxu0 %v123
    %v159 = vpop.f32.mrf.mxu0
    %v160 = vadd.f32 0.0, %v159
    %v161 = vpop.f32.mrf.mxu0
    %v162 = vpop.f32.mrf.mxu0
    %v163 = vadd.f32 0.0, %v162
    %v164 = vpop.f32.mrf.mxu0
    %165 = vdwg.mxu0
    %v166 = vpack.c.bf16 %v163, %v160
    %v168 = vunpack.c.l.b16 %v166
    %v169 = vunpack.c.h.b16 %v166
    %v170 = vpack.c.b16 %v168, %v168
    %v171 = vpack.c.b16 %v169, %v169
    %vm174 = vcmask 60416
    %175 = vst.msk [vmem:[#allocation3] sm:$0xf] %vm174, %v170
    %176 = vst.msk [vmem:[#allocation3 + $0x4] sm:$0xf] %vm174, %v171
  $region37: #{_lambda_.14} parent=0 // pred_fallthru
    _
  %v177 = vld [vmem:[#allocation2] sm:$0xf]
  %v178 = vld [vmem:[#allocation2 + $0x4] sm:$0xf]
  %v179 = vld [vmem:[#allocation3] sm:$0xf]
  %v180 = vld [vmem:[#allocation3 + $0x4] sm:$0xf]
  %v181 = vld [vmem:[%s3] sm:$0xf]
  %v182 = vld [vmem:[%s3 + $0x4] sm:$0xf]
  %v183 = vld [vmem:[%s3 + $0x8] sm:$0xf]
  %v184 = vld [vmem:[%s3 + $0xc] sm:$0xf]
  %v185 = vld [vmem:[%s6] sm:$0xf]
  %v188 = vunpack.c.l.b16 %v179
  %v189 = vunpack.c.l.b16 %v180
  %v190 = vpack.c.b16 %v189, %v188
  %vm191 = vcmask 64512
  %v193 = vsel %vm191, %v190, 0
  %vm195 = vcmask 1043456
  %v197 = vsel %vm195, %v185, 0
  %199 = vmatprep.subr.bf16.mxu0 0
  %200 = vmatpush1.bf16.msra.mxu0 0
  %201 = vmatprep.subr.bf16.mxu0 0
  %202 = vmatpush1.bf16.msra.mxu0 0
  %203 = vmatprep.subr.bf16.mxu0 0
  %204 = vmatpush1.bf16.msra.mxu0 0
  %205 = vmatprep.subr.bf16.mxu0 0
  %206 = vmatpush1.bf16.msra.mxu0 0
  %207 = vmatprep.subr.bf16.mxu0 0
  %208 = vmatpush1.bf16.msra.mxu0 0
  %209 = vmatprep.subr.bf16.mxu0 0
  %210 = vmatpush1.bf16.msra.mxu0 0
  %211 = vmatprep.subr.bf16.mxu0 0
  %212 = vmatpush1.bf16.msra.mxu0 0
  %213 = vmatprep.subr.bf16.mxu0 0
  %214 = vmatpush1.bf16.msra.mxu0 %v197
  %215 = vmatprep.subr.bf16.mxu0 0
  %216 = vmatpush2.bf16.msra.mxu0 0
  %217 = vmatprep.subr.bf16.mxu0 0
  %218 = vmatpush2.bf16.msra.mxu0 0
  %219 = vmatprep.subr.bf16.mxu0 0
  %220 = vmatpush2.bf16.msra.mxu0 0
  %221 = vmatprep.subr.bf16.mxu0 0
  %222 = vmatpush2.bf16.msra.mxu0 0
  %223 = vmatprep.subr.bf16.mxu0 0
  %224 = vmatpush2.bf16.msra.mxu0 0
  %225 = vmatprep.subr.bf16.mxu0 0
  %226 = vmatpush2.bf16.msra.mxu0 0
  %227 = vmatprep.subr.bf16.mxu0 0
  %228 = vmatpush2.bf16.msra.mxu0 0
  %229 = vmatprep.subr.bf16.mxu0 0
  %230 = vmatpush2.bf16.msra.mxu0 0
  %231 = vmatprep.mubr.bf16.mxu0 0
  %232 = vmatmul.mubr.bf16.gmra.mxu0 %v193
  %v233 = vpop.f32.mrf.mxu0
  %v234 = vadd.f32 0.0, %v233
  %v235 = vpop.f32.mrf.mxu0
  %v236 = vpop.f32.mrf.mxu0
  %v237 = vadd.f32 0.0, %v236
  %v238 = vpop.f32.mrf.mxu0
  %239 = vdwg.mxu0
  %v242 = vunpack.c.l.b16 %v177
  %v243 = vunpack.c.l.b16 %v178
  %v244 = vpack.c.b16 %v243, %v242
  %v249 = vunpack.c.l.b16 %v181
  %v250 = vunpack.c.l.b16 %v182
  %v251 = vunpack.c.l.b16 %v183
  %v252 = vunpack.c.l.b16 %v184
  %v253 = vpack.c.b16 %v250, %v249
  %v254 = vpack.c.b16 %v252, %v251
  %vm257 = vcmask 261120
  %v259 = vsel %vm257, %v244, 0
  %261 = vmatprep.subr.bf16.mxu0 0
  %262 = vmatpush1.bf16.msra.mxu0 0
  %263 = vmatprep.subr.bf16.mxu0 0
  %264 = vmatpush1.bf16.msra.mxu0 0
  %265 = vmatprep.subr.bf16.mxu0 0
  %266 = vmatpush1.bf16.msra.mxu0 0
  %267 = vmatprep.subr.bf16.mxu0 0
  %268 = vmatpush1.bf16.msra.mxu0 0
  %269 = vmatprep.subr.bf16.mxu0 0
  %270 = vmatpush1.bf16.msra.mxu0 0
  %271 = vmatprep.subr.bf16.mxu0 0
  %272 = vmatpush1.bf16.msra.mxu0 0
  %273 = vmatprep.subr.bf16.mxu0 0
  %274 = vmatpush1.bf16.msra.mxu0 %v254
  %275 = vmatprep.subr.bf16.mxu0 0
  %276 = vmatpush1.bf16.msra.mxu0 %v253
  %277 = vmatprep.subr.bf16.mxu0 0
  %278 = vmatpush2.bf16.msra.mxu0 0
  %279 = vmatprep.subr.bf16.mxu0 0
  %280 = vmatpush2.bf16.msra.mxu0 0
  %281 = vmatprep.subr.bf16.mxu0 0
  %282 = vmatpush2.bf16.msra.mxu0 0
  %283 = vmatprep.subr.bf16.mxu0 0
  %284 = vmatpush2.bf16.msra.mxu0 0
  %285 = vmatprep.subr.bf16.mxu0 0
  %286 = vmatpush2.bf16.msra.mxu0 0
  %287 = vmatprep.subr.bf16.mxu0 0
  %288 = vmatpush2.bf16.msra.mxu0 0
  %289 = vmatprep.subr.bf16.mxu0 0
  %290 = vmatpush2.bf16.msra.mxu0 0
  %291 = vmatprep.subr.bf16.mxu0 0
  %292 = vmatpush2.bf16.msra.mxu0 0
  %293 = vmatprep.mubr.bf16.mxu0 0
  %294 = vmatmul.mubr.bf16.gmra.mxu0 %v259
  %v295 = vpop.f32.mrf.mxu0
  %v296 = vadd.f32 %v234, %v295
  %v297 = vpop.f32.mrf.mxu0
  %v298 = vpop.f32.mrf.mxu0
  %v299 = vadd.f32 %v237, %v298
  %v300 = vpop.f32.mrf.mxu0
  %301 = vdwg.mxu0
  %v302 = vld [vmem:[%s4] sm:$0xf]
  %v303 = vld [vmem:[%s4 + $0x4] sm:$0xf]
  %v304 = vld [vmem:[%s4 + $0x8] sm:$0xf]
  %v305 = vld [vmem:[%s4 + $0xc] sm:$0xf]
  %v306 = vld [vmem:[%s7] sm:$0xf]
  %v308 = vsel %vm195, %v306, 0
  %310 = vmatprep.subr.bf16.mxu0 0
  %311 = vmatpush1.bf16.msra.mxu0 0
  %312 = vmatprep.subr.bf16.mxu0 0
  %313 = vmatpush1.bf16.msra.mxu0 0
  %314 = vmatprep.subr.bf16.mxu0 0
  %315 = vmatpush1.bf16.msra.mxu0 0
  %316 = vmatprep.subr.bf16.mxu0 0
  %317 = vmatpush1.bf16.msra.mxu0 0
  %318 = vmatprep.subr.bf16.mxu0 0
  %319 = vmatpush1.bf16.msra.mxu0 0
  %320 = vmatprep.subr.bf16.mxu0 0
  %321 = vmatpush1.bf16.msra.mxu0 0
  %322 = vmatprep.subr.bf16.mxu0 0
  %323 = vmatpush1.bf16.msra.mxu0 0
  %324 = vmatprep.subr.bf16.mxu0 0
  %325 = vmatpush1.bf16.msra.mxu0 %v308
  %326 = vmatprep.subr.bf16.mxu0 0
  %327 = vmatpush2.bf16.msra.mxu0 0
  %328 = vmatprep.subr.bf16.mxu0 0
  %329 = vmatpush2.bf16.msra.mxu0 0
  %330 = vmatprep.subr.bf16.mxu0 0
  %331 = vmatpush2.bf16.msra.mxu0 0
  %332 = vmatprep.subr.bf16.mxu0 0
  %333 = vmatpush2.bf16.msra.mxu0 0
  %334 = vmatprep.subr.bf16.mxu0 0
  %335 = vmatpush2.bf16.msra.mxu0 0
  %336 = vmatprep.subr.bf16.mxu0 0
  %337 = vmatpush2.bf16.msra.mxu0 0
  %338 = vmatprep.subr.bf16.mxu0 0
  %339 = vmatpush2.bf16.msra.mxu0 0
  %340 = vmatprep.subr.bf16.mxu0 0
  %341 = vmatpush2.bf16.msra.mxu0 0
  %342 = vmatprep.mubr.bf16.mxu0 0
  %343 = vmatmul.mubr.bf16.gmra.mxu0 %v193
  %v344 = vpop.f32.mrf.mxu0
  %v345 = vadd.f32 0.0, %v344
  %v346 = vpop.f32.mrf.mxu0
  %v347 = vpop.f32.mrf.mxu0
  %v348 = vadd.f32 0.0, %v347
  %v349 = vpop.f32.mrf.mxu0
  %350 = vdwg.mxu0
  %v355 = vunpack.c.l.b16 %v302
  %v356 = vunpack.c.l.b16 %v303
  %v357 = vunpack.c.l.b16 %v304
  %v358 = vunpack.c.l.b16 %v305
  %v359 = vpack.c.b16 %v356, %v355
  %v360 = vpack.c.b16 %v358, %v357
  %363 = vmatprep.subr.bf16.mxu0 0
  %364 = vmatpush1.bf16.msra.mxu0 0
  %365 = vmatprep.subr.bf16.mxu0 0
  %366 = vmatpush1.bf16.msra.mxu0 0
  %367 = vmatprep.subr.bf16.mxu0 0
  %368 = vmatpush1.bf16.msra.mxu0 0
  %369 = vmatprep.subr.bf16.mxu0 0
  %370 = vmatpush1.bf16.msra.mxu0 0
  %371 = vmatprep.subr.bf16.mxu0 0
  %372 = vmatpush1.bf16.msra.mxu0 0
  %373 = vmatprep.subr.bf16.mxu0 0
  %374 = vmatpush1.bf16.msra.mxu0 0
  %375 = vmatprep.subr.bf16.mxu0 0
  %376 = vmatpush1.bf16.msra.mxu0 %v360
  %377 = vmatprep.subr.bf16.mxu0 0
  %378 = vmatpush1.bf16.msra.mxu0 %v359
  %379 = vmatprep.subr.bf16.mxu0 0
  %380 = vmatpush2.bf16.msra.mxu0 0
  %381 = vmatprep.subr.bf16.mxu0 0
  %382 = vmatpush2.bf16.msra.mxu0 0
  %383 = vmatprep.subr.bf16.mxu0 0
  %384 = vmatpush2.bf16.msra.mxu0 0
  %385 = vmatprep.subr.bf16.mxu0 0
  %386 = vmatpush2.bf16.msra.mxu0 0
  %387 = vmatprep.subr.bf16.mxu0 0
  %388 = vmatpush2.bf16.msra.mxu0 0
  %389 = vmatprep.subr.bf16.mxu0 0
  %390 = vmatpush2.bf16.msra.mxu0 0
  %391 = vmatprep.subr.bf16.mxu0 0
  %392 = vmatpush2.bf16.msra.mxu0 0
  %393 = vmatprep.subr.bf16.mxu0 0
  %394 = vmatpush2.bf16.msra.mxu0 0
  %395 = vmatprep.mubr.bf16.mxu0 0
  %396 = vmatmul.mubr.bf16.gmra.mxu0 %v259
  %v397 = vpop.f32.mrf.mxu0
  %v398 = vadd.f32 %v345, %v397
  %v399 = vpop.f32.mrf.mxu0
  %v400 = vpop.f32.mrf.mxu0
  %v401 = vadd.f32 %v348, %v400
  %v402 = vpop.f32.mrf.mxu0
  %403 = vdwg.mxu0
  %v404 = vxor.u32 %v296, 2147483648
  %v405 = vxor.u32 %v299, 2147483648
  %v406 = vmul.f32 %v404, 1.442695
  %v407 = vpow.pop %v406
  %v408 = vmul.f32 %v405, 1.442695
  %v409 = vpow.pop %v408
  %v410 = vadd.f32 %v407, 1.0
  %v411 = vadd.f32 %v409, 1.0
  %v412 = vrcp.pop %v410
  %v413 = vmul.f32 1.0, %v412
  %v414 = vrcp.pop %v411
  %v415 = vmul.f32 1.0, %v414
  %v416 = vmul.f32 %v296, %v413
  %v417 = vmul.f32 %v299, %v415
  %v418 = vmul.f32 %v416, %v398
  %v419 = vmul.f32 %v417, %v401
  %v420 = vpack.c.bf16 %v419, %v418
  %v422 = vunpack.c.l.b16 %v420
  %v423 = vunpack.c.h.b16 %v420
  %v424 = vpack.c.b16 %v422, %v422
  %v425 = vpack.c.b16 %v423, %v423
  %vm428 = vcmask 781312
  %429 = vst.msk [vmem:[%s8] sm:$0xf] %vm428, %v424
  %430 = vst.msk [vmem:[%s8 + $0x4] sm:$0xf] %vm428, %v425
  // Predicated region
  $region38: #{_lambda_.14} parent=0 // pred_check
    _
  $region39: #{_lambda_.14} parent=0 // pred_check_branch
    %432 = sbr.rel (0) target = $region41
  $region40: #{_lambda_.14} parent=0 // pred_region
    _
  $region41: #{_lambda_.14} parent=0 // pred_fallthru
    _
  // Predicated region
  $region42: #{_lambda_.14} parent=0 // pred_check
    _
  $region43: #{_lambda_.14} parent=0 // pred_check_branch
    %434 = sbr.rel (0) target = $region45
  $region44: #{_lambda_.14} parent=0 // pred_region
    _
  $region45: #{_lambda_.14} parent=0 // pred_fallthru
    _

// kernel: _lambda_.21
$region0: #{_lambda_.21}
  #allocation0 [shape = 'u32[]', space=smem, size = 0x4, offset = 0x4, fixed_abs, tag = 'smem constant byte address 0x4 - core index']
  #allocation1 [shape = 'u32[144,128]{1,0:T(1,128)}', space=vmem, size = 0x12000, scoped, tag = 'internal scratch']
  #allocation2 [shape = 'bf16[16,32]{1,0:T(8,128)(2,1)}', space=vmem, size = 0x1000, scoped, tag = 'scratch operand']
  %s0 = inlined_call_operand.vmem [shape: bf16[16,32], index: 0, kind: input, shape index: {}]
  %s1 = inlined_call_operand.vmem [shape: f32[1,32], index: 1, kind: input, shape index: {}]
  %s2 = inlined_call_operand.vmem [shape: f32[1,32], index: 2, kind: input, shape index: {}]
  %s3 = inlined_call_operand.vmem [shape: bf16[64,32], index: 3, kind: input, shape index: {}]
  %s4 = inlined_call_operand.hbm [shape: f32[16,64], index: 4, kind: output, shape index: {}]
  %s5 = sld [smem:[#allocation0]]
  $region30: #{_lambda_.21} parent=0
    _
  %s7 = ssub.s32 1, %s5
  %s8 = scalar_select 0, %s7, %s5
  $region1: #{_lambda_.21} parent=0
    #allocation3 [shape = 'u8[8192]{0}', space=vmem, size = 0x2000, scoped, tag = 'output window, operand 0, single buffered']
    #allocation4 [shape = 's32[1]{0}', space=sflag, size = 0x4, scoped, tag = 'scoped memory for _lambda_.21']
    %9 = vsyncpa [#allocation4], 0
    // Predicated region
    $region2: #{_lambda_.21} parent=1 // pred_check
      _
    $region3: #{_lambda_.21} parent=1 // pred_check_branch
      %11 = sbr.rel (0) target = $region5
    $region4: #{_lambda_.21} parent=1 // pred_region
      _
    $region5: #{_lambda_.21} parent=1 // pred_fallthru
      _
    // Predicated region
    $region6: #{_lambda_.21} parent=1 // pred_check
      _
    $region7: #{_lambda_.21} parent=1 // pred_check_branch
      %13 = sbr.rel (0) target = $region9
    $region8: #{_lambda_.21} parent=1 // pred_region
      _
    $region9: #{_lambda_.21} parent=1 // pred_fallthru
      _
    // Predicated region
    $region10: #{_lambda_.21} parent=1 // pred_check
      _
    $region11: #{_lambda_.21} parent=1 // pred_check_branch
      %15 = sbr.rel (0) target = $region13
    $region12: #{_lambda_.21} parent=1 // pred_region
      _
    $region13: #{_lambda_.21} parent=1 // pred_fallthru
      _
    // Predicated region
    $region14: #{_lambda_.21} parent=1 // pred_check
      _
    $region15: #{_lambda_.21} parent=1 // pred_check_branch
      %17 = sbr.rel (0) target = $region17
    $region16: #{_lambda_.21} parent=1 // pred_region
      _
    $region17: #{_lambda_.21} parent=1 // pred_fallthru
      _
    %p19 = scmp.eq.s32.totalorder 0, 0
    // Predicated region
    $region18: #{_lambda_.21} parent=1 // pred_check
      %p20 = pneg %p19
    $region19: #{_lambda_.21} parent=1 // pred_check_branch
      %22 = sbr.rel (%p20) target = $region21
    $region20: #{_lambda_.21} parent=1 // pred_region
      %v23 = vld [vmem:[%s0] sm:$0xf]
      %v24 = vld [vmem:[%s0 + $0x4] sm:$0xf]
      %v25 = vunpack.c.l.bf16 %v23
      %v26 = vunpack.c.l.bf16 %v24
      %vm27 = vcmask 261120
      %v28 = vsel %vm27, %v25, 0.0
      %29 = vadd.xlane.f32.xlu0 %v28
      %v30 = vpop.xlane.xlu0 %29
      %v31 = vsel %vm27, %v26, 0.0
      %32 = vadd.xlane.f32.xlu0 %v31
      %v33 = vpop.xlane.xlu0 %32
      %v34 = vrcp.pop 32.0
      %v35 = vmul.f32 %v30, %v34
      %v36 = vmul.f32 %v33, %v34
      %v37 = vmul.f32 %v25, %v25
      %v38 = vmul.f32 %v26, %v26
      %v39 = vsel %vm27, %v37, 0.0
      %40 = vadd.xlane.f32.xlu0 %v39
      %v41 = vpop.xlane.xlu0 %40
      %v42 = vsel %vm27, %v38, 0.0
      %43 = vadd.xlane.f32.xlu0 %v42
      %v44 = vpop.xlane.xlu0 %43
      %v45 = vmul.f32 %v41, %v34
      %v46 = vmul.f32 %v44, %v34
      %v47 = vmul.f32 %v35, %v35
      %v48 = vmul.f32 %v36, %v36
      %v49 = vsub.f32 %v45, %v47
      %v50 = vsub.f32 %v46, %v48
      %v51 = vsub.f32 %v25, %v35
      %v52 = vsub.f32 %v26, %v36
      %v53 = vadd.f32 %v49, 1e-05
      %v54 = vadd.f32 %v50, 1e-05
      %v55 = vrsqrt.pop %v53
      %v56 = vrsqrt.pop %v54
      %v57 = vmul.f32 %v51, %v55
      %v58 = vmul.f32 %v52, %v56
      %v59 = vld [vmem:[%s1] sm:$0x1]
      %v61 = vlaneseq
      %v62 = vshrl.u32 %v61, 7
      %v63 = vsub.s32 0, %v62
      %v64 = vrot.slane %v59, %v63
      %v66 = vmul.f32 %v57, %v64
      %v67 = vmul.f32 %v58, %v64
      %v68 = vld [vmem:[%s2] sm:$0x1]
      %v70 = vlaneseq
      %v71 = vshrl.u32 %v70, 7
      %v72 = vsub.s32 0, %v71
      %v73 = vrot.slane %v68, %v72
      %v75 = vadd.f32 %v66, %v73
      %v76 = vadd.f32 %v67, %v73
      %v77 = vpack.c.bf16 %v76, %v75
      %v79 = vunpack.c.l.b16 %v77
      %v80 = vunpack.c.h.b16 %v77
      %v81 = vpack.c.b16 %v79, %v79
      %v82 = vpack.c.b16 %v80, %v80
      %vm85 = vcmask 257024
      %86 = vst.msk [vmem:[#allocation2] sm:$0xf] %vm85, %v81
      %87 = vst.msk [vmem:[#allocation2 + $0x4] sm:$0xf] %vm85, %v82
    $region21: #{_lambda_.21} parent=1 // pred_fallthru
      _
    %v88 = vld [vmem:[#allocation2] sm:$0xf]
    %v89 = vld [vmem:[#allocation2 + $0x4] sm:$0xf]
    %v90 = vld [vmem:[%s3] sm:$0xf]
    %v91 = vld [vmem:[%s3 + $0x4] sm:$0xf]
    %v92 = vld [vmem:[%s3 + $0x8] sm:$0xf]
    %v93 = vld [vmem:[%s3 + $0xc] sm:$0xf]
    %v94 = vld [vmem:[%s3 + $0x10] sm:$0xf]
    %v95 = vld [vmem:[%s3 + $0x14] sm:$0xf]
    %v96 = vld [vmem:[%s3 + $0x18] sm:$0xf]
    %v97 = vld [vmem:[%s3 + $0x1c] sm:$0xf]
    %v100 = vunpack.c.l.b16 %v88
    %v101 = vunpack.c.l.b16 %v89
    %v102 = vpack.c.b16 %v101, %v100
    %v111 = vunpack.c.l.b16 %v90
    %v112 = vunpack.c.l.b16 %v91
    %v113 = vunpack.c.l.b16 %v92
    %v114 = vunpack.c.l.b16 %v93
    %v115 = vunpack.c.l.b16 %v94
    %v116 = vunpack.c.l.b16 %v95
    %v117 = vunpack.c.l.b16 %v96
    %v118 = vunpack.c.l.b16 %v97
    %v119 = vpack.c.b16 %v112, %v111
    %v120 = vpack.c.b16 %v114, %v113
    %v121 = vpack.c.b16 %v116, %v115
    %v122 = vpack.c.b16 %v118, %v117
    %vm123 = vcmask 261120
    %v125 = vsel %vm123, %v102, 0
    %v128 = vsel %vm123, %v119, 0
    %v131 = vsel %vm123, %v120, 0
    %v134 = vsel %vm123, %v121, 0
    %v137 = vsel %vm123, %v122, 0
    %139 = vmatprep.subr.bf16.mxu0 0
    %140 = vmatpush1.bf16.xpose.msra.mxu0 0
    %141 = vmatprep.subr.bf16.mxu0 0
    %142 = vmatpush1.bf16.xpose.msra.mxu0 0
    %143 = vmatprep.subr.bf16.mxu0 0
    %144 = vmatpush1.bf16.xpose.msra.mxu0 0
    %145 = vmatprep.subr.bf16.mxu0 0
    %146 = vmatpush1.bf16.xpose.msra.mxu0 0
    %147 = vmatprep.subr.bf16.mxu0 0
    %148 = vmatpush1.bf16.xpose.msra.mxu0 %v137
    %149 = vmatprep.subr.bf16.mxu0 0
    %150 = vmatpush1.bf16.xpose.msra.mxu0 %v134
    %151 = vmatprep.subr.bf16.mxu0 0
    %152 = vmatpush1.bf16.xpose.msra.mxu0 %v131
    %153 = vmatprep.subr.bf16.mxu0 0
    %154 = vmatpush1.bf16.xpose.msra.mxu0 %v128
    %155 = vmatprep.subr.bf16.mxu0 0
    %156 = vmatpush2.bf16.xpose.msra.mxu0 0
    %157 = vmatprep.subr.bf16.mxu0 0
    %158 = vmatpush2.bf16.xpose.msra.mxu0 0
    %159 = vmatprep.subr.bf16.mxu0 0
    %160 = vmatpush2.bf16.xpose.msra.mxu0 0
    %161 = vmatprep.subr.bf16.mxu0 0
    %162 = vmatpush2.bf16.xpose.msra.mxu0 0
    %163 = vmatprep.subr.bf16.mxu0 0
    %164 = vmatpush2.bf16.xpose.msra.mxu0 0
    %165 = vmatprep.subr.bf16.mxu0 0
    %166 = vmatpush2.bf16.xpose.msra.mxu0 0
    %167 = vmatprep.subr.bf16.mxu0 0
    %168 = vmatpush2.bf16.xpose.msra.mxu0 0
    %169 = vmatprep.subr.bf16.mxu0 0
    %170 = vmatpush2.bf16.xpose.msra.mxu0 0
    %171 = vmatprep.mubr.bf16.mxu0 0
    %172 = vmatmul.mubr.bf16.gmra.mxu0 %v125
    %v173 = vpop.f32.mrf.mxu0
    %v174 = vadd.f32 0.0, %v173
    %v175 = vpop.f32.mrf.mxu0
    %v176 = vpop.f32.mrf.mxu0
    %v177 = vadd.f32 0.0, %v176
    %v178 = vpop.f32.mrf.mxu0
    %179 = vdwg.mxu0
    %vm180 = vcmask 523264
    %181 = vst.msk [vmem:[#allocation3] sm:$0xff] %vm180, %v174
    %182 = vst.msk [vmem:[#allocation3 + $0x8] sm:$0xff] %vm180, %v177
    // Predicated region
    $region22: #{_lambda_.21} parent=1 // pred_check
      _
    $region23: #{_lambda_.21} parent=1 // pred_check_branch
      %184 = sbr.rel (0) target = $region25
    $region24: #{_lambda_.21} parent=1 // pred_region
      %s186 = ssub.s32 256, 256
      %187 = vsyncadd [#allocation4], %s186
      %s188 = sshll.u32 [#allocation3], 4
      %s189 = int_to_ptr.vmem [resolvable:$true] %s188
      %194 = dma.vmem_to_hbm [thread:$0]  %s189, 256, %s4, [#allocation4], 128, 128, 8
    $region25: #{_lambda_.21} parent=1 // pred_fallthru
      _
    // Predicated region
    $region26: #{_lambda_.21} parent=1 // pred_check
      _
    $region27: #{_lambda_.21} parent=1 // pred_check_branch
      %196 = sbr.rel (0) target = $region29
    $region28: #{_lambda_.21} parent=1 // pred_region
      %197 = dma.done [#allocation4], 256
    $region29: #{_lambda_.21} parent=1 // pred_fallthru
      _
    %198 = vsyncpa [#allocation4], 1

// kernel: _lambda_.15
$region0: #{_lambda_.15}
  #allocation0 [shape = 'u32[]', space=smem, size = 0x4, offset = 0x4, fixed_abs, tag = 'smem constant byte address 0x4 - core index']
  #allocation1 [shape = 'u32[144,128]{1,0:T(1,128)}', space=vmem, size = 0x12000, scoped, tag = 'internal scratch']
  #allocation2 [shape = 'bf16[16,8]{1,0:T(8,128)(2,1)}', space=vmem, size = 0x1000, scoped, tag = 'scratch operand']
  %s0 = inlined_call_operand.vmem [shape: bf16[16,96], index: 0, kind: input, shape index: {}]
  %s1 = inlined_call_operand.vmem [shape: bf16[16,32], index: 1, kind: input, shape index: {}]
  %s2 = inlined_call_operand.vmem [shape: f32[1,32], index: 2, kind: input, shape index: {}]
  %s3 = inlined_call_operand.vmem [shape: bf16[96,32], index: 3, kind: input, shape index: {}]
  %s4 = inlined_call_operand.vmem [shape: bf16[96,8], index: 4, kind: input, shape index: {}]
  %s5 = inlined_call_operand.vmem [shape: bf16[8,32], index: 5, kind: input, shape index: {}]
  %s6 = inlined_call_operand.vmem [shape: bf16[16,32], index: 6, kind: output, shape index: {}]
  %s7 = sld [smem:[#allocation0]]
  $region38: #{_lambda_.15} parent=0
    _
  %s9 = ssub.s32 1, %s7
  %s10 = scalar_select 0, %s9, %s7
  // Predicated region
  $region2: #{_lambda_.15} parent=0 // pred_check
    _
  $region3: #{_lambda_.15} parent=0 // pred_check_branch
    %12 = sbr.rel (0) target = $region5
  $region4: #{_lambda_.15} parent=0 // pred_region
    _
  $region5: #{_lambda_.15} parent=0 // pred_fallthru
    _
  // Predicated region
  $region6: #{_lambda_.15} parent=0 // pred_check
    _
  $region7: #{_lambda_.15} parent=0 // pred_check_branch
    %14 = sbr.rel (0) target = $region9
  $region8: #{_lambda_.15} parent=0 // pred_region
    _
  $region9: #{_lambda_.15} parent=0 // pred_fallthru
    _
  // Predicated region
  $region10: #{_lambda_.15} parent=0 // pred_check
    _
  $region11: #{_lambda_.15} parent=0 // pred_check_branch
    %16 = sbr.rel (0) target = $region13
  $region12: #{_lambda_.15} parent=0 // pred_region
    _
  $region13: #{_lambda_.15} parent=0 // pred_fallthru
    _
  // Predicated region
  $region14: #{_lambda_.15} parent=0 // pred_check
    _
  $region15: #{_lambda_.15} parent=0 // pred_check_branch
    %18 = sbr.rel (0) target = $region17
  $region16: #{_lambda_.15} parent=0 // pred_region
    _
  $region17: #{_lambda_.15} parent=0 // pred_fallthru
    _
  // Predicated region
  $region18: #{_lambda_.15} parent=0 // pred_check
    _
  $region19: #{_lambda_.15} parent=0 // pred_check_branch
    %20 = sbr.rel (0) target = $region21
  $region20: #{_lambda_.15} parent=0 // pred_region
    _
  $region21: #{_lambda_.15} parent=0 // pred_fallthru
    _
  // Predicated region
  $region22: #{_lambda_.15} parent=0 // pred_check
    _
  $region23: #{_lambda_.15} parent=0 // pred_check_branch
    %22 = sbr.rel (0) target = $region25
  $region24: #{_lambda_.15} parent=0 // pred_region
    _
  $region25: #{_lambda_.15} parent=0 // pred_fallthru
    _
  %p24 = scmp.eq.s32.totalorder 0, 0
  // Predicated region
  $region26: #{_lambda_.15} parent=0 // pred_check
    %p25 = pneg %p24
  $region27: #{_lambda_.15} parent=0 // pred_check_branch
    %27 = sbr.rel (%p25) target = $region29
  $region28: #{_lambda_.15} parent=0 // pred_region
    %v28 = vld [vmem:[%s0] sm:$0xf]
    %v29 = vld [vmem:[%s0 + $0x4] sm:$0xf]
    %v30 = vld [vmem:[%s4] sm:$0xf]
    %v31 = vld [vmem:[%s4 + $0x4] sm:$0xf]
    %v32 = vld [vmem:[%s4 + $0x8] sm:$0xf]
    %v33 = vld [vmem:[%s4 + $0xc] sm:$0xf]
    %v34 = vld [vmem:[%s4 + $0x10] sm:$0xf]
    %v35 = vld [vmem:[%s4 + $0x14] sm:$0xf]
    %v36 = vld [vmem:[%s4 + $0x18] sm:$0xf]
    %v37 = vld [vmem:[%s4 + $0x1c] sm:$0xf]
    %v38 = vld [vmem:[%s4 + $0x20] sm:$0xf]
    %v39 = vld [vmem:[%s4 + $0x24] sm:$0xf]
    %v40 = vld [vmem:[%s4 + $0x28] sm:$0xf]
    %v41 = vld [vmem:[%s4 + $0x2c] sm:$0xf]
    %v44 = vunpack.c.l.b16 %v28
    %v45 = vunpack.c.l.b16 %v29
    %v46 = vpack.c.b16 %v45, %v44
    %v59 = vunpack.c.l.b16 %v30
    %v60 = vunpack.c.l.b16 %v31
    %v61 = vunpack.c.l.b16 %v32
    %v62 = vunpack.c.l.b16 %v33
    %v63 = vunpack.c.l.b16 %v34
    %v64 = vunpack.c.l.b16 %v35
    %v65 = vunpack.c.l.b16 %v36
    %v66 = vunpack.c.l.b16 %v37
    %v67 = vunpack.c.l.b16 %v38
    %v68 = vunpack.c.l.b16 %v39
    %v69 = vunpack.c.l.b16 %v40
    %v70 = vunpack.c.l.b16 %v41
    %v71 = vpack.c.b16 %v60, %v59
    %v72 = vpack.c.b16 %v62, %v61
    %v73 = vpack.c.b16 %v64, %v63
    %v74 = vpack.c.b16 %v66, %v65
    %v75 = vpack.c.b16 %v68, %v67
    %v76 = vpack.c.b16 %v70, %v69
    %vm83 = vcmask 785408
    %v85 = vsel %vm83, %v46, 0
    %87 = vmatprep.subr.bf16.mxu0 0
    %88 = vmatpush1.bf16.msra.mxu0 0
    %89 = vmatprep.subr.bf16.mxu0 0
    %90 = vmatpush1.bf16.msra.mxu0 0
    %91 = vmatprep.subr.bf16.mxu0 0
    %92 = vmatpush1.bf16.msra.mxu0 %v76
    %93 = vmatprep.subr.bf16.mxu0 0
    %94 = vmatpush1.bf16.msra.mxu0 %v75
    %95 = vmatprep.subr.bf16.mxu0 0
    %96 = vmatpush1.bf16.msra.mxu0 %v74
    %97 = vmatprep.subr.bf16.mxu0 0
    %98 = vmatpush1.bf16.msra.mxu0 %v73
    %99 = vmatprep.subr.bf16.mxu0 0
    %100 = vmatpush1.bf16.msra.mxu0 %v72
    %101 = vmatprep.subr.bf16.mxu0 0
    %102 = vmatpush1.bf16.msra.mxu0 %v71
    %103 = vmatprep.subr.bf16.mxu0 0
    %104 = vmatpush2.bf16.msra.mxu0 0
    %105 = vmatprep.subr.bf16.mxu0 0
    %106 = vmatpush2.bf16.msra.mxu0 0
    %107 = vmatprep.subr.bf16.mxu0 0
    %108 = vmatpush2.bf16.msra.mxu0 0
    %109 = vmatprep.subr.bf16.mxu0 0
    %110 = vmatpush2.bf16.msra.mxu0 0
    %111 = vmatprep.subr.bf16.mxu0 0
    %112 = vmatpush2.bf16.msra.mxu0 0
    %113 = vmatprep.subr.bf16.mxu0 0
    %114 = vmatpush2.bf16.msra.mxu0 0
    %115 = vmatprep.subr.bf16.mxu0 0
    %116 = vmatpush2.bf16.msra.mxu0 0
    %117 = vmatprep.subr.bf16.mxu0 0
    %118 = vmatpush2.bf16.msra.mxu0 0
    %119 = vmatprep.mubr.bf16.mxu0 0
    %120 = vmatmul.mubr.bf16.gmra.mxu0 %v85
    %v121 = vpop.f32.mrf.mxu0
    %v122 = vadd.f32 0.0, %v121
    %v123 = vpop.f32.mrf.mxu0
    %v124 = vpop.f32.mrf.mxu0
    %v125 = vadd.f32 0.0, %v124
    %v126 = vpop.f32.mrf.mxu0
    %127 = vdwg.mxu0
    %v128 = vpack.c.bf16 %v125, %v122
    %v130 = vunpack.c.l.b16 %v128
    %v131 = vunpack.c.h.b16 %v128
    %v132 = vpack.c.b16 %v130, %v130
    %v133 = vpack.c.b16 %v131, %v131
    %vm136 = vcmask 60416
    %137 = vst.msk [vmem:[#allocation2] sm:$0xf] %vm136, %v132
    %138 = vst.msk [vmem:[#allocation2 + $0x4] sm:$0xf] %vm136, %v133
  $region29: #{_lambda_.15} parent=0 // pred_fallthru
    _
  %v139 = vld [vmem:[%s0] sm:$0xf]
  %v140 = vld [vmem:[%s0 + $0x4] sm:$0xf]
  %v141 = vld [vmem:[%s3] sm:$0xf]
  %v142 = vld [vmem:[%s3 + $0x4] sm:$0xf]
  %v143 = vld [vmem:[%s3 + $0x8] sm:$0xf]
  %v144 = vld [vmem:[%s3 + $0xc] sm:$0xf]
  %v145 = vld [vmem:[%s3 + $0x10] sm:$0xf]
  %v146 = vld [vmem:[%s3 + $0x14] sm:$0xf]
  %v147 = vld [vmem:[%s3 + $0x18] sm:$0xf]
  %v148 = vld [vmem:[%s3 + $0x1c] sm:$0xf]
  %v149 = vld [vmem:[%s3 + $0x20] sm:$0xf]
  %v150 = vld [vmem:[%s3 + $0x24] sm:$0xf]
  %v151 = vld [vmem:[%s3 + $0x28] sm:$0xf]
  %v152 = vld [vmem:[%s3 + $0x2c] sm:$0xf]
  %v153 = vld [vmem:[#allocation2] sm:$0xf]
  %v154 = vld [vmem:[#allocation2 + $0x4] sm:$0xf]
  %v155 = vld [vmem:[%s5] sm:$0xf]
  %v158 = vunpack.c.l.b16 %v153
  %v159 = vunpack.c.l.b16 %v154
  %v160 = vpack.c.b16 %v159, %v158
  %vm161 = vcmask 64512
  %v163 = vsel %vm161, %v160, 0
  %vm165 = vcmask 1043456
  %v167 = vsel %vm165, %v155, 0
  %169 = vmatprep.subr.bf16.mxu0 0
  %170 = vmatpush1.bf16.msra.mxu0 0
  %171 = vmatprep.subr.bf16.mxu0 0
  %172 = vmatpush1.bf16.msra.mxu0 0
  %173 = vmatprep.subr.bf16.mxu0 0
  %174 = vmatpush1.bf16.msra.mxu0 0
  %175 = vmatprep.subr.bf16.mxu0 0
  %176 = vmatpush1.bf16.msra.mxu0 0
  %177 = vmatprep.subr.bf16.mxu0 0
  %178 = vmatpush1.bf16.msra.mxu0 0
  %179 = vmatprep.subr.bf16.mxu0 0
  %180 = vmatpush1.bf16.msra.mxu0 0
  %181 = vmatprep.subr.bf16.mxu0 0
  %182 = vmatpush1.bf16.msra.mxu0 0
  %183 = vmatprep.subr.bf16.mxu0 0
  %184 = vmatpush1.bf16.msra.mxu0 %v167
  %185 = vmatprep.subr.bf16.mxu0 0
  %186 = vmatpush2.bf16.msra.mxu0 0
  %187 = vmatprep.subr.bf16.mxu0 0
  %188 = vmatpush2.bf16.msra.mxu0 0
  %189 = vmatprep.subr.bf16.mxu0 0
  %190 = vmatpush2.bf16.msra.mxu0 0
  %191 = vmatprep.subr.bf16.mxu0 0
  %192 = vmatpush2.bf16.msra.mxu0 0
  %193 = vmatprep.subr.bf16.mxu0 0
  %194 = vmatpush2.bf16.msra.mxu0 0
  %195 = vmatprep.subr.bf16.mxu0 0
  %196 = vmatpush2.bf16.msra.mxu0 0
  %197 = vmatprep.subr.bf16.mxu0 0
  %198 = vmatpush2.bf16.msra.mxu0 0
  %199 = vmatprep.subr.bf16.mxu0 0
  %200 = vmatpush2.bf16.msra.mxu0 0
  %201 = vmatprep.mubr.bf16.mxu0 0
  %202 = vmatmul.mubr.bf16.gmra.mxu0 %v163
  %v203 = vpop.f32.mrf.mxu0
  %v204 = vadd.f32 0.0, %v203
  %v205 = vpop.f32.mrf.mxu0
  %v206 = vpop.f32.mrf.mxu0
  %v207 = vadd.f32 0.0, %v206
  %v208 = vpop.f32.mrf.mxu0
  %209 = vdwg.mxu0
  %v212 = vunpack.c.l.b16 %v139
  %v213 = vunpack.c.l.b16 %v140
  %v214 = vpack.c.b16 %v213, %v212
  %v227 = vunpack.c.l.b16 %v141
  %v228 = vunpack.c.l.b16 %v142
  %v229 = vunpack.c.l.b16 %v143
  %v230 = vunpack.c.l.b16 %v144
  %v231 = vunpack.c.l.b16 %v145
  %v232 = vunpack.c.l.b16 %v146
  %v233 = vunpack.c.l.b16 %v147
  %v234 = vunpack.c.l.b16 %v148
  %v235 = vunpack.c.l.b16 %v149
  %v236 = vunpack.c.l.b16 %v150
  %v237 = vunpack.c.l.b16 %v151
  %v238 = vunpack.c.l.b16 %v152
  %v239 = vpack.c.b16 %v228, %v227
  %v240 = vpack.c.b16 %v230, %v229
  %v241 = vpack.c.b16 %v232, %v231
  %v242 = vpack.c.b16 %v234, %v233
  %v243 = vpack.c.b16 %v236, %v235
  %v244 = vpack.c.b16 %v238, %v237
  %vm251 = vcmask 785408
  %v253 = vsel %vm251, %v214, 0
  %255 = vmatprep.subr.bf16.mxu0 0
  %256 = vmatpush1.bf16.msra.mxu0 0
  %257 = vmatprep.subr.bf16.mxu0 0
  %258 = vmatpush1.bf16.msra.mxu0 0
  %259 = vmatprep.subr.bf16.mxu0 0
  %260 = vmatpush1.bf16.msra.mxu0 %v244
  %261 = vmatprep.subr.bf16.mxu0 0
  %262 = vmatpush1.bf16.msra.mxu0 %v243
  %263 = vmatprep.subr.bf16.mxu0 0
  %264 = vmatpush1.bf16.msra.mxu0 %v242
  %265 = vmatprep.subr.bf16.mxu0 0
  %266 = vmatpush1.bf16.msra.mxu0 %v241
  %267 = vmatprep.subr.bf16.mxu0 0
  %268 = vmatpush1.bf16.msra.mxu0 %v240
  %269 = vmatprep.subr.bf16.mxu0 0
  %270 = vmatpush1.bf16.msra.mxu0 %v239
  %271 = vmatprep.subr.bf16.mxu0 0
  %272 = vmatpush2.bf16.msra.mxu0 0
  %273 = vmatprep.subr.bf16.mxu0 0
  %274 = vmatpush2.bf16.msra.mxu0 0
  %275 = vmatprep.subr.bf16.mxu0 0
  %276 = vmatpush2.bf16.msra.mxu0 0
  %277 = vmatprep.subr.bf16.mxu0 0
  %278 = vmatpush2.bf16.msra.mxu0 0
  %279 = vmatprep.subr.bf16.mxu0 0
  %280 = vmatpush2.bf16.msra.mxu0 0
  %281 = vmatprep.subr.bf16.mxu0 0
  %282 = vmatpush2.bf16.msra.mxu0 0
  %283 = vmatprep.subr.bf16.mxu0 0
  %284 = vmatpush2.bf16.msra.mxu0 0
  %285 = vmatprep.subr.bf16.mxu0 0
  %286 = vmatpush2.bf16.msra.mxu0 0
  %287 = vmatprep.mubr.bf16.mxu0 0
  %288 = vmatmul.mubr.bf16.gmra.mxu0 %v253
  %v289 = vpop.f32.mrf.mxu0
  %v290 = vadd.f32 %v204, %v289
  %v291 = vpop.f32.mrf.mxu0
  %v292 = vpop.f32.mrf.mxu0
  %v293 = vadd.f32 %v207, %v292
  %v294 = vpop.f32.mrf.mxu0
  %295 = vdwg.mxu0
  %v296 = vld [vmem:[%s1] sm:$0xf]
  %v297 = vld [vmem:[%s1 + $0x4] sm:$0xf]
  %v298 = vunpack.c.l.bf16 %v296
  %v299 = vunpack.c.l.bf16 %v297
  %v300 = vld [vmem:[%s2] sm:$0x1]
  %v302 = vlaneseq
  %v303 = vshrl.u32 %v302, 7
  %v304 = vsub.s32 0, %v303
  %v305 = vrot.slane %v300, %v304
  %v307 = vmul.f32 %v305, %v290
  %v308 = vmul.f32 %v305, %v293
  %v309 = vadd.f32 %v298, %v307
  %v310 = vadd.f32 %v299, %v308
  %v311 = vpack.c.bf16 %v310, %v309
  %v313 = vunpack.c.l.b16 %v311
  %v314 = vunpack.c.h.b16 %v311
  %v315 = vpack.c.b16 %v313, %v313
  %v316 = vpack.c.b16 %v314, %v314
  %vm319 = vcmask 257024
  %320 = vst.msk [vmem:[%s6] sm:$0xf] %vm319, %v315
  %321 = vst.msk [vmem:[%s6 + $0x4] sm:$0xf] %vm319, %v316
  // Predicated region
  $region30: #{_lambda_.15} parent=0 // pred_check
    _
  $region31: #{_lambda_.15} parent=0 // pred_check_branch
    %323 = sbr.rel (0) target = $region33
  $region32: #{_lambda_.15} parent=0 // pred_region
    _
  $region33: #{_lambda_.15} parent=0 // pred_fallthru
    _
  // Predicated region
  $region34: #{_lambda_.15} parent=0 // pred_check
    _
  $region35: #{_lambda_.15} parent=0 // pred_check_branch
    %325 = sbr.rel (0) target = $region37
  $region36: #{_lambda_.15} parent=0 // pred_region
    _
  $region37: #{_lambda_.15} parent=0 // pred_fallthru
    _

</llo_original>
